<compile_context>
chip_gen: v7x
topology: tpu7x:2x2x1
jax: 0.10.0
libtpu: 0.0.40
codegen_flags: <defaults>
</compile_context>

<pallas_src>
import jax
import jax.numpy as jnp
from jax import lax
from jax.experimental import pallas as pl
from jax.experimental.pallas import tpu as pltpu


# -----------------------------------------------------------------------------
# Shared LSTM gate math (PyTorch gate order: i, f, g, o)
# -----------------------------------------------------------------------------
def _sigmoid(x):
    # One native tanh EUP push instead of (potentially) exp + reciprocal.
    return 0.5 * (jnp.tanh(0.5 * x) + 1.0)


def _lstm_gates(gates, c_prev, H):
    i_g = _sigmoid(gates[:, 0 * H:1 * H])
    f_g = _sigmoid(gates[:, 1 * H:2 * H])
    g_g = jnp.tanh(gates[:, 2 * H:3 * H])
    o_g = _sigmoid(gates[:, 3 * H:4 * H])
    c_new = f_g * c_prev + i_g * g_g
    h_new = o_g * jnp.tanh(c_new)
    return h_new, c_new


def _merge_time_rows(x):
    """(Tc, Rt, F) -> (Tc*Rt, F) bf16 for one big input-projection matmul.

    The merge is done in f32, where each (8,128) tile concatenates cleanly
    along the untiled major dim; a direct bf16 reshape could force a packed
    sublane relayout.  The extra casts are one VPU pass per chunk, entirely
    off the serial recurrence path.
    """
    Tc, Rt, F = x.shape
    return x.astype(jnp.float32).reshape(Tc * Rt, F).astype(jnp.bfloat16)


def _unroll_for(tc):
    # Full unroll for small chunks (LLO visibility); cap at 8 for big chunks
    # to bound vreg pressure.
    return True if tc <= 16 else 8


# -----------------------------------------------------------------------------
# Time-chunked, row-tiled LSTM (hoisted input projection, length-masked)
# -----------------------------------------------------------------------------
def _lstm_chunk_body(x_ref, wih_ref, whh_ref, b_ref, len_ref, h0_ref, c0_ref,
                     h_sc, c_sc, xp_sc, out_ref):
    chunk = pl.program_id(1)
    Tc, Rt, F = x_ref.shape
    H = h_sc.shape[-1]

    @pl.when(chunk == 0)
    def _():
        h_sc[...] = h0_ref[...]
        c_sc[...] = c0_ref[...]

    # Hoisted input projection (+ bias folded in): one big MXU matmul per
    # chunk, fully overlappable with the input DMA, off the h-recurrence.
    xproj = (jnp.dot(_merge_time_rows(x_ref[...]), wih_ref[...],
                     preferred_element_type=jnp.float32)
             + b_ref[...])                                  # (Tc*Rt, 4H) f32
    xp_sc[...] = xproj.reshape(Tc, Rt, 4 * H)

    t0 = chunk * Tc
    lens = len_ref[...]                                     # (Rt, 1) int32

    def step(lt, carry):
        gates = xp_sc[lt] + jnp.dot(
            h_sc[...].astype(jnp.bfloat16), whh_ref[...],
            preferred_element_type=jnp.float32)             # (Rt, 4H) f32
        h_new, c_new = _lstm_gates(gates, c_sc[...], H)
        valid = (t0 + lt) < lens                            # (Rt, 1) bool
        h_upd = jnp.where(valid, h_new, h_sc[...])
        c_upd = jnp.where(valid, c_new, c_sc[...])
        h_sc[...] = h_upd
        c_sc[...] = c_upd
        if out_ref is not None:
            out_ref[lt] = h_upd
        return carry

    lax.fori_loop(0, Tc, step, 0, unroll=_unroll_for(Tc))


def lstm_seq_kernel(x_ref, wih_ref, whh_ref, b_ref, len_ref, h0_ref, c0_ref,
                    out_ref, hlast_ref, clast_ref, h_sc, c_sc, xp_sc):
    _lstm_chunk_body(x_ref, wih_ref, whh_ref, b_ref, len_ref, h0_ref, c0_ref,
                     h_sc, c_sc, xp_sc, out_ref)

    @pl.when(pl.program_id(1) == pl.num_programs(1) - 1)
    def _():
        hlast_ref[...] = h_sc[...]
        clast_ref[...] = c_sc[...]


def lstm_last_kernel(x_ref, wih_ref, whh_ref, b_ref, len_ref, h0_ref, c0_ref,
                     hlast_ref, clast_ref, h_sc, c_sc, xp_sc):
    _lstm_chunk_body(x_ref, wih_ref, whh_ref, b_ref, len_ref, h0_ref, c0_ref,
                     h_sc, c_sc, xp_sc, None)

    @pl.when(pl.program_id(1) == pl.num_programs(1) - 1)
    def _():
        hlast_ref[...] = h_sc[...]
        clast_ref[...] = c_sc[...]


def lstm_scan(x_tbf, wih, whh, b, lens, h0, c0, *, return_sequence,
              time_chunk=32, row_tile=None):
    """Single-layer LSTM over a time-major sequence.

    x_tbf : (T, R, F) bf16     wih : (F, 4H) bf16     whh : (H, 4H) bf16
    b     : (1, 4H) f32        lens: (R, 1) int32 valid lengths
    h0,c0 : (R, H) f32
    Grid = (row blocks ["parallel"], time chunks ["arbitrary"]).
    """
    T, R, F = x_tbf.shape
    H = h0.shape[-1]
    Rt = R if row_tile is None else min(row_tile, R)
    assert R % Rt == 0 and Rt % 8 == 0, (R, Rt)
    assert wih.shape == (F, 4 * H) and whh.shape == (H, 4 * H)

    Tc = min(time_chunk, T)
    Tp = pl.cdiv(T, Tc) * Tc
    if Tp != T:
        x_tbf = jnp.pad(x_tbf, ((0, Tp - T), (0, 0), (0, 0)))
    grid = (R // Rt, Tp // Tc)

    in_specs = [
        pl.BlockSpec((Tc, Rt, F), lambda r, c: (c, r, 0)),      # x chunk
        pl.BlockSpec((F, 4 * H), lambda r, c: (0, 0)),          # W_ih
        pl.BlockSpec((H, 4 * H), lambda r, c: (0, 0)),          # W_hh
        pl.BlockSpec((1, 4 * H), lambda r, c: (0, 0)),          # bias
        pl.BlockSpec((Rt, 1), lambda r, c: (r, 0)),             # lengths
        pl.BlockSpec((Rt, H), lambda r, c: (r, 0)),             # h0
        pl.BlockSpec((Rt, H), lambda r, c: (r, 0)),             # c0
    ]
    scratch = [pltpu.VMEM((Rt, H), jnp.float32),                # h carry
               pltpu.VMEM((Rt, H), jnp.float32),                # c carry
               pltpu.VMEM((Tc, Rt, 4 * H), jnp.float32)]        # x projection
    state_spec = pl.BlockSpec((Rt, H), lambda r, c: (r, 0))
    state_shape = jax.ShapeDtypeStruct((R, H), jnp.float32)
    # NOTE: raise vmem_limit_bytes here if time_chunk/row_tile are scaled up
    # on v5e (16 MiB default scoped VMEM); unnecessary at these shapes.
    cparams = pltpu.CompilerParams(
        dimension_semantics=("parallel", "arbitrary"))

    if return_sequence:
        seq, h_last, c_last = pl.pallas_call(
            lstm_seq_kernel,
            out_shape=(jax.ShapeDtypeStruct((Tp, R, H), jnp.float32),
                       state_shape, state_shape),
            grid_spec=pltpu.PrefetchScalarGridSpec(
                num_scalar_prefetch=0, grid=grid,
                in_specs=in_specs,
                out_specs=(pl.BlockSpec((Tc, Rt, H), lambda r, c: (c, r, 0)),
                           state_spec, state_spec),
                scratch_shapes=scratch),
            compiler_params=cparams,
        )(x_tbf, wih, whh, b, lens, h0, c0)
        return seq[:T], h_last, c_last

    h_last, c_last = pl.pallas_call(
        lstm_last_kernel,
        out_shape=(state_shape, state_shape),
        grid_spec=pltpu.PrefetchScalarGridSpec(
            num_scalar_prefetch=0, grid=grid,
            in_specs=in_specs,
            out_specs=(state_spec, state_spec),
            scratch_shapes=scratch),
        compiler_params=cparams,
    )(x_tbf, wih, whh, b, lens, h0, c0)
    return h_last, c_last


# -----------------------------------------------------------------------------
# Fused sentence decoder: for every decoded sentence, attention + 1-step
# sent_decoder LSTM cell + full word_decoder LSTM, all in ONE pallas_call.
# -----------------------------------------------------------------------------
def fused_decoder_kernel(lens_ref,                           # scalar prefetch
                         x_ref, eo_ref, h0_ref, c0_ref,
                         wsd_ref, bsd_ref, wdih_ref, wdhh_ref, bd_ref,
                         feat_ref,
                         sd_h, sd_c, wd_h, wd_c, dec_in, xp_sc):
    s = pl.program_id(0)            # decoded-sentence index (serial)
    c = pl.program_id(1)            # time chunk within the sentence
    Tc, B, E = x_ref.shape
    H = sd_h.shape[-1]

    @pl.when(jnp.logical_and(s == 0, c == 0))
    def _():
        sd_h[...] = h0_ref[...]
        sd_c[...] = c0_ref[...]
        dec_in[...] = h0_ref[...]   # sent_decoder_input = sent-encoder last h

    @pl.when(c == 0)
    def _():
        # ---- dot-attention over sentence-encoder outputs (query = sd_h) ----
        h = sd_h[...]                                        # (B, H)
        eo = eo_ref[...]                                     # (B, S, H)
        scores = jnp.sum(h[:, None, :] * eo, axis=-1)        # (B, S)
        m = jnp.max(scores, axis=-1, keepdims=True)
        e = jnp.exp(scores - m)
        w = e / jnp.sum(e, axis=-1, keepdims=True)           # exact softmax
        ctx = jnp.sum(w[:, :, None] * eo, axis=1)            # (B, H)
        # ---- one sent_decoder LSTM step on concat([dec_in, ctx]) -----------
        # wsd rows = [W_ih(dec_in part); W_ih(ctx part); W_hh]  -> (3H, 4H)
        xin = jnp.concatenate([dec_in[...], ctx, h],
                              axis=-1).astype(jnp.bfloat16)  # (B, 3H)
        gates = (jnp.dot(xin, wsd_ref[...],
                         preferred_element_type=jnp.float32) + bsd_ref[...])
        h_new, c_new = _lstm_gates(gates, sd_c[...], H)
        sd_h[...] = h_new
        sd_c[...] = c_new
        # word decoder starts from the fresh sent_decoder hidden
        wd_h[...] = h_new
        wd_c[...] = c_new

    # ---- word-decoder chunk: hoisted input projection -----------------------
    xp_sc[...] = (jnp.dot(_merge_time_rows(x_ref[...]), wdih_ref[...],
                          preferred_element_type=jnp.float32)
                  + bd_ref[...]).reshape(Tc, B, 4 * H)
    L = lens_ref[s]                                          # sentence length
    lens_v = jnp.full((B, 1), L, jnp.int32)
    t0 = c * Tc

    def step(lt, carry):
        gates = xp_sc[lt] + jnp.dot(
            wd_h[...].astype(jnp.bfloat16), wdhh_ref[...],
            preferred_element_type=jnp.float32)              # (B, 4H)
        h_new, c_new = _lstm_gates(gates, wd_c[...], H)
        valid = (t0 + lt) < lens_v
        h_upd = jnp.where(valid, h_new, wd_h[...])
        c_upd = jnp.where(valid, c_new, wd_c[...])
        wd_h[...] = h_upd
        wd_c[...] = c_upd
        feat_ref[lt] = h_upd.astype(feat_ref.dtype)
        return carry

    lax.fori_loop(0, Tc, step, 0, unroll=_unroll_for(Tc))

    @pl.when(c == pl.num_programs(1) - 1)
    def _():
        # next sentence's sent_decoder input = this word-decoder's last hidden
        dec_in[...] = wd_h[...]


def fused_sentence_decoder(dec_lens, dec_x, enc_outputs, sent_h, sent_c,
                           wsd, bsd, wdih, wdhh, bd, *, time_chunk=32):
    """dec_x: (Sd, Lmax, B, E) bf16, enc_outputs: (B, S, H) f32.
    Returns word-decoder hiddens (Sd, Lp, B, H) bf16 (padded over time)."""
    Sd, Lin, B, E = dec_x.shape
    S_enc = enc_outputs.shape[1]
    H = sent_h.shape[-1]
    Tc = min(time_chunk, Lin)
    Lp = pl.cdiv(Lin, Tc) * Tc
    if Lp != Lin:
        dec_x = jnp.pad(dec_x, ((0, 0), (0, Lp - Lin), (0, 0), (0, 0)))
    grid = (Sd, Lp // Tc)

    return pl.pallas_call(
        fused_decoder_kernel,
        out_shape=jax.ShapeDtypeStruct((Sd, Lp, B, H), jnp.bfloat16),
        grid_spec=pltpu.PrefetchScalarGridSpec(
            num_scalar_prefetch=1,
            grid=grid,
            in_specs=[
                pl.BlockSpec((None, Tc, B, E),
                             lambda s, c, lens: (s, c, 0, 0)),     # dec inputs
                pl.BlockSpec((B, S_enc, H),
                             lambda s, c, lens: (0, 0, 0)),        # enc outputs
                pl.BlockSpec((B, H), lambda s, c, lens: (0, 0)),   # sent h0
                pl.BlockSpec((B, H), lambda s, c, lens: (0, 0)),   # sent c0
                pl.BlockSpec((3 * H, 4 * H), lambda s, c, lens: (0, 0)),
                pl.BlockSpec((1, 4 * H), lambda s, c, lens: (0, 0)),
                pl.BlockSpec((E, 4 * H), lambda s, c, lens: (0, 0)),
                pl.BlockSpec((H, 4 * H), lambda s, c, lens: (0, 0)),
                pl.BlockSpec((1, 4 * H), lambda s, c, lens: (0, 0)),
            ],
            out_specs=pl.BlockSpec((None, Tc, B, H),
                                   lambda s, c, lens: (s, c, 0, 0)),
            scratch_shapes=[
                pltpu.VMEM((B, H), jnp.float32),          # sent-decoder h
                pltpu.VMEM((B, H), jnp.float32),          # sent-decoder c
                pltpu.VMEM((B, H), jnp.float32),          # word-decoder h
                pltpu.VMEM((B, H), jnp.float32),          # word-decoder c
                pltpu.VMEM((B, H), jnp.float32),          # next decoder input
                pltpu.VMEM((Tc, B, 4 * H), jnp.float32),  # x projection
            ]),
        compiler_params=pltpu.CompilerParams(
            dimension_semantics=("arbitrary", "arbitrary")),
    )(dec_lens, dec_x, enc_outputs, sent_h, sent_c, wsd, bsd, wdih, wdhh, bd)


# -----------------------------------------------------------------------------
# Output projection + log_softmax (row-tiled, "parallel" grid axis)
# -----------------------------------------------------------------------------
def fc_logsoftmax_kernel(x_ref, w_ref, b_ref, o_ref):
    logits = (jnp.dot(x_ref[...].astype(jnp.bfloat16), w_ref[...],
                      preferred_element_type=jnp.float32)
              + b_ref[...])                                  # (Nt, V) f32
    m = jnp.max(logits, axis=-1, keepdims=True)
    z = logits - m
    lse = jnp.log(jnp.sum(jnp.exp(z), axis=-1, keepdims=True))
    o_ref[...] = z - lse


def fc_logsoftmax(x, w, b, *, row_tile=128):
    """x (N, H) bf16/f32, w (H, V) bf16, b (1, V) f32 -> log-probs (N, V)."""
    N, H = x.shape
    V = w.shape[1]
    Nt = min(row_tile, ((N + 7) // 8) * 8)
    Np = pl.cdiv(N, Nt) * Nt
    if Np != N:
        x = jnp.pad(x, ((0, Np - N), (0, 0)))
    out = pl.pallas_call(
        fc_logsoftmax_kernel,
        out_shape=jax.ShapeDtypeStruct((Np, V), jnp.float32),
        grid_spec=pltpu.PrefetchScalarGridSpec(
            num_scalar_prefetch=0,
            grid=(Np // Nt,),
            in_specs=[pl.BlockSpec((Nt, H), lambda i: (i, 0)),
                      pl.BlockSpec((H, V), lambda i: (0, 0)),
                      pl.BlockSpec((1, V), lambda i: (0, 0))],
            out_specs=pl.BlockSpec((Nt, V), lambda i: (i, 0))),
        compiler_params=pltpu.CompilerParams(
            dimension_semantics=("parallel",)),
    )(x, w, b)
    return out[:N]


# -----------------------------------------------------------------------------
# Parameter construction (deterministic, synthetic; n_layers = 1, no dropout)
# -----------------------------------------------------------------------------
def make_lstm_params(key, in_size, hidden_size, scale=0.1):
    k1, k2, k3 = jax.random.split(key, 3)
    wih = (scale * jax.random.normal(k1, (in_size, 4 * hidden_size),
                                     jnp.float32)).astype(jnp.bfloat16)
    whh = (scale * jax.random.normal(k2, (hidden_size, 4 * hidden_size),
                                     jnp.float32)).astype(jnp.bfloat16)
    # PyTorch has bias_ih + bias_hh; only their sum matters numerically.
    b = scale * jax.random.normal(k3, (1, 4 * hidden_size), jnp.float32)
    return {"wih": wih, "whh": whh, "b": b}


def make_params(key, vocab_size, embed_size, hidden_size):
    keys = jax.random.split(key, 7)
    return {
        "embedding": (0.1 * jax.random.normal(
            keys[0], (vocab_size, embed_size), jnp.float32)).astype(jnp.bfloat16),
        "word_encoder": make_lstm_params(keys[1], embed_size, hidden_size),
        "word_decoder": make_lstm_params(keys[2], embed_size, hidden_size),
        "sent_encoder": make_lstm_params(keys[3], hidden_size, hidden_size),
        "sent_decoder": make_lstm_params(keys[4], 2 * hidden_size, hidden_size),
        "fc_w": (0.1 * jax.random.normal(keys[5], (hidden_size, vocab_size),
                                         jnp.float32)).astype(jnp.bfloat16),
        "fc_b": 0.1 * jax.random.normal(keys[6], (1, vocab_size), jnp.float32),
    }


# -----------------------------------------------------------------------------
# Forward pass (mirrors AttentionHierarchicalEncoderDecoder.forward, n_layers=1)
# -----------------------------------------------------------------------------
def forward(params, word_encoder_inputs_list, word_decoder_inputs_list,
            hidden_size):
    emb = params["embedding"]                     # (V, E) bf16
    H = hidden_size
    S = len(word_encoder_inputs_list)
    B = word_encoder_inputs_list[0].shape[0]
    E = emb.shape[1]

    # ---- word-level encoding: ALL sentences in one batched LSTM launch -----
    enc_lens = [int(t.shape[1]) for t in word_encoder_inputs_list]
    Lmax = max(enc_lens)
    toks = jnp.stack([jnp.pad(t, ((0, 0), (0, Lmax - t.shape[1])))
                      for t in word_encoder_inputs_list], axis=0)   # (S,B,Lmax)
    x = jnp.take(emb, toks, axis=0)                                 # bf16
    x = jnp.transpose(x, (2, 0, 1, 3)).reshape(Lmax, S * B, E)      # (Lmax,S*B,E)
    lens = jnp.repeat(jnp.asarray(enc_lens, jnp.int32), B)[:, None] # (S*B,1)
    zeros_sb = jnp.zeros((S * B, H), jnp.float32)
    p = params["word_encoder"]
    h_last, _ = lstm_scan(x, p["wih"], p["whh"], p["b"], lens,
                          zeros_sb, zeros_sb, return_sequence=False,
                          row_tile=B)
    sent_seq = h_last.reshape(S, B, H)            # (S, B, H) time-major

    # ---- sentence-level encoding --------------------------------------------
    p = params["sent_encoder"]
    zeros_b = jnp.zeros((B, H), jnp.float32)
    lens_b = jnp.full((B, 1), S, jnp.int32)       # all S sentences valid
    sent_outs_tm, sent_h, sent_c = lstm_scan(
        sent_seq.astype(jnp.bfloat16), p["wih"], p["whh"], p["b"],
        lens_b, zeros_b, zeros_b, return_sequence=True)
    sent_encoder_outputs = jnp.transpose(sent_outs_tm, (1, 0, 2))   # (B,S,H)

    # ---- fused sentence-level decoding with attention + word decoding -------
    dec_tensors = word_decoder_inputs_list[1:]
    dec_lens = [int(t.shape[1]) for t in dec_tensors]
    Sd = len(dec_tensors)
    Ld = max(dec_lens)
    dec_toks = jnp.stack([jnp.pad(t, ((0, 0), (0, Ld - t.shape[1])))
                          for t in dec_tensors], axis=0)            # (Sd,B,Ld)
    dx = jnp.take(emb, dec_toks, axis=0)                            # (Sd,B,Ld,E)
    dx = jnp.transpose(dx, (0, 2, 1, 3))                            # (Sd,Ld,B,E)
    dlens = jnp.asarray(dec_lens, jnp.int32)                        # (Sd,)

    pd = params["sent_decoder"]
    pw = params["word_decoder"]
    wsd = jnp.concatenate([pd["wih"], pd["whh"]], axis=0)           # (3H,4H)
    feats = fused_sentence_decoder(
        dlens, dx, sent_encoder_outputs, sent_h, sent_c,
        wsd, pd["b"], pw["wih"], pw["whh"], pw["b"])                # (Sd,Lp,B,H)

    # ---- one fc + log_softmax launch for all decoded sentences --------------
    V = params["fc_w"].shape[1]
    rows = []
    for j, L in enumerate(dec_lens):
        rows.append(jnp.transpose(feats[j, :L], (1, 0, 2)).reshape(B * L, H))
    all_logp = fc_logsoftmax(jnp.concatenate(rows, axis=0),
                             params["fc_w"], params["fc_b"])
    outs, off = [], 0
    for L in dec_lens:
        n = B * L
        outs.append(all_logp[off:off + n].reshape(B, L, V))
        off += n
    return outs


# -----------------------------------------------------------------------------
# Demo
# -----------------------------------------------------------------------------
if __name__ == "__main__":
    vocab_size = 256      # multiple of 128 -> lane-dense fc output
    embed_size = 128
    hidden_size = 128     # aligned gate slices, lane-dense h
    batch = 8             # full sublane occupancy
    sent_num = 3
    enc_lens = [5, 9, 7]  # uneven: exercises padding + length masking
    dec_lens = [4, 6, 9]

    key = jax.random.PRNGKey(0)
    key, pkey = jax.random.split(key)
    params = make_params(pkey, vocab_size, embed_size, hidden_size)

    enc_inputs, dec_inputs = [], []
    for s in range(sent_num):
        key, k1, k2 = jax.random.split(key, 3)
        enc_inputs.append(jax.random.randint(k1, (batch, enc_lens[s]),
                                             0, vocab_size))
        dec_inputs.append(jax.random.randint(k2, (batch, dec_lens[s]),
                                             0, vocab_size))

    outputs = forward(params, enc_inputs, dec_inputs, hidden_size)
    for o in outputs:
        jax.block_until_ready(o)

    # sanity: list of sent_num-1 log-prob tensors, each (B, dec_len_i, vocab)
    assert len(outputs) == sent_num - 1
    for i, o in enumerate(outputs, start=1):
        assert o.shape == (batch, dec_lens[i], vocab_size), o.shape
        s = jnp.exp(o).sum(-1)   # rows of log_softmax should exp-sum to 1
        assert bool(jnp.all(jnp.abs(s - 1.0) < 1e-3))

    print("KERNEL_OK")
</pallas_src>

<mosaic_0001>
module attributes {stable_mosaic.version = 11 : i64} {
  func.func @lstm_last_kernel(%arg0: i32, %arg1: i32, %arg2: memref<9x8x128xbf16, #tpu.memory_space<vmem>>, %arg3: memref<128x512xbf16, #tpu.memory_space<vmem>>, %arg4: memref<128x512xbf16, #tpu.memory_space<vmem>>, %arg5: memref<1x512xf32, #tpu.memory_space<vmem>>, %arg6: memref<8x1xi32, #tpu.memory_space<vmem>>, %arg7: memref<8x128xf32, #tpu.memory_space<vmem>>, %arg8: memref<8x128xf32, #tpu.memory_space<vmem>>, %arg9: memref<8x128xf32, #tpu.memory_space<vmem>>, %arg10: memref<8x128xf32, #tpu.memory_space<vmem>>, %arg11: memref<8x128xf32, #tpu.memory_space<vmem>>, %arg12: memref<8x128xf32, #tpu.memory_space<vmem>>, %arg13: memref<9x8x512xf32, #tpu.memory_space<vmem>>) attributes {dimension_semantics = [#tpu.dimension_semantics<parallel>, #tpu.dimension_semantics<arbitrary>], iteration_bounds = array<i64: 3, 1>, scalar_prefetch = 0 : i64, scratch_operands = 3 : i64, tpu.core_type = #tpu.core_type<tc>, window_params = [{transform_indices = @transform_0, window_bounds = array<i64: 9, 8, 128>}, {pipeline_mode = #tpu.pipeline_mode<synchronous>, transform_indices = @transform_1, window_bounds = array<i64: 128, 512>}, {pipeline_mode = #tpu.pipeline_mode<synchronous>, transform_indices = @transform_2, window_bounds = array<i64: 128, 512>}, {pipeline_mode = #tpu.pipeline_mode<synchronous>, transform_indices = @transform_3, window_bounds = array<i64: 1, 512>}, {transform_indices = @transform_4, window_bounds = array<i64: 8, 1>}, {transform_indices = @transform_5, window_bounds = array<i64: 8, 128>}, {transform_indices = @transform_6, window_bounds = array<i64: 8, 128>}, {transform_indices = @transform_7, window_bounds = array<i64: 8, 128>}, {transform_indices = @transform_8, window_bounds = array<i64: 8, 128>}]} {
    %c0_i32 = arith.constant 0 : i32
    %0 = arith.cmpi eq, %arg1, %c0_i32 : i32
    %1 = arith.extui %0 : i1 to i32
    %c0_i32_0 = arith.constant 0 : i32
    %2 = arith.cmpi ne, %1, %c0_i32_0 : i32
    scf.if %2 {
      %c0_250 = arith.constant 0 : index
      %c0_251 = arith.constant 0 : index
      %496 = vector.load %arg7[%c0_250, %c0_251] : memref<8x128xf32, #tpu.memory_space<vmem>>, vector<8x128xf32>
      %c0_252 = arith.constant 0 : index
      %c0_253 = arith.constant 0 : index
      %497 = vector.load %arg11[%c0_252, %c0_253] : memref<8x128xf32, #tpu.memory_space<vmem>>, vector<8x128xf32>
      tpu.vector_store %arg11[%c0_252, %c0_253], %496 {strides = array<i32>} : memref<8x128xf32, #tpu.memory_space<vmem>>, vector<8x128xf32>,
      %c0_254 = arith.constant 0 : index
      %c0_255 = arith.constant 0 : index
      %498 = vector.load %arg8[%c0_254, %c0_255] : memref<8x128xf32, #tpu.memory_space<vmem>>, vector<8x128xf32>
      %c0_256 = arith.constant 0 : index
      %c0_257 = arith.constant 0 : index
      %499 = vector.load %arg12[%c0_256, %c0_257] : memref<8x128xf32, #tpu.memory_space<vmem>>, vector<8x128xf32>
      tpu.vector_store %arg12[%c0_256, %c0_257], %498 {strides = array<i32>} : memref<8x128xf32, #tpu.memory_space<vmem>>, vector<8x128xf32>,
    } else {
    }
    %c0 = arith.constant 0 : index
    %c0_1 = arith.constant 0 : index
    %c0_2 = arith.constant 0 : index
    %3 = vector.load %arg2[%c0, %c0_1, %c0_2] : memref<9x8x128xbf16, #tpu.memory_space<vmem>>, vector<9x8x128xbf16>
    %4 = arith.extf %3 : vector<9x8x128xbf16> to vector<9x8x128xf32>
    %5 = vector.shape_cast %4 : vector<9x8x128xf32> to vector<72x128xf32>
    %6 = arith.truncf %5 : vector<72x128xf32> to vector<72x128xbf16>
    %c0_3 = arith.constant 0 : index
    %c0_4 = arith.constant 0 : index
    %7 = vector.load %arg3[%c0_3, %c0_4] : memref<128x512xbf16, #tpu.memory_space<vmem>>, vector<128x512xbf16>
    %cst = arith.constant dense<0.000000e+00> : vector<72x512xf32>
    %8 = tpu.matmul %6, %7, %cst {dimension_numbers = #tpu.dot_dimension_numbers<[1], [0], [0], [1], [0, 0, 1, 1], [], []>} : vector<72x128xbf16>, vector<128x512xbf16>, vector<72x512xf32> -> vector<72x512xf32>
    %c0_5 = arith.constant 0 : index
    %c0_6 = arith.constant 0 : index
    %9 = vector.load %arg5[%c0_5, %c0_6] : memref<1x512xf32, #tpu.memory_space<vmem>>, vector<1x512xf32>
    %10 = vector.broadcast %9 : vector<1x512xf32> to vector<72x512xf32>
    %11 = arith.addf %8, %10 : vector<72x512xf32>
    %12 = vector.shape_cast %11 : vector<72x512xf32> to vector<9x8x512xf32>
    %c0_7 = arith.constant 0 : index
    %c0_8 = arith.constant 0 : index
    %c0_9 = arith.constant 0 : index
    %13 = vector.load %arg13[%c0_7, %c0_8, %c0_9] : memref<9x8x512xf32, #tpu.memory_space<vmem>>, vector<9x8x512xf32>
    tpu.vector_store %arg13[%c0_7, %c0_8, %c0_9], %12 {strides = array<i32>} : memref<9x8x512xf32, #tpu.memory_space<vmem>>, vector<9x8x512xf32>,
    %c9_i32 = arith.constant 9 : i32
    %14 = arith.muli %arg1, %c9_i32 : i32
    %c0_10 = arith.constant 0 : index
    %c0_11 = arith.constant 0 : index
    %15 = vector.load %arg6[%c0_10, %c0_11] : memref<8x1xi32, #tpu.memory_space<vmem>>, vector<8x1xi32>
    %c0_i32_12 = arith.constant 0 : i32
    %16 = arith.index_cast %c0_i32_12 : i32 to index
    %c0_13 = arith.constant 0 : index
    %c0_14 = arith.constant 0 : index
    %17 = vector.load %arg13[%16, %c0_13, %c0_14] : memref<9x8x512xf32, #tpu.memory_space<vmem>>, vector<1x8x512xf32>
    %18 = vector.shape_cast %17 : vector<1x8x512xf32> to vector<8x512xf32>
    %c0_15 = arith.constant 0 : index
    %c0_16 = arith.constant 0 : index
    %19 = vector.load %arg11[%c0_15, %c0_16] : memref<8x128xf32, #tpu.memory_space<vmem>>, vector<8x128xf32>
    %20 = arith.truncf %19 : vector<8x128xf32> to vector<8x128xbf16>
    %c0_17 = arith.constant 0 : index
    %c0_18 = arith.constant 0 : index
    %21 = vector.load %arg4[%c0_17, %c0_18] : memref<128x512xbf16, #tpu.memory_space<vmem>>, vector<128x512xbf16>
    %cst_19 = arith.constant dense<0.000000e+00> : vector<8x512xf32>
    %22 = tpu.matmul %20, %21, %cst_19 {dimension_numbers = #tpu.dot_dimension_numbers<[1], [0], [0], [1], [0, 0, 1, 1], [], []>} : vector<8x128xbf16>, vector<128x512xbf16>, vector<8x512xf32> -> vector<8x512xf32>
    %23 = arith.addf %18, %22 : vector<8x512xf32>
    %c0_20 = arith.constant 0 : index
    %c0_21 = arith.constant 0 : index
    %24 = vector.load %arg12[%c0_20, %c0_21] : memref<8x128xf32, #tpu.memory_space<vmem>>, vector<8x128xf32>
    %25 = vector.extract_strided_slice %23 {offsets = [0, 0], sizes = [8, 128], strides = [1, 1]} : vector<8x512xf32> to vector<8x128xf32>
    %cst_22 = arith.constant 5.000000e-01 : f32
    %26 = vector.broadcast %cst_22 : f32 to vector<8x128xf32>
    %27 = arith.mulf %26, %25 : vector<8x128xf32>
    %28 = math.tanh %27 : vector<8x128xf32>
    %cst_23 = arith.constant 1.000000e+00 : f32
    %29 = vector.broadcast %cst_23 : f32 to vector<8x128xf32>
    %30 = arith.addf %28, %29 : vector<8x128xf32>
    %cst_24 = arith.constant 5.000000e-01 : f32
    %31 = vector.broadcast %cst_24 : f32 to vector<8x128xf32>
    %32 = arith.mulf %31, %30 : vector<8x128xf32>
    %33 = vector.extract_strided_slice %23 {offsets = [0, 128], sizes = [8, 128], strides = [1, 1]} : vector<8x512xf32> to vector<8x128xf32>
    %cst_25 = arith.constant 5.000000e-01 : f32
    %34 = vector.broadcast %cst_25 : f32 to vector<8x128xf32>
    %35 = arith.mulf %34, %33 : vector<8x128xf32>
    %36 = math.tanh %35 : vector<8x128xf32>
    %cst_26 = arith.constant 1.000000e+00 : f32
    %37 = vector.broadcast %cst_26 : f32 to vector<8x128xf32>
    %38 = arith.addf %36, %37 : vector<8x128xf32>
    %cst_27 = arith.constant 5.000000e-01 : f32
    %39 = vector.broadcast %cst_27 : f32 to vector<8x128xf32>
    %40 = arith.mulf %39, %38 : vector<8x128xf32>
    %41 = vector.extract_strided_slice %23 {offsets = [0, 256], sizes = [8, 128], strides = [1, 1]} : vector<8x512xf32> to vector<8x128xf32>
    %42 = math.tanh %41 : vector<8x128xf32>
    %43 = vector.extract_strided_slice %23 {offsets = [0, 384], sizes = [8, 128], strides = [1, 1]} : vector<8x512xf32> to vector<8x128xf32>
    %cst_28 = arith.constant 5.000000e-01 : f32
    %44 = vector.broadcast %cst_28 : f32 to vector<8x128xf32>
    %45 = arith.mulf %44, %43 : vector<8x128xf32>
    %46 = math.tanh %45 : vector<8x128xf32>
    %cst_29 = arith.constant 1.000000e+00 : f32
    %47 = vector.broadcast %cst_29 : f32 to vector<8x128xf32>
    %48 = arith.addf %46, %47 : vector<8x128xf32>
    %cst_30 = arith.constant 5.000000e-01 : f32
    %49 = vector.broadcast %cst_30 : f32 to vector<8x128xf32>
    %50 = arith.mulf %49, %48 : vector<8x128xf32>
    %51 = arith.mulf %40, %24 : vector<8x128xf32>
    %52 = arith.mulf %32, %42 : vector<8x128xf32>
    %53 = arith.addf %51, %52 : vector<8x128xf32>
    %54 = math.tanh %53 : vector<8x128xf32>
    %55 = arith.mulf %50, %54 : vector<8x128xf32>
    %56 = arith.addi %14, %c0_i32_12 : i32
    %57 = vector.broadcast %56 : i32 to vector<8x1xi32>
    %58 = arith.cmpi slt, %57, %15 : vector<8x1xi32>
    %c0_31 = arith.constant 0 : index
    %c0_32 = arith.constant 0 : index
    %59 = vector.load %arg11[%c0_31, %c0_32] : memref<8x128xf32, #tpu.memory_space<vmem>>, vector<8x128xf32>
    %60 = vector.shape_cast %58 : vector<8x1xi1> to vector<8x1xi1>
    %61 = vector.broadcast %60 : vector<8x1xi1> to vector<8x128xi1>
    %62 = arith.select %61, %55, %59 : vector<8x128xi1>, vector<8x128xf32>
    %c0_33 = arith.constant 0 : index
    %c0_34 = arith.constant 0 : index
    %63 = vector.load %arg12[%c0_33, %c0_34] : memref<8x128xf32, #tpu.memory_space<vmem>>, vector<8x128xf32>
    %64 = vector.shape_cast %58 : vector<8x1xi1> to vector<8x1xi1>
    %65 = vector.broadcast %64 : vector<8x1xi1> to vector<8x128xi1>
    %66 = arith.select %65, %53, %63 : vector<8x128xi1>, vector<8x128xf32>
    %c0_35 = arith.constant 0 : index
    %c0_36 = arith.constant 0 : index
    %67 = vector.load %arg11[%c0_35, %c0_36] : memref<8x128xf32, #tpu.memory_space<vmem>>, vector<8x128xf32>
    tpu.vector_store %arg11[%c0_35, %c0_36], %62 {strides = array<i32>} : memref<8x128xf32, #tpu.memory_space<vmem>>, vector<8x128xf32>,
    %c0_37 = arith.constant 0 : index
    %c0_38 = arith.constant 0 : index
    %68 = vector.load %arg12[%c0_37, %c0_38] : memref<8x128xf32, #tpu.memory_space<vmem>>, vector<8x128xf32>
    tpu.vector_store %arg12[%c0_37, %c0_38], %66 {strides = array<i32>} : memref<8x128xf32, #tpu.memory_space<vmem>>, vector<8x128xf32>,
    %c1_i32 = arith.constant 1 : i32
    %69 = arith.index_cast %c1_i32 : i32 to index
    %c0_39 = arith.constant 0 : index
    %c0_40 = arith.constant 0 : index
    %70 = vector.load %arg13[%69, %c0_39, %c0_40] : memref<9x8x512xf32, #tpu.memory_space<vmem>>, vector<1x8x512xf32>
    %71 = vector.shape_cast %70 : vector<1x8x512xf32> to vector<8x512xf32>
    %c0_41 = arith.constant 0 : index
    %c0_42 = arith.constant 0 : index
    %72 = vector.load %arg11[%c0_41, %c0_42] : memref<8x128xf32, #tpu.memory_space<vmem>>, vector<8x128xf32>
    %73 = arith.truncf %72 : vector<8x128xf32> to vector<8x128xbf16>
    %c0_43 = arith.constant 0 : index
    %c0_44 = arith.constant 0 : index
    %74 = vector.load %arg4[%c0_43, %c0_44] : memref<128x512xbf16, #tpu.memory_space<vmem>>, vector<128x512xbf16>
    %cst_45 = arith.constant dense<0.000000e+00> : vector<8x512xf32>
    %75 = tpu.matmul %73, %74, %cst_45 {dimension_numbers = #tpu.dot_dimension_numbers<[1], [0], [0], [1], [0, 0, 1, 1], [], []>} : vector<8x128xbf16>, vector<128x512xbf16>, vector<8x512xf32> -> vector<8x512xf32>
    %76 = arith.addf %71, %75 : vector<8x512xf32>
    %c0_46 = arith.constant 0 : index
    %c0_47 = arith.constant 0 : index
    %77 = vector.load %arg12[%c0_46, %c0_47] : memref<8x128xf32, #tpu.memory_space<vmem>>, vector<8x128xf32>
    %78 = vector.extract_strided_slice %76 {offsets = [0, 0], sizes = [8, 128], strides = [1, 1]} : vector<8x512xf32> to vector<8x128xf32>
    %cst_48 = arith.constant 5.000000e-01 : f32
    %79 = vector.broadcast %cst_48 : f32 to vector<8x128xf32>
    %80 = arith.mulf %79, %78 : vector<8x128xf32>
    %81 = math.tanh %80 : vector<8x128xf32>
    %cst_49 = arith.constant 1.000000e+00 : f32
    %82 = vector.broadcast %cst_49 : f32 to vector<8x128xf32>
    %83 = arith.addf %81, %82 : vector<8x128xf32>
    %cst_50 = arith.constant 5.000000e-01 : f32
    %84 = vector.broadcast %cst_50 : f32 to vector<8x128xf32>
    %85 = arith.mulf %84, %83 : vector<8x128xf32>
    %86 = vector.extract_strided_slice %76 {offsets = [0, 128], sizes = [8, 128], strides = [1, 1]} : vector<8x512xf32> to vector<8x128xf32>
    %cst_51 = arith.constant 5.000000e-01 : f32
    %87 = vector.broadcast %cst_51 : f32 to vector<8x128xf32>
    %88 = arith.mulf %87, %86 : vector<8x128xf32>
    %89 = math.tanh %88 : vector<8x128xf32>
    %cst_52 = arith.constant 1.000000e+00 : f32
    %90 = vector.broadcast %cst_52 : f32 to vector<8x128xf32>
    %91 = arith.addf %89, %90 : vector<8x128xf32>
    %cst_53 = arith.constant 5.000000e-01 : f32
    %92 = vector.broadcast %cst_53 : f32 to vector<8x128xf32>
    %93 = arith.mulf %92, %91 : vector<8x128xf32>
    %94 = vector.extract_strided_slice %76 {offsets = [0, 256], sizes = [8, 128], strides = [1, 1]} : vector<8x512xf32> to vector<8x128xf32>
    %95 = math.tanh %94 : vector<8x128xf32>
    %96 = vector.extract_strided_slice %76 {offsets = [0, 384], sizes = [8, 128], strides = [1, 1]} : vector<8x512xf32> to vector<8x128xf32>
    %cst_54 = arith.constant 5.000000e-01 : f32
    %97 = vector.broadcast %cst_54 : f32 to vector<8x128xf32>
    %98 = arith.mulf %97, %96 : vector<8x128xf32>
    %99 = math.tanh %98 : vector<8x128xf32>
    %cst_55 = arith.constant 1.000000e+00 : f32
    %100 = vector.broadcast %cst_55 : f32 to vector<8x128xf32>
    %101 = arith.addf %99, %100 : vector<8x128xf32>
    %cst_56 = arith.constant 5.000000e-01 : f32
    %102 = vector.broadcast %cst_56 : f32 to vector<8x128xf32>
    %103 = arith.mulf %102, %101 : vector<8x128xf32>
    %104 = arith.mulf %93, %77 : vector<8x128xf32>
    %105 = arith.mulf %85, %95 : vector<8x128xf32>
    %106 = arith.addf %104, %105 : vector<8x128xf32>
    %107 = math.tanh %106 : vector<8x128xf32>
    %108 = arith.mulf %103, %107 : vector<8x128xf32>
    %109 = arith.addi %14, %c1_i32 : i32
    %110 = vector.broadcast %109 : i32 to vector<8x1xi32>
    %111 = arith.cmpi slt, %110, %15 : vector<8x1xi32>
    %c0_57 = arith.constant 0 : index
    %c0_58 = arith.constant 0 : index
    %112 = vector.load %arg11[%c0_57, %c0_58] : memref<8x128xf32, #tpu.memory_space<vmem>>, vector<8x128xf32>
    %113 = vector.shape_cast %111 : vector<8x1xi1> to vector<8x1xi1>
    %114 = vector.broadcast %113 : vector<8x1xi1> to vector<8x128xi1>
    %115 = arith.select %114, %108, %112 : vector<8x128xi1>, vector<8x128xf32>
    %c0_59 = arith.constant 0 : index
    %c0_60 = arith.constant 0 : index
    %116 = vector.load %arg12[%c0_59, %c0_60] : memref<8x128xf32, #tpu.memory_space<vmem>>, vector<8x128xf32>
    %117 = vector.shape_cast %111 : vector<8x1xi1> to vector<8x1xi1>
    %118 = vector.broadcast %117 : vector<8x1xi1> to vector<8x128xi1>
    %119 = arith.select %118, %106, %116 : vector<8x128xi1>, vector<8x128xf32>
    %c0_61 = arith.constant 0 : index
    %c0_62 = arith.constant 0 : index
    %120 = vector.load %arg11[%c0_61, %c0_62] : memref<8x128xf32, #tpu.memory_space<vmem>>, vector<8x128xf32>
    tpu.vector_store %arg11[%c0_61, %c0_62], %115 {strides = array<i32>} : memref<8x128xf32, #tpu.memory_space<vmem>>, vector<8x128xf32>,
    %c0_63 = arith.constant 0 : index
    %c0_64 = arith.constant 0 : index
    %121 = vector.load %arg12[%c0_63, %c0_64] : memref<8x128xf32, #tpu.memory_space<vmem>>, vector<8x128xf32>
    tpu.vector_store %arg12[%c0_63, %c0_64], %119 {strides = array<i32>} : memref<8x128xf32, #tpu.memory_space<vmem>>, vector<8x128xf32>,
    %c2_i32 = arith.constant 2 : i32
    %122 = arith.index_cast %c2_i32 : i32 to index
    %c0_65 = arith.constant 0 : index
    %c0_66 = arith.constant 0 : index
    %123 = vector.load %arg13[%122, %c0_65, %c0_66] : memref<9x8x512xf32, #tpu.memory_space<vmem>>, vector<1x8x512xf32>
    %124 = vector.shape_cast %123 : vector<1x8x512xf32> to vector<8x512xf32>
    %c0_67 = arith.constant 0 : index
    %c0_68 = arith.constant 0 : index
    %125 = vector.load %arg11[%c0_67, %c0_68] : memref<8x128xf32, #tpu.memory_space<vmem>>, vector<8x128xf32>
    %126 = arith.truncf %125 : vector<8x128xf32> to vector<8x128xbf16>
    %c0_69 = arith.constant 0 : index
    %c0_70 = arith.constant 0 : index
    %127 = vector.load %arg4[%c0_69, %c0_70] : memref<128x512xbf16, #tpu.memory_space<vmem>>, vector<128x512xbf16>
    %cst_71 = arith.constant dense<0.000000e+00> : vector<8x512xf32>
    %128 = tpu.matmul %126, %127, %cst_71 {dimension_numbers = #tpu.dot_dimension_numbers<[1], [0], [0], [1], [0, 0, 1, 1], [], []>} : vector<8x128xbf16>, vector<128x512xbf16>, vector<8x512xf32> -> vector<8x512xf32>
    %129 = arith.addf %124, %128 : vector<8x512xf32>
    %c0_72 = arith.constant 0 : index
    %c0_73 = arith.constant 0 : index
    %130 = vector.load %arg12[%c0_72, %c0_73] : memref<8x128xf32, #tpu.memory_space<vmem>>, vector<8x128xf32>
    %131 = vector.extract_strided_slice %129 {offsets = [0, 0], sizes = [8, 128], strides = [1, 1]} : vector<8x512xf32> to vector<8x128xf32>
    %cst_74 = arith.constant 5.000000e-01 : f32
    %132 = vector.broadcast %cst_74 : f32 to vector<8x128xf32>
    %133 = arith.mulf %132, %131 : vector<8x128xf32>
    %134 = math.tanh %133 : vector<8x128xf32>
    %cst_75 = arith.constant 1.000000e+00 : f32
    %135 = vector.broadcast %cst_75 : f32 to vector<8x128xf32>
    %136 = arith.addf %134, %135 : vector<8x128xf32>
    %cst_76 = arith.constant 5.000000e-01 : f32
    %137 = vector.broadcast %cst_76 : f32 to vector<8x128xf32>
    %138 = arith.mulf %137, %136 : vector<8x128xf32>
    %139 = vector.extract_strided_slice %129 {offsets = [0, 128], sizes = [8, 128], strides = [1, 1]} : vector<8x512xf32> to vector<8x128xf32>
    %cst_77 = arith.constant 5.000000e-01 : f32
    %140 = vector.broadcast %cst_77 : f32 to vector<8x128xf32>
    %141 = arith.mulf %140, %139 : vector<8x128xf32>
    %142 = math.tanh %141 : vector<8x128xf32>
    %cst_78 = arith.constant 1.000000e+00 : f32
    %143 = vector.broadcast %cst_78 : f32 to vector<8x128xf32>
    %144 = arith.addf %142, %143 : vector<8x128xf32>
    %cst_79 = arith.constant 5.000000e-01 : f32
    %145 = vector.broadcast %cst_79 : f32 to vector<8x128xf32>
    %146 = arith.mulf %145, %144 : vector<8x128xf32>
    %147 = vector.extract_strided_slice %129 {offsets = [0, 256], sizes = [8, 128], strides = [1, 1]} : vector<8x512xf32> to vector<8x128xf32>
    %148 = math.tanh %147 : vector<8x128xf32>
    %149 = vector.extract_strided_slice %129 {offsets = [0, 384], sizes = [8, 128], strides = [1, 1]} : vector<8x512xf32> to vector<8x128xf32>
    %cst_80 = arith.constant 5.000000e-01 : f32
    %150 = vector.broadcast %cst_80 : f32 to vector<8x128xf32>
    %151 = arith.mulf %150, %149 : vector<8x128xf32>
    %152 = math.tanh %151 : vector<8x128xf32>
    %cst_81 = arith.constant 1.000000e+00 : f32
    %153 = vector.broadcast %cst_81 : f32 to vector<8x128xf32>
    %154 = arith.addf %152, %153 : vector<8x128xf32>
    %cst_82 = arith.constant 5.000000e-01 : f32
    %155 = vector.broadcast %cst_82 : f32 to vector<8x128xf32>
    %156 = arith.mulf %155, %154 : vector<8x128xf32>
    %157 = arith.mulf %146, %130 : vector<8x128xf32>
    %158 = arith.mulf %138, %148 : vector<8x128xf32>
    %159 = arith.addf %157, %158 : vector<8x128xf32>
    %160 = math.tanh %159 : vector<8x128xf32>
    %161 = arith.mulf %156, %160 : vector<8x128xf32>
    %162 = arith.addi %14, %c2_i32 : i32
    %163 = vector.broadcast %162 : i32 to vector<8x1xi32>
    %164 = arith.cmpi slt, %163, %15 : vector<8x1xi32>
    %c0_83 = arith.constant 0 : index
    %c0_84 = arith.constant 0 : index
    %165 = vector.load %arg11[%c0_83, %c0_84] : memref<8x128xf32, #tpu.memory_space<vmem>>, vector<8x128xf32>
    %166 = vector.shape_cast %164 : vector<8x1xi1> to vector<8x1xi1>
    %167 = vector.broadcast %166 : vector<8x1xi1> to vector<8x128xi1>
    %168 = arith.select %167, %161, %165 : vector<8x128xi1>, vector<8x128xf32>
    %c0_85 = arith.constant 0 : index
    %c0_86 = arith.constant 0 : index
    %169 = vector.load %arg12[%c0_85, %c0_86] : memref<8x128xf32, #tpu.memory_space<vmem>>, vector<8x128xf32>
    %170 = vector.shape_cast %164 : vector<8x1xi1> to vector<8x1xi1>
    %171 = vector.broadcast %170 : vector<8x1xi1> to vector<8x128xi1>
    %172 = arith.select %171, %159, %169 : vector<8x128xi1>, vector<8x128xf32>
    %c0_87 = arith.constant 0 : index
    %c0_88 = arith.constant 0 : index
    %173 = vector.load %arg11[%c0_87, %c0_88] : memref<8x128xf32, #tpu.memory_space<vmem>>, vector<8x128xf32>
    tpu.vector_store %arg11[%c0_87, %c0_88], %168 {strides = array<i32>} : memref<8x128xf32, #tpu.memory_space<vmem>>, vector<8x128xf32>,
    %c0_89 = arith.constant 0 : index
    %c0_90 = arith.constant 0 : index
    %174 = vector.load %arg12[%c0_89, %c0_90] : memref<8x128xf32, #tpu.memory_space<vmem>>, vector<8x128xf32>
    tpu.vector_store %arg12[%c0_89, %c0_90], %172 {strides = array<i32>} : memref<8x128xf32, #tpu.memory_space<vmem>>, vector<8x128xf32>,
    %c3_i32 = arith.constant 3 : i32
    %175 = arith.index_cast %c3_i32 : i32 to index
    %c0_91 = arith.constant 0 : index
    %c0_92 = arith.constant 0 : index
    %176 = vector.load %arg13[%175, %c0_91, %c0_92] : memref<9x8x512xf32, #tpu.memory_space<vmem>>, vector<1x8x512xf32>
    %177 = vector.shape_cast %176 : vector<1x8x512xf32> to vector<8x512xf32>
    %c0_93 = arith.constant 0 : index
    %c0_94 = arith.constant 0 : index
    %178 = vector.load %arg11[%c0_93, %c0_94] : memref<8x128xf32, #tpu.memory_space<vmem>>, vector<8x128xf32>
    %179 = arith.truncf %178 : vector<8x128xf32> to vector<8x128xbf16>
    %c0_95 = arith.constant 0 : index
    %c0_96 = arith.constant 0 : index
    %180 = vector.load %arg4[%c0_95, %c0_96] : memref<128x512xbf16, #tpu.memory_space<vmem>>, vector<128x512xbf16>
    %cst_97 = arith.constant dense<0.000000e+00> : vector<8x512xf32>
    %181 = tpu.matmul %179, %180, %cst_97 {dimension_numbers = #tpu.dot_dimension_numbers<[1], [0], [0], [1], [0, 0, 1, 1], [], []>} : vector<8x128xbf16>, vector<128x512xbf16>, vector<8x512xf32> -> vector<8x512xf32>
    %182 = arith.addf %177, %181 : vector<8x512xf32>
    %c0_98 = arith.constant 0 : index
    %c0_99 = arith.constant 0 : index
    %183 = vector.load %arg12[%c0_98, %c0_99] : memref<8x128xf32, #tpu.memory_space<vmem>>, vector<8x128xf32>
    %184 = vector.extract_strided_slice %182 {offsets = [0, 0], sizes = [8, 128], strides = [1, 1]} : vector<8x512xf32> to vector<8x128xf32>
    %cst_100 = arith.constant 5.000000e-01 : f32
    %185 = vector.broadcast %cst_100 : f32 to vector<8x128xf32>
    %186 = arith.mulf %185, %184 : vector<8x128xf32>
    %187 = math.tanh %186 : vector<8x128xf32>
    %cst_101 = arith.constant 1.000000e+00 : f32
    %188 = vector.broadcast %cst_101 : f32 to vector<8x128xf32>
    %189 = arith.addf %187, %188 : vector<8x128xf32>
    %cst_102 = arith.constant 5.000000e-01 : f32
    %190 = vector.broadcast %cst_102 : f32 to vector<8x128xf32>
    %191 = arith.mulf %190, %189 : vector<8x128xf32>
    %192 = vector.extract_strided_slice %182 {offsets = [0, 128], sizes = [8, 128], strides = [1, 1]} : vector<8x512xf32> to vector<8x128xf32>
    %cst_103 = arith.constant 5.000000e-01 : f32
    %193 = vector.broadcast %cst_103 : f32 to vector<8x128xf32>
    %194 = arith.mulf %193, %192 : vector<8x128xf32>
    %195 = math.tanh %194 : vector<8x128xf32>
    %cst_104 = arith.constant 1.000000e+00 : f32
    %196 = vector.broadcast %cst_104 : f32 to vector<8x128xf32>
    %197 = arith.addf %195, %196 : vector<8x128xf32>
    %cst_105 = arith.constant 5.000000e-01 : f32
    %198 = vector.broadcast %cst_105 : f32 to vector<8x128xf32>
    %199 = arith.mulf %198, %197 : vector<8x128xf32>
    %200 = vector.extract_strided_slice %182 {offsets = [0, 256], sizes = [8, 128], strides = [1, 1]} : vector<8x512xf32> to vector<8x128xf32>
    %201 = math.tanh %200 : vector<8x128xf32>
    %202 = vector.extract_strided_slice %182 {offsets = [0, 384], sizes = [8, 128], strides = [1, 1]} : vector<8x512xf32> to vector<8x128xf32>
    %cst_106 = arith.constant 5.000000e-01 : f32
    %203 = vector.broadcast %cst_106 : f32 to vector<8x128xf32>
    %204 = arith.mulf %203, %202 : vector<8x128xf32>
    %205 = math.tanh %204 : vector<8x128xf32>
    %cst_107 = arith.constant 1.000000e+00 : f32
    %206 = vector.broadcast %cst_107 : f32 to vector<8x128xf32>
    %207 = arith.addf %205, %206 : vector<8x128xf32>
    %cst_108 = arith.constant 5.000000e-01 : f32
    %208 = vector.broadcast %cst_108 : f32 to vector<8x128xf32>
    %209 = arith.mulf %208, %207 : vector<8x128xf32>
    %210 = arith.mulf %199, %183 : vector<8x128xf32>
    %211 = arith.mulf %191, %201 : vector<8x128xf32>
    %212 = arith.addf %210, %211 : vector<8x128xf32>
    %213 = math.tanh %212 : vector<8x128xf32>
    %214 = arith.mulf %209, %213 : vector<8x128xf32>
    %215 = arith.addi %14, %c3_i32 : i32
    %216 = vector.broadcast %215 : i32 to vector<8x1xi32>
    %217 = arith.cmpi slt, %216, %15 : vector<8x1xi32>
    %c0_109 = arith.constant 0 : index
    %c0_110 = arith.constant 0 : index
    %218 = vector.load %arg11[%c0_109, %c0_110] : memref<8x128xf32, #tpu.memory_space<vmem>>, vector<8x128xf32>
    %219 = vector.shape_cast %217 : vector<8x1xi1> to vector<8x1xi1>
    %220 = vector.broadcast %219 : vector<8x1xi1> to vector<8x128xi1>
    %221 = arith.select %220, %214, %218 : vector<8x128xi1>, vector<8x128xf32>
    %c0_111 = arith.constant 0 : index
    %c0_112 = arith.constant 0 : index
    %222 = vector.load %arg12[%c0_111, %c0_112] : memref<8x128xf32, #tpu.memory_space<vmem>>, vector<8x128xf32>
    %223 = vector.shape_cast %217 : vector<8x1xi1> to vector<8x1xi1>
    %224 = vector.broadcast %223 : vector<8x1xi1> to vector<8x128xi1>
    %225 = arith.select %224, %212, %222 : vector<8x128xi1>, vector<8x128xf32>
    %c0_113 = arith.constant 0 : index
    %c0_114 = arith.constant 0 : index
    %226 = vector.load %arg11[%c0_113, %c0_114] : memref<8x128xf32, #tpu.memory_space<vmem>>, vector<8x128xf32>
    tpu.vector_store %arg11[%c0_113, %c0_114], %221 {strides = array<i32>} : memref<8x128xf32, #tpu.memory_space<vmem>>, vector<8x128xf32>,
    %c0_115 = arith.constant 0 : index
    %c0_116 = arith.constant 0 : index
    %227 = vector.load %arg12[%c0_115, %c0_116] : memref<8x128xf32, #tpu.memory_space<vmem>>, vector<8x128xf32>
    tpu.vector_store %arg12[%c0_115, %c0_116], %225 {strides = array<i32>} : memref<8x128xf32, #tpu.memory_space<vmem>>, vector<8x128xf32>,
    %c4_i32 = arith.constant 4 : i32
    %228 = arith.index_cast %c4_i32 : i32 to index
    %c0_117 = arith.constant 0 : index
    %c0_118 = arith.constant 0 : index
    %229 = vector.load %arg13[%228, %c0_117, %c0_118] : memref<9x8x512xf32, #tpu.memory_space<vmem>>, vector<1x8x512xf32>
    %230 = vector.shape_cast %229 : vector<1x8x512xf32> to vector<8x512xf32>
    %c0_119 = arith.constant 0 : index
    %c0_120 = arith.constant 0 : index
    %231 = vector.load %arg11[%c0_119, %c0_120] : memref<8x128xf32, #tpu.memory_space<vmem>>, vector<8x128xf32>
    %232 = arith.truncf %231 : vector<8x128xf32> to vector<8x128xbf16>
    %c0_121 = arith.constant 0 : index
    %c0_122 = arith.constant 0 : index
    %233 = vector.load %arg4[%c0_121, %c0_122] : memref<128x512xbf16, #tpu.memory_space<vmem>>, vector<128x512xbf16>
    %cst_123 = arith.constant dense<0.000000e+00> : vector<8x512xf32>
    %234 = tpu.matmul %232, %233, %cst_123 {dimension_numbers = #tpu.dot_dimension_numbers<[1], [0], [0], [1], [0, 0, 1, 1], [], []>} : vector<8x128xbf16>, vector<128x512xbf16>, vector<8x512xf32> -> vector<8x512xf32>
    %235 = arith.addf %230, %234 : vector<8x512xf32>
    %c0_124 = arith.constant 0 : index
    %c0_125 = arith.constant 0 : index
    %236 = vector.load %arg12[%c0_124, %c0_125] : memref<8x128xf32, #tpu.memory_space<vmem>>, vector<8x128xf32>
    %237 = vector.extract_strided_slice %235 {offsets = [0, 0], sizes = [8, 128], strides = [1, 1]} : vector<8x512xf32> to vector<8x128xf32>
    %cst_126 = arith.constant 5.000000e-01 : f32
    %238 = vector.broadcast %cst_126 : f32 to vector<8x128xf32>
    %239 = arith.mulf %238, %237 : vector<8x128xf32>
    %240 = math.tanh %239 : vector<8x128xf32>
    %cst_127 = arith.constant 1.000000e+00 : f32
    %241 = vector.broadcast %cst_127 : f32 to vector<8x128xf32>
    %242 = arith.addf %240, %241 : vector<8x128xf32>
    %cst_128 = arith.constant 5.000000e-01 : f32
    %243 = vector.broadcast %cst_128 : f32 to vector<8x128xf32>
    %244 = arith.mulf %243, %242 : vector<8x128xf32>
    %245 = vector.extract_strided_slice %235 {offsets = [0, 128], sizes = [8, 128], strides = [1, 1]} : vector<8x512xf32> to vector<8x128xf32>
    %cst_129 = arith.constant 5.000000e-01 : f32
    %246 = vector.broadcast %cst_129 : f32 to vector<8x128xf32>
    %247 = arith.mulf %246, %245 : vector<8x128xf32>
    %248 = math.tanh %247 : vector<8x128xf32>
    %cst_130 = arith.constant 1.000000e+00 : f32
    %249 = vector.broadcast %cst_130 : f32 to vector<8x128xf32>
    %250 = arith.addf %248, %249 : vector<8x128xf32>
    %cst_131 = arith.constant 5.000000e-01 : f32
    %251 = vector.broadcast %cst_131 : f32 to vector<8x128xf32>
    %252 = arith.mulf %251, %250 : vector<8x128xf32>
    %253 = vector.extract_strided_slice %235 {offsets = [0, 256], sizes = [8, 128], strides = [1, 1]} : vector<8x512xf32> to vector<8x128xf32>
    %254 = math.tanh %253 : vector<8x128xf32>
    %255 = vector.extract_strided_slice %235 {offsets = [0, 384], sizes = [8, 128], strides = [1, 1]} : vector<8x512xf32> to vector<8x128xf32>
    %cst_132 = arith.constant 5.000000e-01 : f32
    %256 = vector.broadcast %cst_132 : f32 to vector<8x128xf32>
    %257 = arith.mulf %256, %255 : vector<8x128xf32>
    %258 = math.tanh %257 : vector<8x128xf32>
    %cst_133 = arith.constant 1.000000e+00 : f32
    %259 = vector.broadcast %cst_133 : f32 to vector<8x128xf32>
    %260 = arith.addf %258, %259 : vector<8x128xf32>
    %cst_134 = arith.constant 5.000000e-01 : f32
    %261 = vector.broadcast %cst_134 : f32 to vector<8x128xf32>
    %262 = arith.mulf %261, %260 : vector<8x128xf32>
    %263 = arith.mulf %252, %236 : vector<8x128xf32>
    %264 = arith.mulf %244, %254 : vector<8x128xf32>
    %265 = arith.addf %263, %264 : vector<8x128xf32>
    %266 = math.tanh %265 : vector<8x128xf32>
    %267 = arith.mulf %262, %266 : vector<8x128xf32>
    %268 = arith.addi %14, %c4_i32 : i32
    %269 = vector.broadcast %268 : i32 to vector<8x1xi32>
    %270 = arith.cmpi slt, %269, %15 : vector<8x1xi32>
    %c0_135 = arith.constant 0 : index
    %c0_136 = arith.constant 0 : index
    %271 = vector.load %arg11[%c0_135, %c0_136] : memref<8x128xf32, #tpu.memory_space<vmem>>, vector<8x128xf32>
    %272 = vector.shape_cast %270 : vector<8x1xi1> to vector<8x1xi1>
    %273 = vector.broadcast %272 : vector<8x1xi1> to vector<8x128xi1>
    %274 = arith.select %273, %267, %271 : vector<8x128xi1>, vector<8x128xf32>
    %c0_137 = arith.constant 0 : index
    %c0_138 = arith.constant 0 : index
    %275 = vector.load %arg12[%c0_137, %c0_138] : memref<8x128xf32, #tpu.memory_space<vmem>>, vector<8x128xf32>
    %276 = vector.shape_cast %270 : vector<8x1xi1> to vector<8x1xi1>
    %277 = vector.broadcast %276 : vector<8x1xi1> to vector<8x128xi1>
    %278 = arith.select %277, %265, %275 : vector<8x128xi1>, vector<8x128xf32>
    %c0_139 = arith.constant 0 : index
    %c0_140 = arith.constant 0 : index
    %279 = vector.load %arg11[%c0_139, %c0_140] : memref<8x128xf32, #tpu.memory_space<vmem>>, vector<8x128xf32>
    tpu.vector_store %arg11[%c0_139, %c0_140], %274 {strides = array<i32>} : memref<8x128xf32, #tpu.memory_space<vmem>>, vector<8x128xf32>,
    %c0_141 = arith.constant 0 : index
    %c0_142 = arith.constant 0 : index
    %280 = vector.load %arg12[%c0_141, %c0_142] : memref<8x128xf32, #tpu.memory_space<vmem>>, vector<8x128xf32>
    tpu.vector_store %arg12[%c0_141, %c0_142], %278 {strides = array<i32>} : memref<8x128xf32, #tpu.memory_space<vmem>>, vector<8x128xf32>,
    %c5_i32 = arith.constant 5 : i32
    %281 = arith.index_cast %c5_i32 : i32 to index
    %c0_143 = arith.constant 0 : index
    %c0_144 = arith.constant 0 : index
    %282 = vector.load %arg13[%281, %c0_143, %c0_144] : memref<9x8x512xf32, #tpu.memory_space<vmem>>, vector<1x8x512xf32>
    %283 = vector.shape_cast %282 : vector<1x8x512xf32> to vector<8x512xf32>
    %c0_145 = arith.constant 0 : index
    %c0_146 = arith.constant 0 : index
    %284 = vector.load %arg11[%c0_145, %c0_146] : memref<8x128xf32, #tpu.memory_space<vmem>>, vector<8x128xf32>
    %285 = arith.truncf %284 : vector<8x128xf32> to vector<8x128xbf16>
    %c0_147 = arith.constant 0 : index
    %c0_148 = arith.constant 0 : index
    %286 = vector.load %arg4[%c0_147, %c0_148] : memref<128x512xbf16, #tpu.memory_space<vmem>>, vector<128x512xbf16>
    %cst_149 = arith.constant dense<0.000000e+00> : vector<8x512xf32>
    %287 = tpu.matmul %285, %286, %cst_149 {dimension_numbers = #tpu.dot_dimension_numbers<[1], [0], [0], [1], [0, 0, 1, 1], [], []>} : vector<8x128xbf16>, vector<128x512xbf16>, vector<8x512xf32> -> vector<8x512xf32>
    %288 = arith.addf %283, %287 : vector<8x512xf32>
    %c0_150 = arith.constant 0 : index
    %c0_151 = arith.constant 0 : index
    %289 = vector.load %arg12[%c0_150, %c0_151] : memref<8x128xf32, #tpu.memory_space<vmem>>, vector<8x128xf32>
    %290 = vector.extract_strided_slice %288 {offsets = [0, 0], sizes = [8, 128], strides = [1, 1]} : vector<8x512xf32> to vector<8x128xf32>
    %cst_152 = arith.constant 5.000000e-01 : f32
    %291 = vector.broadcast %cst_152 : f32 to vector<8x128xf32>
    %292 = arith.mulf %291, %290 : vector<8x128xf32>
    %293 = math.tanh %292 : vector<8x128xf32>
    %cst_153 = arith.constant 1.000000e+00 : f32
    %294 = vector.broadcast %cst_153 : f32 to vector<8x128xf32>
    %295 = arith.addf %293, %294 : vector<8x128xf32>
    %cst_154 = arith.constant 5.000000e-01 : f32
    %296 = vector.broadcast %cst_154 : f32 to vector<8x128xf32>
    %297 = arith.mulf %296, %295 : vector<8x128xf32>
    %298 = vector.extract_strided_slice %288 {offsets = [0, 128], sizes = [8, 128], strides = [1, 1]} : vector<8x512xf32> to vector<8x128xf32>
    %cst_155 = arith.constant 5.000000e-01 : f32
    %299 = vector.broadcast %cst_155 : f32 to vector<8x128xf32>
    %300 = arith.mulf %299, %298 : vector<8x128xf32>
    %301 = math.tanh %300 : vector<8x128xf32>
    %cst_156 = arith.constant 1.000000e+00 : f32
    %302 = vector.broadcast %cst_156 : f32 to vector<8x128xf32>
    %303 = arith.addf %301, %302 : vector<8x128xf32>
    %cst_157 = arith.constant 5.000000e-01 : f32
    %304 = vector.broadcast %cst_157 : f32 to vector<8x128xf32>
    %305 = arith.mulf %304, %303 : vector<8x128xf32>
    %306 = vector.extract_strided_slice %288 {offsets = [0, 256], sizes = [8, 128], strides = [1, 1]} : vector<8x512xf32> to vector<8x128xf32>
    %307 = math.tanh %306 : vector<8x128xf32>
    %308 = vector.extract_strided_slice %288 {offsets = [0, 384], sizes = [8, 128], strides = [1, 1]} : vector<8x512xf32> to vector<8x128xf32>
    %cst_158 = arith.constant 5.000000e-01 : f32
    %309 = vector.broadcast %cst_158 : f32 to vector<8x128xf32>
    %310 = arith.mulf %309, %308 : vector<8x128xf32>
    %311 = math.tanh %310 : vector<8x128xf32>
    %cst_159 = arith.constant 1.000000e+00 : f32
    %312 = vector.broadcast %cst_159 : f32 to vector<8x128xf32>
    %313 = arith.addf %311, %312 : vector<8x128xf32>
    %cst_160 = arith.constant 5.000000e-01 : f32
    %314 = vector.broadcast %cst_160 : f32 to vector<8x128xf32>
    %315 = arith.mulf %314, %313 : vector<8x128xf32>
    %316 = arith.mulf %305, %289 : vector<8x128xf32>
    %317 = arith.mulf %297, %307 : vector<8x128xf32>
    %318 = arith.addf %316, %317 : vector<8x128xf32>
    %319 = math.tanh %318 : vector<8x128xf32>
    %320 = arith.mulf %315, %319 : vector<8x128xf32>
    %321 = arith.addi %14, %c5_i32 : i32
    %322 = vector.broadcast %321 : i32 to vector<8x1xi32>
    %323 = arith.cmpi slt, %322, %15 : vector<8x1xi32>
    %c0_161 = arith.constant 0 : index
    %c0_162 = arith.constant 0 : index
    %324 = vector.load %arg11[%c0_161, %c0_162] : memref<8x128xf32, #tpu.memory_space<vmem>>, vector<8x128xf32>
    %325 = vector.shape_cast %323 : vector<8x1xi1> to vector<8x1xi1>
    %326 = vector.broadcast %325 : vector<8x1xi1> to vector<8x128xi1>
    %327 = arith.select %326, %320, %324 : vector<8x128xi1>, vector<8x128xf32>
    %c0_163 = arith.constant 0 : index
    %c0_164 = arith.constant 0 : index
    %328 = vector.load %arg12[%c0_163, %c0_164] : memref<8x128xf32, #tpu.memory_space<vmem>>, vector<8x128xf32>
    %329 = vector.shape_cast %323 : vector<8x1xi1> to vector<8x1xi1>
    %330 = vector.broadcast %329 : vector<8x1xi1> to vector<8x128xi1>
    %331 = arith.select %330, %318, %328 : vector<8x128xi1>, vector<8x128xf32>
    %c0_165 = arith.constant 0 : index
    %c0_166 = arith.constant 0 : index
    %332 = vector.load %arg11[%c0_165, %c0_166] : memref<8x128xf32, #tpu.memory_space<vmem>>, vector<8x128xf32>
    tpu.vector_store %arg11[%c0_165, %c0_166], %327 {strides = array<i32>} : memref<8x128xf32, #tpu.memory_space<vmem>>, vector<8x128xf32>,
    %c0_167 = arith.constant 0 : index
    %c0_168 = arith.constant 0 : index
    %333 = vector.load %arg12[%c0_167, %c0_168] : memref<8x128xf32, #tpu.memory_space<vmem>>, vector<8x128xf32>
    tpu.vector_store %arg12[%c0_167, %c0_168], %331 {strides = array<i32>} : memref<8x128xf32, #tpu.memory_space<vmem>>, vector<8x128xf32>,
    %c6_i32 = arith.constant 6 : i32
    %334 = arith.index_cast %c6_i32 : i32 to index
    %c0_169 = arith.constant 0 : index
    %c0_170 = arith.constant 0 : index
    %335 = vector.load %arg13[%334, %c0_169, %c0_170] : memref<9x8x512xf32, #tpu.memory_space<vmem>>, vector<1x8x512xf32>
    %336 = vector.shape_cast %335 : vector<1x8x512xf32> to vector<8x512xf32>
    %c0_171 = arith.constant 0 : index
    %c0_172 = arith.constant 0 : index
    %337 = vector.load %arg11[%c0_171, %c0_172] : memref<8x128xf32, #tpu.memory_space<vmem>>, vector<8x128xf32>
    %338 = arith.truncf %337 : vector<8x128xf32> to vector<8x128xbf16>
    %c0_173 = arith.constant 0 : index
    %c0_174 = arith.constant 0 : index
    %339 = vector.load %arg4[%c0_173, %c0_174] : memref<128x512xbf16, #tpu.memory_space<vmem>>, vector<128x512xbf16>
    %cst_175 = arith.constant dense<0.000000e+00> : vector<8x512xf32>
    %340 = tpu.matmul %338, %339, %cst_175 {dimension_numbers = #tpu.dot_dimension_numbers<[1], [0], [0], [1], [0, 0, 1, 1], [], []>} : vector<8x128xbf16>, vector<128x512xbf16>, vector<8x512xf32> -> vector<8x512xf32>
    %341 = arith.addf %336, %340 : vector<8x512xf32>
    %c0_176 = arith.constant 0 : index
    %c0_177 = arith.constant 0 : index
    %342 = vector.load %arg12[%c0_176, %c0_177] : memref<8x128xf32, #tpu.memory_space<vmem>>, vector<8x128xf32>
    %343 = vector.extract_strided_slice %341 {offsets = [0, 0], sizes = [8, 128], strides = [1, 1]} : vector<8x512xf32> to vector<8x128xf32>
    %cst_178 = arith.constant 5.000000e-01 : f32
    %344 = vector.broadcast %cst_178 : f32 to vector<8x128xf32>
    %345 = arith.mulf %344, %343 : vector<8x128xf32>
    %346 = math.tanh %345 : vector<8x128xf32>
    %cst_179 = arith.constant 1.000000e+00 : f32
    %347 = vector.broadcast %cst_179 : f32 to vector<8x128xf32>
    %348 = arith.addf %346, %347 : vector<8x128xf32>
    %cst_180 = arith.constant 5.000000e-01 : f32
    %349 = vector.broadcast %cst_180 : f32 to vector<8x128xf32>
    %350 = arith.mulf %349, %348 : vector<8x128xf32>
    %351 = vector.extract_strided_slice %341 {offsets = [0, 128], sizes = [8, 128], strides = [1, 1]} : vector<8x512xf32> to vector<8x128xf32>
    %cst_181 = arith.constant 5.000000e-01 : f32
    %352 = vector.broadcast %cst_181 : f32 to vector<8x128xf32>
    %353 = arith.mulf %352, %351 : vector<8x128xf32>
    %354 = math.tanh %353 : vector<8x128xf32>
    %cst_182 = arith.constant 1.000000e+00 : f32
    %355 = vector.broadcast %cst_182 : f32 to vector<8x128xf32>
    %356 = arith.addf %354, %355 : vector<8x128xf32>
    %cst_183 = arith.constant 5.000000e-01 : f32
    %357 = vector.broadcast %cst_183 : f32 to vector<8x128xf32>
    %358 = arith.mulf %357, %356 : vector<8x128xf32>
    %359 = vector.extract_strided_slice %341 {offsets = [0, 256], sizes = [8, 128], strides = [1, 1]} : vector<8x512xf32> to vector<8x128xf32>
    %360 = math.tanh %359 : vector<8x128xf32>
    %361 = vector.extract_strided_slice %341 {offsets = [0, 384], sizes = [8, 128], strides = [1, 1]} : vector<8x512xf32> to vector<8x128xf32>
    %cst_184 = arith.constant 5.000000e-01 : f32
    %362 = vector.broadcast %cst_184 : f32 to vector<8x128xf32>
    %363 = arith.mulf %362, %361 : vector<8x128xf32>
    %364 = math.tanh %363 : vector<8x128xf32>
    %cst_185 = arith.constant 1.000000e+00 : f32
    %365 = vector.broadcast %cst_185 : f32 to vector<8x128xf32>
    %366 = arith.addf %364, %365 : vector<8x128xf32>
    %cst_186 = arith.constant 5.000000e-01 : f32
    %367 = vector.broadcast %cst_186 : f32 to vector<8x128xf32>
    %368 = arith.mulf %367, %366 : vector<8x128xf32>
    %369 = arith.mulf %358, %342 : vector<8x128xf32>
    %370 = arith.mulf %350, %360 : vector<8x128xf32>
    %371 = arith.addf %369, %370 : vector<8x128xf32>
    %372 = math.tanh %371 : vector<8x128xf32>
    %373 = arith.mulf %368, %372 : vector<8x128xf32>
    %374 = arith.addi %14, %c6_i32 : i32
    %375 = vector.broadcast %374 : i32 to vector<8x1xi32>
    %376 = arith.cmpi slt, %375, %15 : vector<8x1xi32>
    %c0_187 = arith.constant 0 : index
    %c0_188 = arith.constant 0 : index
    %377 = vector.load %arg11[%c0_187, %c0_188] : memref<8x128xf32, #tpu.memory_space<vmem>>, vector<8x128xf32>
    %378 = vector.shape_cast %376 : vector<8x1xi1> to vector<8x1xi1>
    %379 = vector.broadcast %378 : vector<8x1xi1> to vector<8x128xi1>
    %380 = arith.select %379, %373, %377 : vector<8x128xi1>, vector<8x128xf32>
    %c0_189 = arith.constant 0 : index
    %c0_190 = arith.constant 0 : index
    %381 = vector.load %arg12[%c0_189, %c0_190] : memref<8x128xf32, #tpu.memory_space<vmem>>, vector<8x128xf32>
    %382 = vector.shape_cast %376 : vector<8x1xi1> to vector<8x1xi1>
    %383 = vector.broadcast %382 : vector<8x1xi1> to vector<8x128xi1>
    %384 = arith.select %383, %371, %381 : vector<8x128xi1>, vector<8x128xf32>
    %c0_191 = arith.constant 0 : index
    %c0_192 = arith.constant 0 : index
    %385 = vector.load %arg11[%c0_191, %c0_192] : memref<8x128xf32, #tpu.memory_space<vmem>>, vector<8x128xf32>
    tpu.vector_store %arg11[%c0_191, %c0_192], %380 {strides = array<i32>} : memref<8x128xf32, #tpu.memory_space<vmem>>, vector<8x128xf32>,
    %c0_193 = arith.constant 0 : index
    %c0_194 = arith.constant 0 : index
    %386 = vector.load %arg12[%c0_193, %c0_194] : memref<8x128xf32, #tpu.memory_space<vmem>>, vector<8x128xf32>
    tpu.vector_store %arg12[%c0_193, %c0_194], %384 {strides = array<i32>} : memref<8x128xf32, #tpu.memory_space<vmem>>, vector<8x128xf32>,
    %c7_i32 = arith.constant 7 : i32
    %387 = arith.index_cast %c7_i32 : i32 to index
    %c0_195 = arith.constant 0 : index
    %c0_196 = arith.constant 0 : index
    %388 = vector.load %arg13[%387, %c0_195, %c0_196] : memref<9x8x512xf32, #tpu.memory_space<vmem>>, vector<1x8x512xf32>
    %389 = vector.shape_cast %388 : vector<1x8x512xf32> to vector<8x512xf32>
    %c0_197 = arith.constant 0 : index
    %c0_198 = arith.constant 0 : index
    %390 = vector.load %arg11[%c0_197, %c0_198] : memref<8x128xf32, #tpu.memory_space<vmem>>, vector<8x128xf32>
    %391 = arith.truncf %390 : vector<8x128xf32> to vector<8x128xbf16>
    %c0_199 = arith.constant 0 : index
    %c0_200 = arith.constant 0 : index
    %392 = vector.load %arg4[%c0_199, %c0_200] : memref<128x512xbf16, #tpu.memory_space<vmem>>, vector<128x512xbf16>
    %cst_201 = arith.constant dense<0.000000e+00> : vector<8x512xf32>
    %393 = tpu.matmul %391, %392, %cst_201 {dimension_numbers = #tpu.dot_dimension_numbers<[1], [0], [0], [1], [0, 0, 1, 1], [], []>} : vector<8x128xbf16>, vector<128x512xbf16>, vector<8x512xf32> -> vector<8x512xf32>
    %394 = arith.addf %389, %393 : vector<8x512xf32>
    %c0_202 = arith.constant 0 : index
    %c0_203 = arith.constant 0 : index
    %395 = vector.load %arg12[%c0_202, %c0_203] : memref<8x128xf32, #tpu.memory_space<vmem>>, vector<8x128xf32>
    %396 = vector.extract_strided_slice %394 {offsets = [0, 0], sizes = [8, 128], strides = [1, 1]} : vector<8x512xf32> to vector<8x128xf32>
    %cst_204 = arith.constant 5.000000e-01 : f32
    %397 = vector.broadcast %cst_204 : f32 to vector<8x128xf32>
    %398 = arith.mulf %397, %396 : vector<8x128xf32>
    %399 = math.tanh %398 : vector<8x128xf32>
    %cst_205 = arith.constant 1.000000e+00 : f32
    %400 = vector.broadcast %cst_205 : f32 to vector<8x128xf32>
    %401 = arith.addf %399, %400 : vector<8x128xf32>
    %cst_206 = arith.constant 5.000000e-01 : f32
    %402 = vector.broadcast %cst_206 : f32 to vector<8x128xf32>
    %403 = arith.mulf %402, %401 : vector<8x128xf32>
    %404 = vector.extract_strided_slice %394 {offsets = [0, 128], sizes = [8, 128], strides = [1, 1]} : vector<8x512xf32> to vector<8x128xf32>
    %cst_207 = arith.constant 5.000000e-01 : f32
    %405 = vector.broadcast %cst_207 : f32 to vector<8x128xf32>
    %406 = arith.mulf %405, %404 : vector<8x128xf32>
    %407 = math.tanh %406 : vector<8x128xf32>
    %cst_208 = arith.constant 1.000000e+00 : f32
    %408 = vector.broadcast %cst_208 : f32 to vector<8x128xf32>
    %409 = arith.addf %407, %408 : vector<8x128xf32>
    %cst_209 = arith.constant 5.000000e-01 : f32
    %410 = vector.broadcast %cst_209 : f32 to vector<8x128xf32>
    %411 = arith.mulf %410, %409 : vector<8x128xf32>
    %412 = vector.extract_strided_slice %394 {offsets = [0, 256], sizes = [8, 128], strides = [1, 1]} : vector<8x512xf32> to vector<8x128xf32>
    %413 = math.tanh %412 : vector<8x128xf32>
    %414 = vector.extract_strided_slice %394 {offsets = [0, 384], sizes = [8, 128], strides = [1, 1]} : vector<8x512xf32> to vector<8x128xf32>
    %cst_210 = arith.constant 5.000000e-01 : f32
    %415 = vector.broadcast %cst_210 : f32 to vector<8x128xf32>
    %416 = arith.mulf %415, %414 : vector<8x128xf32>
    %417 = math.tanh %416 : vector<8x128xf32>
    %cst_211 = arith.constant 1.000000e+00 : f32
    %418 = vector.broadcast %cst_211 : f32 to vector<8x128xf32>
    %419 = arith.addf %417, %418 : vector<8x128xf32>
    %cst_212 = arith.constant 5.000000e-01 : f32
    %420 = vector.broadcast %cst_212 : f32 to vector<8x128xf32>
    %421 = arith.mulf %420, %419 : vector<8x128xf32>
    %422 = arith.mulf %411, %395 : vector<8x128xf32>
    %423 = arith.mulf %403, %413 : vector<8x128xf32>
    %424 = arith.addf %422, %423 : vector<8x128xf32>
    %425 = math.tanh %424 : vector<8x128xf32>
    %426 = arith.mulf %421, %425 : vector<8x128xf32>
    %427 = arith.addi %14, %c7_i32 : i32
    %428 = vector.broadcast %427 : i32 to vector<8x1xi32>
    %429 = arith.cmpi slt, %428, %15 : vector<8x1xi32>
    %c0_213 = arith.constant 0 : index
    %c0_214 = arith.constant 0 : index
    %430 = vector.load %arg11[%c0_213, %c0_214] : memref<8x128xf32, #tpu.memory_space<vmem>>, vector<8x128xf32>
    %431 = vector.shape_cast %429 : vector<8x1xi1> to vector<8x1xi1>
    %432 = vector.broadcast %431 : vector<8x1xi1> to vector<8x128xi1>
    %433 = arith.select %432, %426, %430 : vector<8x128xi1>, vector<8x128xf32>
    %c0_215 = arith.constant 0 : index
    %c0_216 = arith.constant 0 : index
    %434 = vector.load %arg12[%c0_215, %c0_216] : memref<8x128xf32, #tpu.memory_space<vmem>>, vector<8x128xf32>
    %435 = vector.shape_cast %429 : vector<8x1xi1> to vector<8x1xi1>
    %436 = vector.broadcast %435 : vector<8x1xi1> to vector<8x128xi1>
    %437 = arith.select %436, %424, %434 : vector<8x128xi1>, vector<8x128xf32>
    %c0_217 = arith.constant 0 : index
    %c0_218 = arith.constant 0 : index
    %438 = vector.load %arg11[%c0_217, %c0_218] : memref<8x128xf32, #tpu.memory_space<vmem>>, vector<8x128xf32>
    tpu.vector_store %arg11[%c0_217, %c0_218], %433 {strides = array<i32>} : memref<8x128xf32, #tpu.memory_space<vmem>>, vector<8x128xf32>,
    %c0_219 = arith.constant 0 : index
    %c0_220 = arith.constant 0 : index
    %439 = vector.load %arg12[%c0_219, %c0_220] : memref<8x128xf32, #tpu.memory_space<vmem>>, vector<8x128xf32>
    tpu.vector_store %arg12[%c0_219, %c0_220], %437 {strides = array<i32>} : memref<8x128xf32, #tpu.memory_space<vmem>>, vector<8x128xf32>,
    %c8_i32 = arith.constant 8 : i32
    %440 = arith.index_cast %c8_i32 : i32 to index
    %c0_221 = arith.constant 0 : index
    %c0_222 = arith.constant 0 : index
    %441 = vector.load %arg13[%440, %c0_221, %c0_222] : memref<9x8x512xf32, #tpu.memory_space<vmem>>, vector<1x8x512xf32>
    %442 = vector.shape_cast %441 : vector<1x8x512xf32> to vector<8x512xf32>
    %c0_223 = arith.constant 0 : index
    %c0_224 = arith.constant 0 : index
    %443 = vector.load %arg11[%c0_223, %c0_224] : memref<8x128xf32, #tpu.memory_space<vmem>>, vector<8x128xf32>
    %444 = arith.truncf %443 : vector<8x128xf32> to vector<8x128xbf16>
    %c0_225 = arith.constant 0 : index
    %c0_226 = arith.constant 0 : index
    %445 = vector.load %arg4[%c0_225, %c0_226] : memref<128x512xbf16, #tpu.memory_space<vmem>>, vector<128x512xbf16>
    %cst_227 = arith.constant dense<0.000000e+00> : vector<8x512xf32>
    %446 = tpu.matmul %444, %445, %cst_227 {dimension_numbers = #tpu.dot_dimension_numbers<[1], [0], [0], [1], [0, 0, 1, 1], [], []>} : vector<8x128xbf16>, vector<128x512xbf16>, vector<8x512xf32> -> vector<8x512xf32>
    %447 = arith.addf %442, %446 : vector<8x512xf32>
    %c0_228 = arith.constant 0 : index
    %c0_229 = arith.constant 0 : index
    %448 = vector.load %arg12[%c0_228, %c0_229] : memref<8x128xf32, #tpu.memory_space<vmem>>, vector<8x128xf32>
    %449 = vector.extract_strided_slice %447 {offsets = [0, 0], sizes = [8, 128], strides = [1, 1]} : vector<8x512xf32> to vector<8x128xf32>
    %cst_230 = arith.constant 5.000000e-01 : f32
    %450 = vector.broadcast %cst_230 : f32 to vector<8x128xf32>
    %451 = arith.mulf %450, %449 : vector<8x128xf32>
    %452 = math.tanh %451 : vector<8x128xf32>
    %cst_231 = arith.constant 1.000000e+00 : f32
    %453 = vector.broadcast %cst_231 : f32 to vector<8x128xf32>
    %454 = arith.addf %452, %453 : vector<8x128xf32>
    %cst_232 = arith.constant 5.000000e-01 : f32
    %455 = vector.broadcast %cst_232 : f32 to vector<8x128xf32>
    %456 = arith.mulf %455, %454 : vector<8x128xf32>
    %457 = vector.extract_strided_slice %447 {offsets = [0, 128], sizes = [8, 128], strides = [1, 1]} : vector<8x512xf32> to vector<8x128xf32>
    %cst_233 = arith.constant 5.000000e-01 : f32
    %458 = vector.broadcast %cst_233 : f32 to vector<8x128xf32>
    %459 = arith.mulf %458, %457 : vector<8x128xf32>
    %460 = math.tanh %459 : vector<8x128xf32>
    %cst_234 = arith.constant 1.000000e+00 : f32
    %461 = vector.broadcast %cst_234 : f32 to vector<8x128xf32>
    %462 = arith.addf %460, %461 : vector<8x128xf32>
    %cst_235 = arith.constant 5.000000e-01 : f32
    %463 = vector.broadcast %cst_235 : f32 to vector<8x128xf32>
    %464 = arith.mulf %463, %462 : vector<8x128xf32>
    %465 = vector.extract_strided_slice %447 {offsets = [0, 256], sizes = [8, 128], strides = [1, 1]} : vector<8x512xf32> to vector<8x128xf32>
    %466 = math.tanh %465 : vector<8x128xf32>
    %467 = vector.extract_strided_slice %447 {offsets = [0, 384], sizes = [8, 128], strides = [1, 1]} : vector<8x512xf32> to vector<8x128xf32>
    %cst_236 = arith.constant 5.000000e-01 : f32
    %468 = vector.broadcast %cst_236 : f32 to vector<8x128xf32>
    %469 = arith.mulf %468, %467 : vector<8x128xf32>
    %470 = math.tanh %469 : vector<8x128xf32>
    %cst_237 = arith.constant 1.000000e+00 : f32
    %471 = vector.broadcast %cst_237 : f32 to vector<8x128xf32>
    %472 = arith.addf %470, %471 : vector<8x128xf32>
    %cst_238 = arith.constant 5.000000e-01 : f32
    %473 = vector.broadcast %cst_238 : f32 to vector<8x128xf32>
    %474 = arith.mulf %473, %472 : vector<8x128xf32>
    %475 = arith.mulf %464, %448 : vector<8x128xf32>
    %476 = arith.mulf %456, %466 : vector<8x128xf32>
    %477 = arith.addf %475, %476 : vector<8x128xf32>
    %478 = math.tanh %477 : vector<8x128xf32>
    %479 = arith.mulf %474, %478 : vector<8x128xf32>
    %480 = arith.addi %14, %c8_i32 : i32
    %481 = vector.broadcast %480 : i32 to vector<8x1xi32>
    %482 = arith.cmpi slt, %481, %15 : vector<8x1xi32>
    %c0_239 = arith.constant 0 : index
    %c0_240 = arith.constant 0 : index
    %483 = vector.load %arg11[%c0_239, %c0_240] : memref<8x128xf32, #tpu.memory_space<vmem>>, vector<8x128xf32>
    %484 = vector.shape_cast %482 : vector<8x1xi1> to vector<8x1xi1>
    %485 = vector.broadcast %484 : vector<8x1xi1> to vector<8x128xi1>
    %486 = arith.select %485, %479, %483 : vector<8x128xi1>, vector<8x128xf32>
    %c0_241 = arith.constant 0 : index
    %c0_242 = arith.constant 0 : index
    %487 = vector.load %arg12[%c0_241, %c0_242] : memref<8x128xf32, #tpu.memory_space<vmem>>, vector<8x128xf32>
    %488 = vector.shape_cast %482 : vector<8x1xi1> to vector<8x1xi1>
    %489 = vector.broadcast %488 : vector<8x1xi1> to vector<8x128xi1>
    %490 = arith.select %489, %477, %487 : vector<8x128xi1>, vector<8x128xf32>
    %c0_243 = arith.constant 0 : index
    %c0_244 = arith.constant 0 : index
    %491 = vector.load %arg11[%c0_243, %c0_244] : memref<8x128xf32, #tpu.memory_space<vmem>>, vector<8x128xf32>
    tpu.vector_store %arg11[%c0_243, %c0_244], %486 {strides = array<i32>} : memref<8x128xf32, #tpu.memory_space<vmem>>, vector<8x128xf32>,
    %c0_245 = arith.constant 0 : index
    %c0_246 = arith.constant 0 : index
    %492 = vector.load %arg12[%c0_245, %c0_246] : memref<8x128xf32, #tpu.memory_space<vmem>>, vector<8x128xf32>
    tpu.vector_store %arg12[%c0_245, %c0_246], %490 {strides = array<i32>} : memref<8x128xf32, #tpu.memory_space<vmem>>, vector<8x128xf32>,
    %c9_i32_247 = arith.constant 9 : i32
    %c0_i32_248 = arith.constant 0 : i32
    %493 = arith.cmpi eq, %arg1, %c0_i32_248 : i32
    %494 = arith.extui %493 : i1 to i32
    %c0_i32_249 = arith.constant 0 : i32
    %495 = arith.cmpi ne, %494, %c0_i32_249 : i32
    scf.if %495 {
      %c0_250 = arith.constant 0 : index
      %c0_251 = arith.constant 0 : index
      %496 = vector.load %arg11[%c0_250, %c0_251] : memref<8x128xf32, #tpu.memory_space<vmem>>, vector<8x128xf32>
      %c0_252 = arith.constant 0 : index
      %c0_253 = arith.constant 0 : index
      %497 = vector.load %arg9[%c0_252, %c0_253] : memref<8x128xf32, #tpu.memory_space<vmem>>, vector<8x128xf32>
      tpu.vector_store %arg9[%c0_252, %c0_253], %496 {strides = array<i32>} : memref<8x128xf32, #tpu.memory_space<vmem>>, vector<8x128xf32>,
      %c0_254 = arith.constant 0 : index
      %c0_255 = arith.constant 0 : index
      %498 = vector.load %arg12[%c0_254, %c0_255] : memref<8x128xf32, #tpu.memory_space<vmem>>, vector<8x128xf32>
      %c0_256 = arith.constant 0 : index
      %c0_257 = arith.constant 0 : index
      %499 = vector.load %arg10[%c0_256, %c0_257] : memref<8x128xf32, #tpu.memory_space<vmem>>, vector<8x128xf32>
      tpu.vector_store %arg10[%c0_256, %c0_257], %498 {strides = array<i32>} : memref<8x128xf32, #tpu.memory_space<vmem>>, vector<8x128xf32>,
    } else {
    }
    return
  }
  func.func @transform_0(%arg0: i32, %arg1: i32) -> (i32, i32, i32) {
    %c0_i32 = arith.constant 0 : i32
    %c0_i32_0 = arith.constant 0 : i32
    return %arg1, %arg0, %c0_i32 : i32, i32, i32
  }
  func.func @transform_1(%arg0: i32, %arg1: i32) -> (i32, i32) {
    %c0_i32 = arith.constant 0 : i32
    %c0_i32_0 = arith.constant 0 : i32
    %c0_i32_1 = arith.constant 0 : i32
    return %c0_i32, %c0_i32_0 : i32, i32
  }
  func.func @transform_2(%arg0: i32, %arg1: i32) -> (i32, i32) {
    %c0_i32 = arith.constant 0 : i32
    %c0_i32_0 = arith.constant 0 : i32
    %c0_i32_1 = arith.constant 0 : i32
    return %c0_i32, %c0_i32_0 : i32, i32
  }
  func.func @transform_3(%arg0: i32, %arg1: i32) -> (i32, i32) {
    %c0_i32 = arith.constant 0 : i32
    %c0_i32_0 = arith.constant 0 : i32
    %c0_i32_1 = arith.constant 0 : i32
    return %c0_i32, %c0_i32_0 : i32, i32
  }
  func.func @transform_4(%arg0: i32, %arg1: i32) -> (i32, i32) {
    %c0_i32 = arith.constant 0 : i32
    %c0_i32_0 = arith.constant 0 : i32
    return %arg0, %c0_i32 : i32, i32
  }
  func.func @transform_5(%arg0: i32, %arg1: i32) -> (i32, i32) {
    %c0_i32 = arith.constant 0 : i32
    %c0_i32_0 = arith.constant 0 : i32
    return %arg0, %c0_i32 : i32, i32
  }
  func.func @transform_6(%arg0: i32, %arg1: i32) -> (i32, i32) {
    %c0_i32 = arith.constant 0 : i32
    %c0_i32_0 = arith.constant 0 : i32
    return %arg0, %c0_i32 : i32, i32
  }
  func.func @transform_7(%arg0: i32, %arg1: i32) -> (i32, i32) {
    %c0_i32 = arith.constant 0 : i32
    %c0_i32_0 = arith.constant 0 : i32
    return %arg0, %c0_i32 : i32, i32
  }
  func.func @transform_8(%arg0: i32, %arg1: i32) -> (i32, i32) {
    %c0_i32 = arith.constant 0 : i32
    %c0_i32_0 = arith.constant 0 : i32
    return %arg0, %c0_i32 : i32, i32
  }
}

</mosaic_0001>

<llo_original>
// kernel: tpu_custom_call.1
$region0: #{tpu_custom_call.1}
  #allocation0 [shape = 'u32[]', space=smem, size = 0x4, offset = 0x4, fixed_abs, tag = 'smem constant byte address 0x4 - core index']
  #allocation1 [shape = 'u32[144,128]{1,0:T(1,128)}', space=vmem, size = 0x12000, scoped, tag = 'internal scratch']
  #allocation2 [shape = 'f32[8,128]{1,0:T(8,128)}', space=vmem, size = 0x1000, scoped, tag = 'scratch operand']
  #allocation3 [shape = 'f32[8,128]{1,0:T(8,128)}', space=vmem, size = 0x1000, scoped, tag = 'scratch operand']
  #allocation4 [shape = 'f32[9,8,512]{2,1,0:T(8,128)}', space=vmem, size = 0x24000, scoped, tag = 'scratch operand']
  %s0 = inlined_call_operand.hbm [shape: bf16[9,24,128], index: 0, kind: input, shape index: {}]
  %s1 = inlined_call_operand.hbm [shape: bf16[128,512], index: 1, kind: input, shape index: {}]
  %s2 = inlined_call_operand.hbm [shape: bf16[128,512], index: 2, kind: input, shape index: {}]
  %s3 = inlined_call_operand.vmem [shape: f32[1,512], index: 3, kind: input, shape index: {}]
  %s4 = inlined_call_operand.vmem [shape: s32[24,1], index: 4, kind: input, shape index: {}]
  %s5 = inlined_call_operand.vmem [shape: f32[24,128], index: 5, kind: input, shape index: {}]
  %s6 = inlined_call_operand.hbm [shape: f32[24,128], index: 6, kind: input, shape index: {}]
  %s7 = inlined_call_operand.hbm [shape: f32[24,128], index: 7, kind: output, shape index: {0}]
  %s8 = inlined_call_operand.hbm [shape: f32[24,128], index: 8, kind: output, shape index: {1}]
  %9 = xla_tuple %s7, %s8
  %s10 = sld [smem:[#allocation0]]
  $region93: #{tpu_custom_call.1} parent=0
    _
  %s12 = ssub.s32 1, %s10
  %s13 = scalar_select 0, %s12, %s10
  $region1: #{tpu_custom_call.1} parent=0
    #allocation5 [shape = 'u8[36864]{0}', space=vmem, size = 0x9000, scoped, tag = 'input window, operand 0']
    #allocation6 [shape = 's32[2]{0}', space=sflag, size = 0x8, scoped, tag = 'scoped memory for tpu_custom_call.1']
    #allocation7 [shape = 's32[2]{0}', space=sflag, size = 0x8, scoped, tag = 'scoped memory for tpu_custom_call.1']
    #allocation8 [shape = 'u8[131072]{0}', space=vmem, size = 0x20000, scoped, tag = 'input window, operand 1, single buffered']
    #allocation9 [shape = 's32[1]{0}', space=sflag, size = 0x4, scoped, tag = 'scoped memory for tpu_custom_call.1']
    #allocation10 [shape = 'u8[131072]{0}', space=vmem, size = 0x20000, scoped, tag = 'input window, operand 2, single buffered']
    #allocation11 [shape = 'u8[8192]{0}', space=vmem, size = 0x2000, scoped, tag = 'input window, operand 6']
    #allocation12 [shape = 's32[2]{0}', space=sflag, size = 0x8, scoped, tag = 'scoped memory for tpu_custom_call.1']
    #allocation13 [shape = 'u8[8192]{0}', space=vmem, size = 0x2000, scoped, tag = 'output window, operand 0']
    #allocation14 [shape = 'u8[8192]{0}', space=vmem, size = 0x2000, scoped, tag = 'output window, operand 1']
    #allocation15 [shape = 's32[2]{0}', space=sflag, size = 0x8, scoped, tag = 'scoped memory for tpu_custom_call.1']
    %14 = vsyncpa [#allocation6], 0
    %s15 = scalar_lea.sflag [#allocation6], 1
    %16 = vsyncpa %s15, 0
    %17 = vsyncpa [#allocation9], 0
    %18 = vsyncpa [#allocation12], 0
    %s19 = scalar_lea.sflag [#allocation12], 1
    %20 = vsyncpa %s19, 0
    %21 = vsyncpa [#allocation7], 0
    %s22 = scalar_lea.sflag [#allocation7], 1
    %23 = vsyncpa %s22, 0
    %24 = vsyncpa [#allocation15], 0
    %s25 = scalar_lea.sflag [#allocation15], 1
    %26 = vsyncpa %s25, 0
    loop: start=0, step=1, limit=5
    $region2: #{tpu_custom_call.1} parent=1 // loop_pre_header
      _
    $region3: #{tpu_custom_call.1} parent=1 // loop_header
      %s28 = sphi 0, %s32
      %p29 = scmp.ge.s32.totalorder %s28, 5
      %s35 = sphi 0, %s47
      %s36 = sphi 0, %s43
      %s37 = sphi 0, %s35
      %s38 = sphi 0, %s36
      %s39 = sphi 0, %s37
      %s40 = sphi 0, %s38
      %s52 = sphi 0, %s54
      %s55 = sphi 0, %s52
      %s56 = sphi 0, %s55
      %s72 = sphi 0, %s56
      %s76 = sphi 0, %s76
      %s78 = sphi 0, %s76
      %s79 = sphi 0, %s78
      %s93 = sphi 0, %s79
      %s97 = sphi 0, %s97
      %s99 = sphi 0, %s97
      %s100 = sphi 0, %s99
      %s114 = sphi 0, %s100
      %s118 = sphi 0, %s118
      %s120 = sphi 0, %s118
      %s121 = sphi 0, %s120
      %s135 = sphi 0, %s121
      %s141 = sphi 0, %s143
      %s144 = sphi 0, %s141
      %s145 = sphi 0, %s144
      %s161 = sphi 0, %s145
      %s167 = sphi 0, %s169
      %s170 = sphi 0, %s167
      %s171 = sphi 0, %s170
      %s187 = sphi 0, %s171
      %s193 = sphi 0, %s195
      %s196 = sphi 0, %s193
      %s197 = sphi 0, %s196
      %s213 = sphi 0, %s197
      %s219 = sphi 0, %s221
      %s222 = sphi 0, %s219
      %s223 = sphi 0, %s222
      %s239 = sphi 0, %s223
      %s245 = sphi 0, %s247
      %s248 = sphi 0, %s245
      %s249 = sphi 0, %s248
      %s265 = sphi 0, %s249
    $region4: #{tpu_custom_call.1} parent=1 // loop_header_branch
      %31 = sbr.rel (%p29) target = $region8
    $region5: #{tpu_custom_call.1} parent=1 // loop_body
      %s33 = ssub.s32 %s28, 1
      %s34 = ssub.s32 %s28, 2
      %s41 = sadd.s32 1, %s36
      %p42 = scmp.ge.s32.totalorder %s41, 1
      %s43 = scalar_select %p42, 0, %s41
      %s44 = sadd.s32 1, %s35
      %s45 = scalar_select %p42, %s44, %s35
      %p46 = scmp.ge.s32.totalorder %s45, 3
      %s47 = scalar_select %p46, 0, %s45
      %s48 = ssub.s32 %s36, %s43
      %s49 = ssub.s32 %s35, %s47
      %s50 = sor.u32 %s48, %s49
      %p51 = scmp.eq.s32.totalorder %s50, 0
      %s53 = sadd.s32 %s52, 1
      %s54 = scalar_select %p51, %s52, %s53
      %p57 = pneg %p51
      %p58 = scmp.eq.s32.totalorder %s28, 2
      %p59 = por %p57, %p58
      %p60 = scmp.ne.s32.totalorder %s52, %s55
      %p61 = scmp.eq.s32.totalorder %s28, 0
      %p62 = por %p60, %p61
      %p63 = scmp.ne.s32.totalorder %s52, %s55
      %p64 = scmp.eq.s32.totalorder %s33, 2
      %p65 = por %p63, %p64
      %p66 = scmp.ne.s32.totalorder %s55, %s56
      %p67 = scmp.eq.s32.totalorder %s33, 0
      %p68 = por %p66, %p67
      %p69 = scmp.ne.s32.totalorder %s55, %s56
      %p70 = scmp.eq.s32.totalorder %s34, 2
      %p71 = por %p69, %p70
      %p73 = scmp.ne.s32.totalorder %s56, %s72
      %p74 = scmp.eq.s32.totalorder %s34, 0
      %p75 = por %p73, %p74
      %s77 = sadd.s32 %s76, 1
      %p80 = scmp.eq.s32.totalorder %s28, 2
      %p81 = scmp.ne.s32.totalorder %s76, %s78
      %p82 = scmp.eq.s32.totalorder %s28, 0
      %p83 = por %p81, %p82
      %p84 = scmp.ne.s32.totalorder %s76, %s78
      %p85 = scmp.eq.s32.totalorder %s33, 2
      %p86 = por %p84, %p85
      %p87 = scmp.ne.s32.totalorder %s78, %s79
      %p88 = scmp.eq.s32.totalorder %s33, 0
      %p89 = por %p87, %p88
      %p90 = scmp.ne.s32.totalorder %s78, %s79
      %p91 = scmp.eq.s32.totalorder %s34, 2
      %p92 = por %p90, %p91
      %p94 = scmp.ne.s32.totalorder %s79, %s93
      %p95 = scmp.eq.s32.totalorder %s34, 0
      %p96 = por %p94, %p95
      %s98 = sadd.s32 %s97, 1
      %p101 = scmp.eq.s32.totalorder %s28, 2
      %p102 = scmp.ne.s32.totalorder %s97, %s99
      %p103 = scmp.eq.s32.totalorder %s28, 0
      %p104 = por %p102, %p103
      %p105 = scmp.ne.s32.totalorder %s97, %s99
      %p106 = scmp.eq.s32.totalorder %s33, 2
      %p107 = por %p105, %p106
      %p108 = scmp.ne.s32.totalorder %s99, %s100
      %p109 = scmp.eq.s32.totalorder %s33, 0
      %p110 = por %p108, %p109
      %p111 = scmp.ne.s32.totalorder %s99, %s100
      %p112 = scmp.eq.s32.totalorder %s34, 2
      %p113 = por %p111, %p112
      %p115 = scmp.ne.s32.totalorder %s100, %s114
      %p116 = scmp.eq.s32.totalorder %s34, 0
      %p117 = por %p115, %p116
      %s119 = sadd.s32 %s118, 1
      %p122 = scmp.eq.s32.totalorder %s28, 2
      %p123 = scmp.ne.s32.totalorder %s118, %s120
      %p124 = scmp.eq.s32.totalorder %s28, 0
      %p125 = por %p123, %p124
      %p126 = scmp.ne.s32.totalorder %s118, %s120
      %p127 = scmp.eq.s32.totalorder %s33, 2
      %p128 = por %p126, %p127
      %p129 = scmp.ne.s32.totalorder %s120, %s121
      %p130 = scmp.eq.s32.totalorder %s33, 0
      %p131 = por %p129, %p130
      %p132 = scmp.ne.s32.totalorder %s120, %s121
      %p133 = scmp.eq.s32.totalorder %s34, 2
      %p134 = por %p132, %p133
      %p136 = scmp.ne.s32.totalorder %s121, %s135
      %p137 = scmp.eq.s32.totalorder %s34, 0
      %p138 = por %p136, %p137
      %s139 = ssub.s32 %s35, %s47
      %p140 = scmp.eq.s32.totalorder %s139, 0
      %s142 = sadd.s32 %s141, 1
      %s143 = scalar_select %p140, %s141, %s142
      %p146 = pneg %p140
      %p147 = scmp.eq.s32.totalorder %s28, 2
      %p148 = por %p146, %p147
      %p149 = scmp.ne.s32.totalorder %s141, %s144
      %p150 = scmp.eq.s32.totalorder %s28, 0
      %p151 = por %p149, %p150
      %p152 = scmp.ne.s32.totalorder %s141, %s144
      %p153 = scmp.eq.s32.totalorder %s33, 2
      %p154 = por %p152, %p153
      %p155 = scmp.ne.s32.totalorder %s144, %s145
      %p156 = scmp.eq.s32.totalorder %s33, 0
      %p157 = por %p155, %p156
      %p158 = scmp.ne.s32.totalorder %s144, %s145
      %p159 = scmp.eq.s32.totalorder %s34, 2
      %p160 = por %p158, %p159
      %p162 = scmp.ne.s32.totalorder %s145, %s161
      %p163 = scmp.eq.s32.totalorder %s34, 0
      %p164 = por %p162, %p163
      %s165 = ssub.s32 %s35, %s47
      %p166 = scmp.eq.s32.totalorder %s165, 0
      %s168 = sadd.s32 %s167, 1
      %s169 = scalar_select %p166, %s167, %s168
      %p172 = pneg %p166
      %p173 = scmp.eq.s32.totalorder %s28, 2
      %p174 = por %p172, %p173
      %p175 = scmp.ne.s32.totalorder %s167, %s170
      %p176 = scmp.eq.s32.totalorder %s28, 0
      %p177 = por %p175, %p176
      %p178 = scmp.ne.s32.totalorder %s167, %s170
      %p179 = scmp.eq.s32.totalorder %s33, 2
      %p180 = por %p178, %p179
      %p181 = scmp.ne.s32.totalorder %s170, %s171
      %p182 = scmp.eq.s32.totalorder %s33, 0
      %p183 = por %p181, %p182
      %p184 = scmp.ne.s32.totalorder %s170, %s171
      %p185 = scmp.eq.s32.totalorder %s34, 2
      %p186 = por %p184, %p185
      %p188 = scmp.ne.s32.totalorder %s171, %s187
      %p189 = scmp.eq.s32.totalorder %s34, 0
      %p190 = por %p188, %p189
      %s191 = ssub.s32 %s35, %s47
      %p192 = scmp.eq.s32.totalorder %s191, 0
      %s194 = sadd.s32 %s193, 1
      %s195 = scalar_select %p192, %s193, %s194
      %p198 = pneg %p192
      %p199 = scmp.eq.s32.totalorder %s28, 2
      %p200 = por %p198, %p199
      %p201 = scmp.ne.s32.totalorder %s193, %s196
      %p202 = scmp.eq.s32.totalorder %s28, 0
      %p203 = por %p201, %p202
      %p204 = scmp.ne.s32.totalorder %s193, %s196
      %p205 = scmp.eq.s32.totalorder %s33, 2
      %p206 = por %p204, %p205
      %p207 = scmp.ne.s32.totalorder %s196, %s197
      %p208 = scmp.eq.s32.totalorder %s33, 0
      %p209 = por %p207, %p208
      %p210 = scmp.ne.s32.totalorder %s196, %s197
      %p211 = scmp.eq.s32.totalorder %s34, 2
      %p212 = por %p210, %p211
      %p214 = scmp.ne.s32.totalorder %s197, %s213
      %p215 = scmp.eq.s32.totalorder %s34, 0
      %p216 = por %p214, %p215
      %s217 = ssub.s32 %s35, %s47
      %p218 = scmp.eq.s32.totalorder %s217, 0
      %s220 = sadd.s32 %s219, 1
      %s221 = scalar_select %p218, %s219, %s220
      %p224 = pneg %p218
      %p225 = scmp.eq.s32.totalorder %s28, 2
      %p226 = por %p224, %p225
      %p227 = scmp.ne.s32.totalorder %s219, %s222
      %p228 = scmp.eq.s32.totalorder %s28, 0
      %p229 = por %p227, %p228
      %p230 = scmp.ne.s32.totalorder %s219, %s222
      %p231 = scmp.eq.s32.totalorder %s33, 2
      %p232 = por %p230, %p231
      %p233 = scmp.ne.s32.totalorder %s222, %s223
      %p234 = scmp.eq.s32.totalorder %s33, 0
      %p235 = por %p233, %p234
      %p236 = scmp.ne.s32.totalorder %s222, %s223
      %p237 = scmp.eq.s32.totalorder %s34, 2
      %p238 = por %p236, %p237
      %p240 = scmp.ne.s32.totalorder %s223, %s239
      %p241 = scmp.eq.s32.totalorder %s34, 0
      %p242 = por %p240, %p241
      %s243 = ssub.s32 %s35, %s47
      %p244 = scmp.eq.s32.totalorder %s243, 0
      %s246 = sadd.s32 %s245, 1
      %s247 = scalar_select %p244, %s245, %s246
      %p250 = pneg %p244
      %p251 = scmp.eq.s32.totalorder %s28, 2
      %p252 = por %p250, %p251
      %p253 = scmp.ne.s32.totalorder %s245, %s248
      %p254 = scmp.eq.s32.totalorder %s28, 0
      %p255 = por %p253, %p254
      %p256 = scmp.ne.s32.totalorder %s245, %s248
      %p257 = scmp.eq.s32.totalorder %s33, 2
      %p258 = por %p256, %p257
      %p259 = scmp.ne.s32.totalorder %s248, %s249
      %p260 = scmp.eq.s32.totalorder %s33, 0
      %p261 = por %p259, %p260
      %p262 = scmp.ne.s32.totalorder %s248, %s249
      %p263 = scmp.eq.s32.totalorder %s34, 2
      %p264 = por %p262, %p263
      %p266 = scmp.ne.s32.totalorder %s249, %s265
      %p267 = scmp.eq.s32.totalorder %s34, 0
      %p268 = por %p266, %p267
      %p269 = scmp.le.s32.totalorder 1, %s28
      %p270 = scmp.lt.s32.totalorder %s28, 4
      %p271 = pnand %p269, %p270
      %p272 = pneg %p271
      // Predicated region
      $region9: #{tpu_custom_call.1} parent=5 // pred_check
        _
      $region10: #{tpu_custom_call.1} parent=5 // pred_check_branch
        %274 = sbr.rel (%p271) target = $region12
      $region11: #{tpu_custom_call.1} parent=5 // pred_region
        %s275 = ssub.s32 %s28, 1
        // Predicated region
        $region13: #{tpu_custom_call.1} parent=11 // pred_check
          %p276 = pneg %p89
        $region14: #{tpu_custom_call.1} parent=11 // pred_check_branch
          %278 = sbr.rel (%p276) target = $region16
        $region15: #{tpu_custom_call.1} parent=11 // pred_region
          %s280 = ssub.s32 4096, 4096
          %281 = vsyncadd [#allocation9], %s280
          %s282 = sshll.u32 [#allocation8], 4
          %s283 = int_to_ptr.vmem [resolvable:$true] %s282
          %288 = dma.hbm_to_vmem [thread:$0]  %s1, 4096, %s283, [#allocation9], 256, 256, 16
        $region16: #{tpu_custom_call.1} parent=11 // pred_fallthru
          _
        // Predicated region
        $region17: #{tpu_custom_call.1} parent=11 // pred_check
          %p289 = pneg %p110
        $region18: #{tpu_custom_call.1} parent=11 // pred_check_branch
          %291 = sbr.rel (%p289) target = $region20
        $region19: #{tpu_custom_call.1} parent=11 // pred_region
          %s293 = ssub.s32 4096, 4096
          %294 = vsyncadd [#allocation9], %s293
          %s295 = sshll.u32 [#allocation10], 4
          %s296 = int_to_ptr.vmem [resolvable:$true] %s295
          %301 = dma.hbm_to_vmem [thread:$0]  %s2, 4096, %s296, [#allocation9], 256, 256, 16
        $region20: #{tpu_custom_call.1} parent=11 // pred_fallthru
          _
        // Predicated region
        $region21: #{tpu_custom_call.1} parent=11 // pred_check
          %p302 = pneg %p131
        $region22: #{tpu_custom_call.1} parent=11 // pred_check_branch
          %304 = sbr.rel (%p302) target = $region24
        $region23: #{tpu_custom_call.1} parent=11 // pred_region
          _
        $region24: #{tpu_custom_call.1} parent=11 // pred_fallthru
          _
      $region12: #{tpu_custom_call.1} parent=5 // pred_fallthru
        _
      %p305 = scmp.lt.s32.totalorder %s28, 3
      // Predicated region
      $region25: #{tpu_custom_call.1} parent=5 // pred_check
        %p306 = pneg %p305
      $region26: #{tpu_custom_call.1} parent=5 // pred_check_branch
        %308 = sbr.rel (%p306) target = $region28
      $region27: #{tpu_custom_call.1} parent=5 // pred_region
        // Predicated region
        $region29: #{tpu_custom_call.1} parent=27 // pred_check
          %p309 = pneg %p62
        $region30: #{tpu_custom_call.1} parent=27 // pred_check_branch
          %311 = sbr.rel (%p309) target = $region32
        $region31: #{tpu_custom_call.1} parent=27 // pred_region
          %s312 = sand.u32 %s52, 1
          %s313 = scalar_lea.sflag [#allocation6], %s312
          %s314 = sand.u32 %s52, 1
          %s315 = smul.addr %s314, 36
          %s316 = scalar_lea.vmem [#allocation5], %s315
          %s317 = smul.u32 9, %s36
          %s319 = ssub.s32 576, 576
          %320 = vsyncadd %s313, %s319
          %s321 = smul.addr %s317, 3
          %s322 = sadd.s32 %s35, %s321
          %s323 = smul.addr %s322, 64
          %s324 = scalar_lea.hbm %s0, %s323
          %s325 = sshll.u32 %s316, 4
          %s326 = int_to_ptr.vmem [resolvable:$true] %s325
          %331 = dma.hbm_to_vmem [thread:$0]  %s324, 576, %s326, %s313, 192, 64, 4
        $region32: #{tpu_custom_call.1} parent=27 // pred_fallthru
          _
        // Predicated region
        $region33: #{tpu_custom_call.1} parent=27 // pred_check
          %p332 = pneg %p151
        $region34: #{tpu_custom_call.1} parent=27 // pred_check_branch
          %334 = sbr.rel (%p332) target = $region36
        $region35: #{tpu_custom_call.1} parent=27 // pred_region
          %p335 = scmp.lt.s32.totalorder %s35, 2
          %s336 = scalar_select %p335, %s35, 2
          %s337 = smul.addr %s336, 8
          %s338 = scalar_lea.vmem %s4, %s337
        $region36: #{tpu_custom_call.1} parent=27 // pred_fallthru
          _
        // Predicated region
        $region37: #{tpu_custom_call.1} parent=27 // pred_check
          %p339 = pneg %p177
        $region38: #{tpu_custom_call.1} parent=27 // pred_check_branch
          %341 = sbr.rel (%p339) target = $region40
        $region39: #{tpu_custom_call.1} parent=27 // pred_region
          %p342 = scmp.lt.s32.totalorder %s35, 2
          %s343 = scalar_select %p342, %s35, 2
          %s344 = smul.addr %s343, 8
          %s345 = scalar_lea.vmem %s5, %s344
        $region40: #{tpu_custom_call.1} parent=27 // pred_fallthru
          _
        // Predicated region
        $region41: #{tpu_custom_call.1} parent=27 // pred_check
          %p346 = pneg %p203
        $region42: #{tpu_custom_call.1} parent=27 // pred_check_branch
          %348 = sbr.rel (%p346) target = $region44
        $region43: #{tpu_custom_call.1} parent=27 // pred_region
          %s349 = sand.u32 %s193, 1
          %s350 = scalar_lea.sflag [#allocation12], %s349
          %s351 = sand.u32 %s193, 1
          %s352 = smul.addr %s351, 8
          %s353 = scalar_lea.vmem [#allocation11], %s352
          %s355 = ssub.s32 128, 128
          %356 = vsyncadd %s350, %s355
          %s357 = smul.addr %s35, 128
          %s358 = scalar_lea.hbm %s6, %s357
          %s360 = sshll.u32 %s353, 4
          %s361 = int_to_ptr.vmem [resolvable:$true] %s360
          %363 = dma.hbm_to_vmem [thread:$0]  %s358, 128, %s361, %s350
        $region44: #{tpu_custom_call.1} parent=27 // pred_fallthru
          _
      $region28: #{tpu_custom_call.1} parent=5 // pred_fallthru
        _
      %p364 = scmp.le.s32.totalorder 1, %s28
      %p365 = scmp.lt.s32.totalorder %s28, 4
      %p366 = pnand %p364, %p365
      %p367 = pneg %p366
      // Predicated region
      $region45: #{tpu_custom_call.1} parent=5 // pred_check
        _
      $region46: #{tpu_custom_call.1} parent=5 // pred_check_branch
        %369 = sbr.rel (%p366) target = $region48
      $region47: #{tpu_custom_call.1} parent=5 // pred_region
        %s370 = ssub.s32 %s28, 1
        %s371 = sand.u32 %s55, 1
        %s372 = scalar_lea.sflag [#allocation6], %s371
        %s373 = sand.u32 %s55, 1
        %s374 = smul.addr %s373, 36
        %s375 = scalar_lea.vmem [#allocation5], %s374
        // Predicated region
        $region49: #{tpu_custom_call.1} parent=47 // pred_check
          %p376 = pneg %p68
        $region50: #{tpu_custom_call.1} parent=47 // pred_check_branch
          %378 = sbr.rel (%p376) target = $region52
        $region51: #{tpu_custom_call.1} parent=47 // pred_region
          %379 = dma.done %s372, 576
        $region52: #{tpu_custom_call.1} parent=47 // pred_fallthru
          _
        // Predicated region
        $region53: #{tpu_custom_call.1} parent=47 // pred_check
          %p380 = pneg %p89
        $region54: #{tpu_custom_call.1} parent=47 // pred_check_branch
          %382 = sbr.rel (%p380) target = $region56
        $region55: #{tpu_custom_call.1} parent=47 // pred_region
          %383 = dma.done [#allocation9], 4096
        $region56: #{tpu_custom_call.1} parent=47 // pred_fallthru
          _
        // Predicated region
        $region57: #{tpu_custom_call.1} parent=47 // pred_check
          %p384 = pneg %p110
        $region58: #{tpu_custom_call.1} parent=47 // pred_check_branch
          %386 = sbr.rel (%p384) target = $region60
        $region59: #{tpu_custom_call.1} parent=47 // pred_region
          %387 = dma.done [#allocation9], 4096
        $region60: #{tpu_custom_call.1} parent=47 // pred_fallthru
          _
        %s388 = sand.u32 %s196, 1
        %s389 = scalar_lea.sflag [#allocation12], %s388
        %s390 = sand.u32 %s196, 1
        %s391 = smul.addr %s390, 8
        %s392 = scalar_lea.vmem [#allocation11], %s391
        // Predicated region
        $region61: #{tpu_custom_call.1} parent=47 // pred_check
          %p393 = pneg %p209
        $region62: #{tpu_custom_call.1} parent=47 // pred_check_branch
          %395 = sbr.rel (%p393) target = $region64
        $region63: #{tpu_custom_call.1} parent=47 // pred_region
          %396 = dma.done %s389, 128
        $region64: #{tpu_custom_call.1} parent=47 // pred_fallthru
          _
        %s397 = sand.u32 %s55, 1
        %s398 = scalar_lea.sflag [#allocation6], %s397
        %s399 = sand.u32 %s55, 1
        %s400 = smul.addr %s399, 36
        %s401 = scalar_lea.vmem [#allocation5], %s400
        %p402 = pneg %p68
        %p403 = pneg %p65
        %p404 = pneg %p89
        %p405 = pneg %p86
        %p406 = pneg %p110
        %p407 = pneg %p107
        %p408 = pneg %p131
        %p409 = pneg %p128
        %p410 = scmp.lt.s32.totalorder %s37, 2
        %s411 = scalar_select %p410, %s37, 2
        %s412 = smul.addr %s411, 8
        %s413 = scalar_lea.vmem %s4, %s412
        %p414 = pneg %p157
        %p415 = pneg %p154
        %p416 = scmp.lt.s32.totalorder %s37, 2
        %s417 = scalar_select %p416, %s37, 2
        %s418 = smul.addr %s417, 8
        %s419 = scalar_lea.vmem %s5, %s418
        %p420 = pneg %p183
        %p421 = pneg %p180
        %s422 = sand.u32 %s196, 1
        %s423 = scalar_lea.sflag [#allocation12], %s422
        %s424 = sand.u32 %s196, 1
        %s425 = smul.addr %s424, 8
        %s426 = scalar_lea.vmem [#allocation11], %s425
        %p427 = pneg %p209
        %p428 = pneg %p206
        %p429 = pneg %p235
        %p430 = pneg %p232
        %s431 = sand.u32 %s222, 1
        %s432 = scalar_lea.sflag [#allocation7], %s431
        %s433 = sand.u32 %s222, 1
        %s434 = smul.addr %s433, 8
        %s435 = scalar_lea.vmem [#allocation13], %s434
        %p436 = pneg %p261
        %p437 = pneg %p258
        %s438 = sand.u32 %s248, 1
        %s439 = scalar_lea.sflag [#allocation15], %s438
        %s440 = sand.u32 %s248, 1
        %s441 = smul.addr %s440, 8
        %s442 = scalar_lea.vmem [#allocation14], %s441
        %s443 = smul.u32 9, %s38
        %p444 = scmp.lt.s32.totalorder %s37, 2
        %s445 = scalar_select %p444, %s37, 2
        %s446 = smul.addr %s445, 8
        %s447 = scalar_lea.vmem %s4, %s446
        %p448 = scmp.lt.s32.totalorder %s37, 2
        %s449 = scalar_select %p448, %s37, 2
        %s450 = smul.addr %s449, 8
        %s451 = scalar_lea.vmem %s5, %s450
        %p453 = scmp.eq.s32.totalorder %s38, 0
        // Predicated region
        $region65: #{tpu_custom_call.1} parent=47 // pred_check
          %p454 = pneg %p453
        $region66: #{tpu_custom_call.1} parent=47 // pred_check_branch
          %456 = sbr.rel (%p454) target = $region68
        $region67: #{tpu_custom_call.1} parent=47 // pred_region
          %v457 = vld [vmem:[%s451] sm:$0xff]
          %458 = vst [vmem:[#allocation2] sm:$0xff] %v457
          %v459 = vld [vmem:[%s392] sm:$0xff]
          %460 = vst [vmem:[#allocation3] sm:$0xff] %v459
        $region68: #{tpu_custom_call.1} parent=47 // pred_fallthru
          _
        %v461 = vld [vmem:[%s375] sm:$0xf]
        %v462 = vld [vmem:[%s375 + $0x4] sm:$0xf]
        %v463 = vld [vmem:[%s375 + $0x8] sm:$0xf]
        %v464 = vld [vmem:[%s375 + $0xc] sm:$0xf]
        %v465 = vld [vmem:[%s375 + $0x10] sm:$0xf]
        %v466 = vld [vmem:[%s375 + $0x14] sm:$0xf]
        %v467 = vld [vmem:[%s375 + $0x18] sm:$0xf]
        %v468 = vld [vmem:[%s375 + $0x1c] sm:$0xf]
        %v469 = vld [vmem:[%s375 + $0x20] sm:$0xf]
        %v470 = vunpack.c.l.bf16 %v461
        %v471 = vunpack.c.l.bf16 %v462
        %v472 = vunpack.c.l.bf16 %v463
        %v473 = vunpack.c.l.bf16 %v464
        %v474 = vunpack.c.l.bf16 %v465
        %v475 = vunpack.c.l.bf16 %v466
        %v476 = vunpack.c.l.bf16 %v467
        %v477 = vunpack.c.l.bf16 %v468
        %v478 = vunpack.c.l.bf16 %v469
        %v479 = vpack.c.bf16 %v471, %v470
        %v480 = vpack.c.bf16 %v473, %v472
        %v481 = vpack.c.bf16 %v475, %v474
        %v482 = vpack.c.bf16 %v477, %v476
        %v483 = vpack.c.bf16 %v478, %v478
        %v484 = vld [vmem:[#allocation8] sm:$0xff]
        %v485 = vld [vmem:[#allocation8 + $0x8] sm:$0xff]
        %v486 = vld [vmem:[#allocation8 + $0x10] sm:$0xff]
        %v487 = vld [vmem:[#allocation8 + $0x18] sm:$0xff]
        %v488 = vld [vmem:[#allocation8 + $0x20] sm:$0xff]
        %v489 = vld [vmem:[#allocation8 + $0x28] sm:$0xff]
        %v490 = vld [vmem:[#allocation8 + $0x30] sm:$0xff]
        %v491 = vld [vmem:[#allocation8 + $0x38] sm:$0xff]
        %v492 = vld [vmem:[#allocation8 + $0x40] sm:$0xff]
        %v493 = vld [vmem:[#allocation8 + $0x48] sm:$0xff]
        %v494 = vld [vmem:[#allocation8 + $0x50] sm:$0xff]
        %v495 = vld [vmem:[#allocation8 + $0x58] sm:$0xff]
        %v496 = vld [vmem:[#allocation8 + $0x60] sm:$0xff]
        %v497 = vld [vmem:[#allocation8 + $0x68] sm:$0xff]
        %v498 = vld [vmem:[#allocation8 + $0x70] sm:$0xff]
        %v499 = vld [vmem:[#allocation8 + $0x78] sm:$0xff]
        %v500 = vld [vmem:[#allocation8 + $0x80] sm:$0xff]
        %v501 = vld [vmem:[#allocation8 + $0x88] sm:$0xff]
        %v502 = vld [vmem:[#allocation8 + $0x90] sm:$0xff]
        %v503 = vld [vmem:[#allocation8 + $0x98] sm:$0xff]
        %v504 = vld [vmem:[#allocation8 + $0xa0] sm:$0xff]
        %v505 = vld [vmem:[#allocation8 + $0xa8] sm:$0xff]
        %v506 = vld [vmem:[#allocation8 + $0xb0] sm:$0xff]
        %v507 = vld [vmem:[#allocation8 + $0xb8] sm:$0xff]
        %v508 = vld [vmem:[#allocation8 + $0xc0] sm:$0xff]
        %v509 = vld [vmem:[#allocation8 + $0xc8] sm:$0xff]
        %v510 = vld [vmem:[#allocation8 + $0xd0] sm:$0xff]
        %v511 = vld [vmem:[#allocation8 + $0xd8] sm:$0xff]
        %v512 = vld [vmem:[#allocation8 + $0xe0] sm:$0xff]
        %v513 = vld [vmem:[#allocation8 + $0xe8] sm:$0xff]
        %v514 = vld [vmem:[#allocation8 + $0xf0] sm:$0xff]
        %v515 = vld [vmem:[#allocation8 + $0xf8] sm:$0xff]
        %v516 = vld [vmem:[%s3] sm:$0xf]
        %v518 = vlaneseq
        %v519 = vshrl.u32 %v518, 7
        %v520 = vsub.s32 0, %v519
        %v521 = vrot.slane %v516, %v520
        %v522 = vlaneseq
        %v523 = vshrl.u32 %v522, 7
        %v524 = vsub.s32 1, %v523
        %v525 = vrot.slane %v516, %v524
        %v526 = vlaneseq
        %v527 = vshrl.u32 %v526, 7
        %v528 = vsub.s32 2, %v527
        %v529 = vrot.slane %v516, %v528
        %v530 = vlaneseq
        %v531 = vshrl.u32 %v530, 7
        %v532 = vsub.s32 3, %v531
        %v533 = vrot.slane %v516, %v532
        %v570 = vunpack.c.l.b16 %v484
        %v571 = vunpack.c.h.b16 %v484
        %v572 = vunpack.c.l.b16 %v485
        %v573 = vunpack.c.h.b16 %v485
        %v574 = vunpack.c.l.b16 %v486
        %v575 = vunpack.c.h.b16 %v486
        %v576 = vunpack.c.l.b16 %v487
        %v577 = vunpack.c.h.b16 %v487
        %v578 = vunpack.c.l.b16 %v488
        %v579 = vunpack.c.h.b16 %v488
        %v580 = vunpack.c.l.b16 %v489
        %v581 = vunpack.c.h.b16 %v489
        %v582 = vunpack.c.l.b16 %v490
        %v583 = vunpack.c.h.b16 %v490
        %v584 = vunpack.c.l.b16 %v491
        %v585 = vunpack.c.h.b16 %v491
        %v586 = vunpack.c.l.b16 %v492
        %v587 = vunpack.c.h.b16 %v492
        %v588 = vunpack.c.l.b16 %v493
        %v589 = vunpack.c.h.b16 %v493
        %v590 = vunpack.c.l.b16 %v494
        %v591 = vunpack.c.h.b16 %v494
        %v592 = vunpack.c.l.b16 %v495
        %v593 = vunpack.c.h.b16 %v495
        %v594 = vunpack.c.l.b16 %v496
        %v595 = vunpack.c.h.b16 %v496
        %v596 = vunpack.c.l.b16 %v497
        %v597 = vunpack.c.h.b16 %v497
        %v598 = vunpack.c.l.b16 %v498
        %v599 = vunpack.c.h.b16 %v498
        %v600 = vunpack.c.l.b16 %v499
        %v601 = vunpack.c.h.b16 %v499
        %v602 = vunpack.c.l.b16 %v500
        %v603 = vunpack.c.h.b16 %v500
        %v604 = vunpack.c.l.b16 %v501
        %v605 = vunpack.c.h.b16 %v501
        %v606 = vunpack.c.l.b16 %v502
        %v607 = vunpack.c.h.b16 %v502
        %v608 = vunpack.c.l.b16 %v503
        %v609 = vunpack.c.h.b16 %v503
        %v610 = vunpack.c.l.b16 %v504
        %v611 = vunpack.c.h.b16 %v504
        %v612 = vunpack.c.l.b16 %v505
        %v613 = vunpack.c.h.b16 %v505
        %v614 = vunpack.c.l.b16 %v506
        %v615 = vunpack.c.h.b16 %v506
        %v616 = vunpack.c.l.b16 %v507
        %v617 = vunpack.c.h.b16 %v507
        %v618 = vunpack.c.l.b16 %v508
        %v619 = vunpack.c.h.b16 %v508
        %v620 = vunpack.c.l.b16 %v509
        %v621 = vunpack.c.h.b16 %v509
        %v622 = vunpack.c.l.b16 %v510
        %v623 = vunpack.c.h.b16 %v510
        %v624 = vunpack.c.l.b16 %v511
        %v625 = vunpack.c.h.b16 %v511
        %v626 = vunpack.c.l.b16 %v512
        %v627 = vunpack.c.h.b16 %v512
        %v628 = vunpack.c.l.b16 %v513
        %v629 = vunpack.c.h.b16 %v513
        %v630 = vunpack.c.l.b16 %v514
        %v631 = vunpack.c.h.b16 %v514
        %v632 = vunpack.c.l.b16 %v515
        %v633 = vunpack.c.h.b16 %v515
        %v634 = vpack.c.b16 %v574, %v570
        %v635 = vpack.c.b16 %v575, %v571
        %v636 = vpack.c.b16 %v576, %v572
        %v637 = vpack.c.b16 %v577, %v573
        %v638 = vpack.c.b16 %v582, %v578
        %v639 = vpack.c.b16 %v583, %v579
        %v640 = vpack.c.b16 %v584, %v580
        %v641 = vpack.c.b16 %v585, %v581
        %v642 = vpack.c.b16 %v590, %v586
        %v643 = vpack.c.b16 %v591, %v587
        %v644 = vpack.c.b16 %v592, %v588
        %v645 = vpack.c.b16 %v593, %v589
        %v646 = vpack.c.b16 %v598, %v594
        %v647 = vpack.c.b16 %v599, %v595
        %v648 = vpack.c.b16 %v600, %v596
        %v649 = vpack.c.b16 %v601, %v597
        %v650 = vpack.c.b16 %v606, %v602
        %v651 = vpack.c.b16 %v607, %v603
        %v652 = vpack.c.b16 %v608, %v604
        %v653 = vpack.c.b16 %v609, %v605
        %v654 = vpack.c.b16 %v614, %v610
        %v655 = vpack.c.b16 %v615, %v611
        %v656 = vpack.c.b16 %v616, %v612
        %v657 = vpack.c.b16 %v617, %v613
        %v658 = vpack.c.b16 %v622, %v618
        %v659 = vpack.c.b16 %v623, %v619
        %v660 = vpack.c.b16 %v624, %v620
        %v661 = vpack.c.b16 %v625, %v621
        %v662 = vpack.c.b16 %v630, %v626
        %v663 = vpack.c.b16 %v631, %v627
        %v664 = vpack.c.b16 %v632, %v628
        %v665 = vpack.c.b16 %v633, %v629
        %698 = vmatprep.subr.bf16.mxu0 %v635
        %699 = vmatpush1.bf16.msra.mxu0 %v634
        %700 = vmatprep.subr.bf16.mxu0 %v639
        %701 = vmatpush1.bf16.msra.mxu0 %v638
        %702 = vmatprep.subr.bf16.mxu0 %v643
        %703 = vmatpush1.bf16.msra.mxu0 %v642
        %704 = vmatprep.subr.bf16.mxu0 %v647
        %705 = vmatpush1.bf16.msra.mxu0 %v646
        %706 = vmatprep.subr.bf16.mxu0 %v651
        %707 = vmatpush1.bf16.msra.mxu0 %v650
        %708 = vmatprep.subr.bf16.mxu0 %v655
        %709 = vmatpush1.bf16.msra.mxu0 %v654
        %710 = vmatprep.subr.bf16.mxu0 %v659
        %711 = vmatpush1.bf16.msra.mxu0 %v658
        %712 = vmatprep.subr.bf16.mxu0 %v663
        %713 = vmatpush1.bf16.msra.mxu0 %v662
        %714 = vmatprep.subr.bf16.mxu0 0
        %715 = vmatpush1.bf16.msra.mxu0 0
        %716 = vmatprep.subr.bf16.mxu0 0
        %717 = vmatpush1.bf16.msra.mxu0 0
        %718 = vmatprep.subr.bf16.mxu0 0
        %719 = vmatpush1.bf16.msra.mxu0 0
        %720 = vmatprep.subr.bf16.mxu0 0
        %721 = vmatpush1.bf16.msra.mxu0 0
        %722 = vmatprep.subr.bf16.mxu0 0
        %723 = vmatpush1.bf16.msra.mxu0 0
        %724 = vmatprep.subr.bf16.mxu0 0
        %725 = vmatpush1.bf16.msra.mxu0 0
        %726 = vmatprep.subr.bf16.mxu0 0
        %727 = vmatpush1.bf16.msra.mxu0 0
        %728 = vmatprep.subr.bf16.mxu0 0
        %729 = vmatpush1.bf16.msra.mxu0 0
        %730 = vmatprep.mubr.bf16.mxu0 0
        %731 = vmatmul.mubr.bf16.gmra.mrb[0].mxu0 %v479
        %v732 = vpop.f32.mrb[0].mxu0
        %v733 = vadd.f32 %v521, %v732
        %v734 = vpop.f32.mrb[0].mxu0
        %v735 = vadd.f32 %v525, %v734
        %v736 = vpop.f32.mrb[0].mxu0
        %v737 = vadd.f32 %v521, %v736
        %v738 = vpop.f32.mrb[0].mxu0
        %v739 = vadd.f32 %v525, %v738
        %740 = vmatprep.mubr.bf16.mxu0 0
        %741 = vmatmul.mubr.bf16.gmra.mrb[0].mxu0 %v480
        %v742 = vpop.f32.mrb[0].mxu0
        %v743 = vadd.f32 %v521, %v742
        %v744 = vpop.f32.mrb[0].mxu0
        %v745 = vadd.f32 %v525, %v744
        %v746 = vpop.f32.mrb[0].mxu0
        %v747 = vadd.f32 %v521, %v746
        %v748 = vpop.f32.mrb[0].mxu0
        %v749 = vadd.f32 %v525, %v748
        %750 = vmatprep.mubr.bf16.mxu0 0
        %751 = vmatmul.mubr.bf16.gmra.mrb[0].mxu0 %v481
        %v752 = vpop.f32.mrb[0].mxu0
        %v753 = vadd.f32 %v521, %v752
        %v754 = vpop.f32.mrb[0].mxu0
        %v755 = vadd.f32 %v525, %v754
        %v756 = vpop.f32.mrb[0].mxu0
        %v757 = vadd.f32 %v521, %v756
        %v758 = vpop.f32.mrb[0].mxu0
        %v759 = vadd.f32 %v525, %v758
        %760 = vmatprep.mubr.bf16.mxu0 0
        %761 = vmatmul.mubr.bf16.gmra.mrb[0].mxu0 %v482
        %v762 = vpop.f32.mrb[0].mxu0
        %v763 = vadd.f32 %v521, %v762
        %v764 = vpop.f32.mrb[0].mxu0
        %v765 = vadd.f32 %v525, %v764
        %v766 = vpop.f32.mrb[0].mxu0
        %v767 = vadd.f32 %v521, %v766
        %v768 = vpop.f32.mrb[0].mxu0
        %v769 = vadd.f32 %v525, %v768
        %770 = vmatprep.mubr.bf16.mxu0 0
        %771 = vmatmul.mubr.bf16.gmra.mrb[0].mxu0 %v483
        %v772 = vpop.f32.mrb[0].mxu0
        %v773 = vadd.f32 %v521, %v772
        %v774 = vpop.f32.mrb[0].mxu0
        %v775 = vadd.f32 %v525, %v774
        %v776 = vpop.f32.mrb[0].mxu0
        %v777 = vpop.f32.mrb[0].mxu0
        %778 = vdwg.mxu0
        %779 = vmatprep.subr.bf16.mxu0 %v637
        %780 = vmatpush1.bf16.msra.mxu0 %v636
        %781 = vmatprep.subr.bf16.mxu0 %v641
        %782 = vmatpush1.bf16.msra.mxu0 %v640
        %783 = vmatprep.subr.bf16.mxu0 %v645
        %784 = vmatpush1.bf16.msra.mxu0 %v644
        %785 = vmatprep.subr.bf16.mxu0 %v649
        %786 = vmatpush1.bf16.msra.mxu0 %v648
        %787 = vmatprep.subr.bf16.mxu0 %v653
        %788 = vmatpush1.bf16.msra.mxu0 %v652
        %789 = vmatprep.subr.bf16.mxu0 %v657
        %790 = vmatpush1.bf16.msra.mxu0 %v656
        %791 = vmatprep.subr.bf16.mxu0 %v661
        %792 = vmatpush1.bf16.msra.mxu0 %v660
        %793 = vmatprep.subr.bf16.mxu0 %v665
        %794 = vmatpush1.bf16.msra.mxu0 %v664
        %795 = vmatprep.subr.bf16.mxu0 0
        %796 = vmatpush1.bf16.msra.mxu0 0
        %797 = vmatprep.subr.bf16.mxu0 0
        %798 = vmatpush1.bf16.msra.mxu0 0
        %799 = vmatprep.subr.bf16.mxu0 0
        %800 = vmatpush1.bf16.msra.mxu0 0
        %801 = vmatprep.subr.bf16.mxu0 0
        %802 = vmatpush1.bf16.msra.mxu0 0
        %803 = vmatprep.subr.bf16.mxu0 0
        %804 = vmatpush1.bf16.msra.mxu0 0
        %805 = vmatprep.subr.bf16.mxu0 0
        %806 = vmatpush1.bf16.msra.mxu0 0
        %807 = vmatprep.subr.bf16.mxu0 0
        %808 = vmatpush1.bf16.msra.mxu0 0
        %809 = vmatprep.subr.bf16.mxu0 0
        %810 = vmatpush1.bf16.msra.mxu0 0
        %811 = vmatprep.mubr.bf16.mxu0 0
        %812 = vmatmul.mubr.bf16.gmra.mrb[0].mxu0 %v479
        %v813 = vpop.f32.mrb[0].mxu0
        %v814 = vadd.f32 %v529, %v813
        %v815 = vpop.f32.mrb[0].mxu0
        %v816 = vadd.f32 %v533, %v815
        %v817 = vpop.f32.mrb[0].mxu0
        %v818 = vadd.f32 %v529, %v817
        %v819 = vpop.f32.mrb[0].mxu0
        %v820 = vadd.f32 %v533, %v819
        %821 = vmatprep.mubr.bf16.mxu0 0
        %822 = vmatmul.mubr.bf16.gmra.mrb[0].mxu0 %v480
        %v823 = vpop.f32.mrb[0].mxu0
        %v824 = vadd.f32 %v529, %v823
        %v825 = vpop.f32.mrb[0].mxu0
        %v826 = vadd.f32 %v533, %v825
        %v827 = vpop.f32.mrb[0].mxu0
        %v828 = vadd.f32 %v529, %v827
        %v829 = vpop.f32.mrb[0].mxu0
        %v830 = vadd.f32 %v533, %v829
        %831 = vmatprep.mubr.bf16.mxu0 0
        %832 = vmatmul.mubr.bf16.gmra.mrb[0].mxu0 %v481
        %v833 = vpop.f32.mrb[0].mxu0
        %v834 = vadd.f32 %v529, %v833
        %v835 = vpop.f32.mrb[0].mxu0
        %v836 = vadd.f32 %v533, %v835
        %v837 = vpop.f32.mrb[0].mxu0
        %v838 = vadd.f32 %v529, %v837
        %v839 = vpop.f32.mrb[0].mxu0
        %v840 = vadd.f32 %v533, %v839
        %841 = vmatprep.mubr.bf16.mxu0 0
        %842 = vmatmul.mubr.bf16.gmra.mrb[0].mxu0 %v482
        %v843 = vpop.f32.mrb[0].mxu0
        %v844 = vadd.f32 %v529, %v843
        %v845 = vpop.f32.mrb[0].mxu0
        %v846 = vadd.f32 %v533, %v845
        %v847 = vpop.f32.mrb[0].mxu0
        %v848 = vadd.f32 %v529, %v847
        %v849 = vpop.f32.mrb[0].mxu0
        %v850 = vadd.f32 %v533, %v849
        %851 = vmatprep.mubr.bf16.mxu0 0
        %852 = vmatmul.mubr.bf16.gmra.mrb[0].mxu0 %v483
        %v853 = vpop.f32.mrb[0].mxu0
        %v854 = vadd.f32 %v529, %v853
        %v855 = vpop.f32.mrb[0].mxu0
        %v856 = vadd.f32 %v533, %v855
        %v857 = vpop.f32.mrb[0].mxu0
        %v858 = vpop.f32.mrb[0].mxu0
        %859 = vdwg.mxu0
        %860 = vst [vmem:[#allocation4] sm:$0xff] %v733
        %861 = vst [vmem:[#allocation4 + $0x8] sm:$0xff] %v735
        %862 = vst [vmem:[#allocation4 + $0x10] sm:$0xff] %v814
        %863 = vst [vmem:[#allocation4 + $0x18] sm:$0xff] %v816
        %864 = vst [vmem:[#allocation4 + $0x20] sm:$0xff] %v737
        %865 = vst [vmem:[#allocation4 + $0x28] sm:$0xff] %v739
        %866 = vst [vmem:[#allocation4 + $0x30] sm:$0xff] %v818
        %867 = vst [vmem:[#allocation4 + $0x38] sm:$0xff] %v820
        %868 = vst [vmem:[#allocation4 + $0x40] sm:$0xff] %v743
        %869 = vst [vmem:[#allocation4 + $0x48] sm:$0xff] %v745
        %870 = vst [vmem:[#allocation4 + $0x50] sm:$0xff] %v824
        %871 = vst [vmem:[#allocation4 + $0x58] sm:$0xff] %v826
        %872 = vst [vmem:[#allocation4 + $0x60] sm:$0xff] %v747
        %873 = vst [vmem:[#allocation4 + $0x68] sm:$0xff] %v749
        %874 = vst [vmem:[#allocation4 + $0x70] sm:$0xff] %v828
        %875 = vst [vmem:[#allocation4 + $0x78] sm:$0xff] %v830
        %876 = vst [vmem:[#allocation4 + $0x80] sm:$0xff] %v753
        %877 = vst [vmem:[#allocation4 + $0x88] sm:$0xff] %v755
        %878 = vst [vmem:[#allocation4 + $0x90] sm:$0xff] %v834
        %879 = vst [vmem:[#allocation4 + $0x98] sm:$0xff] %v836
        %880 = vst [vmem:[#allocation4 + $0xa0] sm:$0xff] %v757
        %881 = vst [vmem:[#allocation4 + $0xa8] sm:$0xff] %v759
        %882 = vst [vmem:[#allocation4 + $0xb0] sm:$0xff] %v838
        %883 = vst [vmem:[#allocation4 + $0xb8] sm:$0xff] %v840
        %884 = vst [vmem:[#allocation4 + $0xc0] sm:$0xff] %v763
        %885 = vst [vmem:[#allocation4 + $0xc8] sm:$0xff] %v765
        %886 = vst [vmem:[#allocation4 + $0xd0] sm:$0xff] %v844
        %887 = vst [vmem:[#allocation4 + $0xd8] sm:$0xff] %v846
        %888 = vst [vmem:[#allocation4 + $0xe0] sm:$0xff] %v767
        %889 = vst [vmem:[#allocation4 + $0xe8] sm:$0xff] %v769
        %890 = vst [vmem:[#allocation4 + $0xf0] sm:$0xff] %v848
        %891 = vst [vmem:[#allocation4 + $0xf8] sm:$0xff] %v850
        %892 = vst [vmem:[#allocation4 + $0x100] sm:$0xff] %v773
        %893 = vst [vmem:[#allocation4 + $0x108] sm:$0xff] %v775
        %894 = vst [vmem:[#allocation4 + $0x110] sm:$0xff] %v854
        %895 = vst [vmem:[#allocation4 + $0x118] sm:$0xff] %v856
        %s896 = smul.u32 %s38, 9
        %v897 = vld [vmem:[%s447] sm:$0xff]
        %v898 = vld [vmem:[#allocation4] sm:$0xff]
        %v899 = vld [vmem:[#allocation4 + $0x8] sm:$0xff]
        %v900 = vld [vmem:[#allocation4 + $0x10] sm:$0xff]
        %v901 = vld [vmem:[#allocation4 + $0x18] sm:$0xff]
        %v902 = vld [vmem:[#allocation2] sm:$0xff]
        %v903 = vpack.c.bf16 %v902, %v902
        %v904 = vld [vmem:[#allocation10] sm:$0xff]
        %v905 = vld [vmem:[#allocation10 + $0x8] sm:$0xff]
        %v906 = vld [vmem:[#allocation10 + $0x10] sm:$0xff]
        %v907 = vld [vmem:[#allocation10 + $0x18] sm:$0xff]
        %v908 = vld [vmem:[#allocation10 + $0x20] sm:$0xff]
        %v909 = vld [vmem:[#allocation10 + $0x28] sm:$0xff]
        %v910 = vld [vmem:[#allocation10 + $0x30] sm:$0xff]
        %v911 = vld [vmem:[#allocation10 + $0x38] sm:$0xff]
        %v912 = vld [vmem:[#allocation10 + $0x40] sm:$0xff]
        %v913 = vld [vmem:[#allocation10 + $0x48] sm:$0xff]
        %v914 = vld [vmem:[#allocation10 + $0x50] sm:$0xff]
        %v915 = vld [vmem:[#allocation10 + $0x58] sm:$0xff]
        %v916 = vld [vmem:[#allocation10 + $0x60] sm:$0xff]
        %v917 = vld [vmem:[#allocation10 + $0x68] sm:$0xff]
        %v918 = vld [vmem:[#allocation10 + $0x70] sm:$0xff]
        %v919 = vld [vmem:[#allocation10 + $0x78] sm:$0xff]
        %v920 = vld [vmem:[#allocation10 + $0x80] sm:$0xff]
        %v921 = vld [vmem:[#allocation10 + $0x88] sm:$0xff]
        %v922 = vld [vmem:[#allocation10 + $0x90] sm:$0xff]
        %v923 = vld [vmem:[#allocation10 + $0x98] sm:$0xff]
        %v924 = vld [vmem:[#allocation10 + $0xa0] sm:$0xff]
        %v925 = vld [vmem:[#allocation10 + $0xa8] sm:$0xff]
        %v926 = vld [vmem:[#allocation10 + $0xb0] sm:$0xff]
        %v927 = vld [vmem:[#allocation10 + $0xb8] sm:$0xff]
        %v928 = vld [vmem:[#allocation10 + $0xc0] sm:$0xff]
        %v929 = vld [vmem:[#allocation10 + $0xc8] sm:$0xff]
        %v930 = vld [vmem:[#allocation10 + $0xd0] sm:$0xff]
        %v931 = vld [vmem:[#allocation10 + $0xd8] sm:$0xff]
        %v932 = vld [vmem:[#allocation10 + $0xe0] sm:$0xff]
        %v933 = vld [vmem:[#allocation10 + $0xe8] sm:$0xff]
        %v934 = vld [vmem:[#allocation10 + $0xf0] sm:$0xff]
        %v935 = vld [vmem:[#allocation10 + $0xf8] sm:$0xff]
        %v968 = vunpack.c.l.b16 %v904
        %v969 = vunpack.c.h.b16 %v904
        %v970 = vunpack.c.l.b16 %v905
        %v971 = vunpack.c.h.b16 %v905
        %v972 = vunpack.c.l.b16 %v906
        %v973 = vunpack.c.h.b16 %v906
        %v974 = vunpack.c.l.b16 %v907
        %v975 = vunpack.c.h.b16 %v907
        %v976 = vunpack.c.l.b16 %v908
        %v977 = vunpack.c.h.b16 %v908
        %v978 = vunpack.c.l.b16 %v909
        %v979 = vunpack.c.h.b16 %v909
        %v980 = vunpack.c.l.b16 %v910
        %v981 = vunpack.c.h.b16 %v910
        %v982 = vunpack.c.l.b16 %v911
        %v983 = vunpack.c.h.b16 %v911
        %v984 = vunpack.c.l.b16 %v912
        %v985 = vunpack.c.h.b16 %v912
        %v986 = vunpack.c.l.b16 %v913
        %v987 = vunpack.c.h.b16 %v913
        %v988 = vunpack.c.l.b16 %v914
        %v989 = vunpack.c.h.b16 %v914
        %v990 = vunpack.c.l.b16 %v915
        %v991 = vunpack.c.h.b16 %v915
        %v992 = vunpack.c.l.b16 %v916
        %v993 = vunpack.c.h.b16 %v916
        %v994 = vunpack.c.l.b16 %v917
        %v995 = vunpack.c.h.b16 %v917
        %v996 = vunpack.c.l.b16 %v918
        %v997 = vunpack.c.h.b16 %v918
        %v998 = vunpack.c.l.b16 %v919
        %v999 = vunpack.c.h.b16 %v919
        %v1000 = vunpack.c.l.b16 %v920
        %v1001 = vunpack.c.h.b16 %v920
        %v1002 = vunpack.c.l.b16 %v921
        %v1003 = vunpack.c.h.b16 %v921
        %v1004 = vunpack.c.l.b16 %v922
        %v1005 = vunpack.c.h.b16 %v922
        %v1006 = vunpack.c.l.b16 %v923
        %v1007 = vunpack.c.h.b16 %v923
        %v1008 = vunpack.c.l.b16 %v924
        %v1009 = vunpack.c.h.b16 %v924
        %v1010 = vunpack.c.l.b16 %v925
        %v1011 = vunpack.c.h.b16 %v925
        %v1012 = vunpack.c.l.b16 %v926
        %v1013 = vunpack.c.h.b16 %v926
        %v1014 = vunpack.c.l.b16 %v927
        %v1015 = vunpack.c.h.b16 %v927
        %v1016 = vunpack.c.l.b16 %v928
        %v1017 = vunpack.c.h.b16 %v928
        %v1018 = vunpack.c.l.b16 %v929
        %v1019 = vunpack.c.h.b16 %v929
        %v1020 = vunpack.c.l.b16 %v930
        %v1021 = vunpack.c.h.b16 %v930
        %v1022 = vunpack.c.l.b16 %v931
        %v1023 = vunpack.c.h.b16 %v931
        %v1024 = vunpack.c.l.b16 %v932
        %v1025 = vunpack.c.h.b16 %v932
        %v1026 = vunpack.c.l.b16 %v933
        %v1027 = vunpack.c.h.b16 %v933
        %v1028 = vunpack.c.l.b16 %v934
        %v1029 = vunpack.c.h.b16 %v934
        %v1030 = vunpack.c.l.b16 %v935
        %v1031 = vunpack.c.h.b16 %v935
        %v1032 = vpack.c.b16 %v972, %v968
        %v1033 = vpack.c.b16 %v973, %v969
        %v1034 = vpack.c.b16 %v974, %v970
        %v1035 = vpack.c.b16 %v975, %v971
        %v1036 = vpack.c.b16 %v980, %v976
        %v1037 = vpack.c.b16 %v981, %v977
        %v1038 = vpack.c.b16 %v982, %v978
        %v1039 = vpack.c.b16 %v983, %v979
        %v1040 = vpack.c.b16 %v988, %v984
        %v1041 = vpack.c.b16 %v989, %v985
        %v1042 = vpack.c.b16 %v990, %v986
        %v1043 = vpack.c.b16 %v991, %v987
        %v1044 = vpack.c.b16 %v996, %v992
        %v1045 = vpack.c.b16 %v997, %v993
        %v1046 = vpack.c.b16 %v998, %v994
        %v1047 = vpack.c.b16 %v999, %v995
        %v1048 = vpack.c.b16 %v1004, %v1000
        %v1049 = vpack.c.b16 %v1005, %v1001
        %v1050 = vpack.c.b16 %v1006, %v1002
        %v1051 = vpack.c.b16 %v1007, %v1003
        %v1052 = vpack.c.b16 %v1012, %v1008
        %v1053 = vpack.c.b16 %v1013, %v1009
        %v1054 = vpack.c.b16 %v1014, %v1010
        %v1055 = vpack.c.b16 %v1015, %v1011
        %v1056 = vpack.c.b16 %v1020, %v1016
        %v1057 = vpack.c.b16 %v1021, %v1017
        %v1058 = vpack.c.b16 %v1022, %v1018
        %v1059 = vpack.c.b16 %v1023, %v1019
        %v1060 = vpack.c.b16 %v1028, %v1024
        %v1061 = vpack.c.b16 %v1029, %v1025
        %v1062 = vpack.c.b16 %v1030, %v1026
        %v1063 = vpack.c.b16 %v1031, %v1027
        %1096 = vmatprep.subr.bf16.mxu0 %v1033
        %1097 = vmatpush1.bf16.msra.mxu0 %v1032
        %1098 = vmatprep.subr.bf16.mxu0 %v1037
        %1099 = vmatpush1.bf16.msra.mxu0 %v1036
        %1100 = vmatprep.subr.bf16.mxu0 %v1041
        %1101 = vmatpush1.bf16.msra.mxu0 %v1040
        %1102 = vmatprep.subr.bf16.mxu0 %v1045
        %1103 = vmatpush1.bf16.msra.mxu0 %v1044
        %1104 = vmatprep.subr.bf16.mxu0 %v1049
        %1105 = vmatpush1.bf16.msra.mxu0 %v1048
        %1106 = vmatprep.subr.bf16.mxu0 %v1053
        %1107 = vmatpush1.bf16.msra.mxu0 %v1052
        %1108 = vmatprep.subr.bf16.mxu0 %v1057
        %1109 = vmatpush1.bf16.msra.mxu0 %v1056
        %1110 = vmatprep.subr.bf16.mxu0 %v1061
        %1111 = vmatpush1.bf16.msra.mxu0 %v1060
        %1112 = vmatprep.subr.bf16.mxu0 0
        %1113 = vmatpush1.bf16.msra.mxu0 0
        %1114 = vmatprep.subr.bf16.mxu0 0
        %1115 = vmatpush1.bf16.msra.mxu0 0
        %1116 = vmatprep.subr.bf16.mxu0 0
        %1117 = vmatpush1.bf16.msra.mxu0 0
        %1118 = vmatprep.subr.bf16.mxu0 0
        %1119 = vmatpush1.bf16.msra.mxu0 0
        %1120 = vmatprep.subr.bf16.mxu0 0
        %1121 = vmatpush1.bf16.msra.mxu0 0
        %1122 = vmatprep.subr.bf16.mxu0 0
        %1123 = vmatpush1.bf16.msra.mxu0 0
        %1124 = vmatprep.subr.bf16.mxu0 0
        %1125 = vmatpush1.bf16.msra.mxu0 0
        %1126 = vmatprep.subr.bf16.mxu0 0
        %1127 = vmatpush1.bf16.msra.mxu0 0
        %1128 = vmatprep.mubr.bf16.mxu0 0
        %1129 = vmatmul.mubr.bf16.gmra.mrb[0].mxu0 %v903
        %v1130 = vpop.f32.mrb[0].mxu0
        %v1131 = vadd.f32 0.0, %v1130
        %v1132 = vpop.f32.mrb[0].mxu0
        %v1133 = vadd.f32 0.0, %v1132
        %v1134 = vpop.f32.mrb[0].mxu0
        %v1135 = vpop.f32.mrb[0].mxu0
        %1136 = vdwg.mxu0
        %1137 = vmatprep.subr.bf16.mxu0 %v1035
        %1138 = vmatpush1.bf16.msra.mxu0 %v1034
        %1139 = vmatprep.subr.bf16.mxu0 %v1039
        %1140 = vmatpush1.bf16.msra.mxu0 %v1038
        %1141 = vmatprep.subr.bf16.mxu0 %v1043
        %1142 = vmatpush1.bf16.msra.mxu0 %v1042
        %1143 = vmatprep.subr.bf16.mxu0 %v1047
        %1144 = vmatpush1.bf16.msra.mxu0 %v1046
        %1145 = vmatprep.subr.bf16.mxu0 %v1051
        %1146 = vmatpush1.bf16.msra.mxu0 %v1050
        %1147 = vmatprep.subr.bf16.mxu0 %v1055
        %1148 = vmatpush1.bf16.msra.mxu0 %v1054
        %1149 = vmatprep.subr.bf16.mxu0 %v1059
        %1150 = vmatpush1.bf16.msra.mxu0 %v1058
        %1151 = vmatprep.subr.bf16.mxu0 %v1063
        %1152 = vmatpush1.bf16.msra.mxu0 %v1062
        %1153 = vmatprep.subr.bf16.mxu0 0
        %1154 = vmatpush1.bf16.msra.mxu0 0
        %1155 = vmatprep.subr.bf16.mxu0 0
        %1156 = vmatpush1.bf16.msra.mxu0 0
        %1157 = vmatprep.subr.bf16.mxu0 0
        %1158 = vmatpush1.bf16.msra.mxu0 0
        %1159 = vmatprep.subr.bf16.mxu0 0
        %1160 = vmatpush1.bf16.msra.mxu0 0
        %1161 = vmatprep.subr.bf16.mxu0 0
        %1162 = vmatpush1.bf16.msra.mxu0 0
        %1163 = vmatprep.subr.bf16.mxu0 0
        %1164 = vmatpush1.bf16.msra.mxu0 0
        %1165 = vmatprep.subr.bf16.mxu0 0
        %1166 = vmatpush1.bf16.msra.mxu0 0
        %1167 = vmatprep.subr.bf16.mxu0 0
        %1168 = vmatpush1.bf16.msra.mxu0 0
        %1169 = vmatprep.mubr.bf16.mxu0 0
        %1170 = vmatmul.mubr.bf16.gmra.mrb[0].mxu0 %v903
        %v1171 = vpop.f32.mrb[0].mxu0
        %v1172 = vadd.f32 0.0, %v1171
        %v1173 = vpop.f32.mrb[0].mxu0
        %v1174 = vadd.f32 0.0, %v1173
        %v1175 = vpop.f32.mrb[0].mxu0
        %v1176 = vpop.f32.mrb[0].mxu0
        %1177 = vdwg.mxu0
        %v1178 = vadd.f32 %v898, %v1131
        %v1179 = vadd.f32 %v899, %v1133
        %v1180 = vadd.f32 %v900, %v1172
        %v1181 = vadd.f32 %v901, %v1174
        %v1182 = vld [vmem:[#allocation3] sm:$0xff]
        %v1183 = vmul.f32 %v1178, 0.5
        %v1184 = vtanh.pop %v1183
        %v1185 = vadd.f32 %v1184, 1.0
        %v1186 = vmul.f32 %v1185, 0.5
        %v1187 = vmul.f32 %v1179, 0.5
        %v1188 = vtanh.pop %v1187
        %v1189 = vadd.f32 %v1188, 1.0
        %v1190 = vmul.f32 %v1189, 0.5
        %v1191 = vtanh.pop %v1180
        %v1192 = vmul.f32 %v1181, 0.5
        %v1193 = vtanh.pop %v1192
        %v1194 = vadd.f32 %v1193, 1.0
        %v1195 = vmul.f32 %v1194, 0.5
        %v1196 = vmul.f32 %v1190, %v1182
        %v1197 = vmul.f32 %v1186, %v1191
        %v1198 = vadd.f32 %v1196, %v1197
        %v1199 = vtanh.pop %v1198
        %v1200 = vmul.f32 %v1195, %v1199
        %v1201 = vstv %s896
        %vm1202 = vcmp.lt.s32.totalorder %v1201, %v897
        %v1203 = vsel %vm1202, 1, 0
        %1204 = vset.pattern.permute.xlu0 0
        %1205 = vperm.xlu0 %1204, %v1203
        %v1206 = vpop.permute.xlu0 %1205
        %vm1207 = vcmp.eq.s32.totalorder %v1206, 1
        %v1208 = vsel %vm1207, %v1200, %v902
        %v1209 = vsel %vm1207, %v1198, %v1182
        %1210 = vst [vmem:[#allocation2] sm:$0xff] %v1208
        %1211 = vst [vmem:[#allocation3] sm:$0xff] %v1209
        %s1212 = scalar_lea.vmem [#allocation4], 32
        %v1213 = vld [vmem:[%s1212] sm:$0xff]
        %v1214 = vld [vmem:[%s1212 + $0x8] sm:$0xff]
        %v1215 = vld [vmem:[%s1212 + $0x10] sm:$0xff]
        %v1216 = vld [vmem:[%s1212 + $0x18] sm:$0xff]
        %v1217 = vld [vmem:[#allocation2] sm:$0xff]
        %v1218 = vpack.c.bf16 %v1217, %v1217
        %v1219 = vld [vmem:[#allocation10] sm:$0xff]
        %v1220 = vld [vmem:[#allocation10 + $0x8] sm:$0xff]
        %v1221 = vld [vmem:[#allocation10 + $0x10] sm:$0xff]
        %v1222 = vld [vmem:[#allocation10 + $0x18] sm:$0xff]
        %v1223 = vld [vmem:[#allocation10 + $0x20] sm:$0xff]
        %v1224 = vld [vmem:[#allocation10 + $0x28] sm:$0xff]
        %v1225 = vld [vmem:[#allocation10 + $0x30] sm:$0xff]
        %v1226 = vld [vmem:[#allocation10 + $0x38] sm:$0xff]
        %v1227 = vld [vmem:[#allocation10 + $0x40] sm:$0xff]
        %v1228 = vld [vmem:[#allocation10 + $0x48] sm:$0xff]
        %v1229 = vld [vmem:[#allocation10 + $0x50] sm:$0xff]
        %v1230 = vld [vmem:[#allocation10 + $0x58] sm:$0xff]
        %v1231 = vld [vmem:[#allocation10 + $0x60] sm:$0xff]
        %v1232 = vld [vmem:[#allocation10 + $0x68] sm:$0xff]
        %v1233 = vld [vmem:[#allocation10 + $0x70] sm:$0xff]
        %v1234 = vld [vmem:[#allocation10 + $0x78] sm:$0xff]
        %v1235 = vld [vmem:[#allocation10 + $0x80] sm:$0xff]
        %v1236 = vld [vmem:[#allocation10 + $0x88] sm:$0xff]
        %v1237 = vld [vmem:[#allocation10 + $0x90] sm:$0xff]
        %v1238 = vld [vmem:[#allocation10 + $0x98] sm:$0xff]
        %v1239 = vld [vmem:[#allocation10 + $0xa0] sm:$0xff]
        %v1240 = vld [vmem:[#allocation10 + $0xa8] sm:$0xff]
        %v1241 = vld [vmem:[#allocation10 + $0xb0] sm:$0xff]
        %v1242 = vld [vmem:[#allocation10 + $0xb8] sm:$0xff]
        %v1243 = vld [vmem:[#allocation10 + $0xc0] sm:$0xff]
        %v1244 = vld [vmem:[#allocation10 + $0xc8] sm:$0xff]
        %v1245 = vld [vmem:[#allocation10 + $0xd0] sm:$0xff]
        %v1246 = vld [vmem:[#allocation10 + $0xd8] sm:$0xff]
        %v1247 = vld [vmem:[#allocation10 + $0xe0] sm:$0xff]
        %v1248 = vld [vmem:[#allocation10 + $0xe8] sm:$0xff]
        %v1249 = vld [vmem:[#allocation10 + $0xf0] sm:$0xff]
        %v1250 = vld [vmem:[#allocation10 + $0xf8] sm:$0xff]
        %v1283 = vunpack.c.l.b16 %v1219
        %v1284 = vunpack.c.h.b16 %v1219
        %v1285 = vunpack.c.l.b16 %v1220
        %v1286 = vunpack.c.h.b16 %v1220
        %v1287 = vunpack.c.l.b16 %v1221
        %v1288 = vunpack.c.h.b16 %v1221
        %v1289 = vunpack.c.l.b16 %v1222
        %v1290 = vunpack.c.h.b16 %v1222
        %v1291 = vunpack.c.l.b16 %v1223
        %v1292 = vunpack.c.h.b16 %v1223
        %v1293 = vunpack.c.l.b16 %v1224
        %v1294 = vunpack.c.h.b16 %v1224
        %v1295 = vunpack.c.l.b16 %v1225
        %v1296 = vunpack.c.h.b16 %v1225
        %v1297 = vunpack.c.l.b16 %v1226
        %v1298 = vunpack.c.h.b16 %v1226
        %v1299 = vunpack.c.l.b16 %v1227
        %v1300 = vunpack.c.h.b16 %v1227
        %v1301 = vunpack.c.l.b16 %v1228
        %v1302 = vunpack.c.h.b16 %v1228
        %v1303 = vunpack.c.l.b16 %v1229
        %v1304 = vunpack.c.h.b16 %v1229
        %v1305 = vunpack.c.l.b16 %v1230
        %v1306 = vunpack.c.h.b16 %v1230
        %v1307 = vunpack.c.l.b16 %v1231
        %v1308 = vunpack.c.h.b16 %v1231
        %v1309 = vunpack.c.l.b16 %v1232
        %v1310 = vunpack.c.h.b16 %v1232
        %v1311 = vunpack.c.l.b16 %v1233
        %v1312 = vunpack.c.h.b16 %v1233
        %v1313 = vunpack.c.l.b16 %v1234
        %v1314 = vunpack.c.h.b16 %v1234
        %v1315 = vunpack.c.l.b16 %v1235
        %v1316 = vunpack.c.h.b16 %v1235
        %v1317 = vunpack.c.l.b16 %v1236
        %v1318 = vunpack.c.h.b16 %v1236
        %v1319 = vunpack.c.l.b16 %v1237
        %v1320 = vunpack.c.h.b16 %v1237
        %v1321 = vunpack.c.l.b16 %v1238
        %v1322 = vunpack.c.h.b16 %v1238
        %v1323 = vunpack.c.l.b16 %v1239
        %v1324 = vunpack.c.h.b16 %v1239
        %v1325 = vunpack.c.l.b16 %v1240
        %v1326 = vunpack.c.h.b16 %v1240
        %v1327 = vunpack.c.l.b16 %v1241
        %v1328 = vunpack.c.h.b16 %v1241
        %v1329 = vunpack.c.l.b16 %v1242
        %v1330 = vunpack.c.h.b16 %v1242
        %v1331 = vunpack.c.l.b16 %v1243
        %v1332 = vunpack.c.h.b16 %v1243
        %v1333 = vunpack.c.l.b16 %v1244
        %v1334 = vunpack.c.h.b16 %v1244
        %v1335 = vunpack.c.l.b16 %v1245
        %v1336 = vunpack.c.h.b16 %v1245
        %v1337 = vunpack.c.l.b16 %v1246
        %v1338 = vunpack.c.h.b16 %v1246
        %v1339 = vunpack.c.l.b16 %v1247
        %v1340 = vunpack.c.h.b16 %v1247
        %v1341 = vunpack.c.l.b16 %v1248
        %v1342 = vunpack.c.h.b16 %v1248
        %v1343 = vunpack.c.l.b16 %v1249
        %v1344 = vunpack.c.h.b16 %v1249
        %v1345 = vunpack.c.l.b16 %v1250
        %v1346 = vunpack.c.h.b16 %v1250
        %v1347 = vpack.c.b16 %v1287, %v1283
        %v1348 = vpack.c.b16 %v1288, %v1284
        %v1349 = vpack.c.b16 %v1289, %v1285
        %v1350 = vpack.c.b16 %v1290, %v1286
        %v1351 = vpack.c.b16 %v1295, %v1291
        %v1352 = vpack.c.b16 %v1296, %v1292
        %v1353 = vpack.c.b16 %v1297, %v1293
        %v1354 = vpack.c.b16 %v1298, %v1294
        %v1355 = vpack.c.b16 %v1303, %v1299
        %v1356 = vpack.c.b16 %v1304, %v1300
        %v1357 = vpack.c.b16 %v1305, %v1301
        %v1358 = vpack.c.b16 %v1306, %v1302
        %v1359 = vpack.c.b16 %v1311, %v1307
        %v1360 = vpack.c.b16 %v1312, %v1308
        %v1361 = vpack.c.b16 %v1313, %v1309
        %v1362 = vpack.c.b16 %v1314, %v1310
        %v1363 = vpack.c.b16 %v1319, %v1315
        %v1364 = vpack.c.b16 %v1320, %v1316
        %v1365 = vpack.c.b16 %v1321, %v1317
        %v1366 = vpack.c.b16 %v1322, %v1318
        %v1367 = vpack.c.b16 %v1327, %v1323
        %v1368 = vpack.c.b16 %v1328, %v1324
        %v1369 = vpack.c.b16 %v1329, %v1325
        %v1370 = vpack.c.b16 %v1330, %v1326
        %v1371 = vpack.c.b16 %v1335, %v1331
        %v1372 = vpack.c.b16 %v1336, %v1332
        %v1373 = vpack.c.b16 %v1337, %v1333
        %v1374 = vpack.c.b16 %v1338, %v1334
        %v1375 = vpack.c.b16 %v1343, %v1339
        %v1376 = vpack.c.b16 %v1344, %v1340
        %v1377 = vpack.c.b16 %v1345, %v1341
        %v1378 = vpack.c.b16 %v1346, %v1342
        %1411 = vmatprep.subr.bf16.mxu0 %v1348
        %1412 = vmatpush1.bf16.msra.mxu0 %v1347
        %1413 = vmatprep.subr.bf16.mxu0 %v1352
        %1414 = vmatpush1.bf16.msra.mxu0 %v1351
        %1415 = vmatprep.subr.bf16.mxu0 %v1356
        %1416 = vmatpush1.bf16.msra.mxu0 %v1355
        %1417 = vmatprep.subr.bf16.mxu0 %v1360
        %1418 = vmatpush1.bf16.msra.mxu0 %v1359
        %1419 = vmatprep.subr.bf16.mxu0 %v1364
        %1420 = vmatpush1.bf16.msra.mxu0 %v1363
        %1421 = vmatprep.subr.bf16.mxu0 %v1368
        %1422 = vmatpush1.bf16.msra.mxu0 %v1367
        %1423 = vmatprep.subr.bf16.mxu0 %v1372
        %1424 = vmatpush1.bf16.msra.mxu0 %v1371
        %1425 = vmatprep.subr.bf16.mxu0 %v1376
        %1426 = vmatpush1.bf16.msra.mxu0 %v1375
        %1427 = vmatprep.subr.bf16.mxu0 0
        %1428 = vmatpush1.bf16.msra.mxu0 0
        %1429 = vmatprep.subr.bf16.mxu0 0
        %1430 = vmatpush1.bf16.msra.mxu0 0
        %1431 = vmatprep.subr.bf16.mxu0 0
        %1432 = vmatpush1.bf16.msra.mxu0 0
        %1433 = vmatprep.subr.bf16.mxu0 0
        %1434 = vmatpush1.bf16.msra.mxu0 0
        %1435 = vmatprep.subr.bf16.mxu0 0
        %1436 = vmatpush1.bf16.msra.mxu0 0
        %1437 = vmatprep.subr.bf16.mxu0 0
        %1438 = vmatpush1.bf16.msra.mxu0 0
        %1439 = vmatprep.subr.bf16.mxu0 0
        %1440 = vmatpush1.bf16.msra.mxu0 0
        %1441 = vmatprep.subr.bf16.mxu0 0
        %1442 = vmatpush1.bf16.msra.mxu0 0
        %1443 = vmatprep.mubr.bf16.mxu0 0
        %1444 = vmatmul.mubr.bf16.gmra.mrb[0].mxu0 %v1218
        %v1445 = vpop.f32.mrb[0].mxu0
        %v1446 = vadd.f32 0.0, %v1445
        %v1447 = vpop.f32.mrb[0].mxu0
        %v1448 = vadd.f32 0.0, %v1447
        %v1449 = vpop.f32.mrb[0].mxu0
        %v1450 = vpop.f32.mrb[0].mxu0
        %1451 = vdwg.mxu0
        %1452 = vmatprep.subr.bf16.mxu0 %v1350
        %1453 = vmatpush1.bf16.msra.mxu0 %v1349
        %1454 = vmatprep.subr.bf16.mxu0 %v1354
        %1455 = vmatpush1.bf16.msra.mxu0 %v1353
        %1456 = vmatprep.subr.bf16.mxu0 %v1358
        %1457 = vmatpush1.bf16.msra.mxu0 %v1357
        %1458 = vmatprep.subr.bf16.mxu0 %v1362
        %1459 = vmatpush1.bf16.msra.mxu0 %v1361
        %1460 = vmatprep.subr.bf16.mxu0 %v1366
        %1461 = vmatpush1.bf16.msra.mxu0 %v1365
        %1462 = vmatprep.subr.bf16.mxu0 %v1370
        %1463 = vmatpush1.bf16.msra.mxu0 %v1369
        %1464 = vmatprep.subr.bf16.mxu0 %v1374
        %1465 = vmatpush1.bf16.msra.mxu0 %v1373
        %1466 = vmatprep.subr.bf16.mxu0 %v1378
        %1467 = vmatpush1.bf16.msra.mxu0 %v1377
        %1468 = vmatprep.subr.bf16.mxu0 0
        %1469 = vmatpush1.bf16.msra.mxu0 0
        %1470 = vmatprep.subr.bf16.mxu0 0
        %1471 = vmatpush1.bf16.msra.mxu0 0
        %1472 = vmatprep.subr.bf16.mxu0 0
        %1473 = vmatpush1.bf16.msra.mxu0 0
        %1474 = vmatprep.subr.bf16.mxu0 0
        %1475 = vmatpush1.bf16.msra.mxu0 0
        %1476 = vmatprep.subr.bf16.mxu0 0
        %1477 = vmatpush1.bf16.msra.mxu0 0
        %1478 = vmatprep.subr.bf16.mxu0 0
        %1479 = vmatpush1.bf16.msra.mxu0 0
        %1480 = vmatprep.subr.bf16.mxu0 0
        %1481 = vmatpush1.bf16.msra.mxu0 0
        %1482 = vmatprep.subr.bf16.mxu0 0
        %1483 = vmatpush1.bf16.msra.mxu0 0
        %1484 = vmatprep.mubr.bf16.mxu0 0
        %1485 = vmatmul.mubr.bf16.gmra.mrb[0].mxu0 %v1218
        %v1486 = vpop.f32.mrb[0].mxu0
        %v1487 = vadd.f32 0.0, %v1486
        %v1488 = vpop.f32.mrb[0].mxu0
        %v1489 = vadd.f32 0.0, %v1488
        %v1490 = vpop.f32.mrb[0].mxu0
        %v1491 = vpop.f32.mrb[0].mxu0
        %1492 = vdwg.mxu0
        %v1493 = vadd.f32 %v1213, %v1446
        %v1494 = vadd.f32 %v1214, %v1448
        %v1495 = vadd.f32 %v1215, %v1487
        %v1496 = vadd.f32 %v1216, %v1489
        %v1497 = vld [vmem:[#allocation3] sm:$0xff]
        %v1498 = vmul.f32 %v1493, 0.5
        %v1499 = vtanh.pop %v1498
        %v1500 = vadd.f32 %v1499, 1.0
        %v1501 = vmul.f32 %v1500, 0.5
        %v1502 = vmul.f32 %v1494, 0.5
        %v1503 = vtanh.pop %v1502
        %v1504 = vadd.f32 %v1503, 1.0
        %v1505 = vmul.f32 %v1504, 0.5
        %v1506 = vtanh.pop %v1495
        %v1507 = vmul.f32 %v1496, 0.5
        %v1508 = vtanh.pop %v1507
        %v1509 = vadd.f32 %v1508, 1.0
        %v1510 = vmul.f32 %v1509, 0.5
        %v1511 = vmul.f32 %v1505, %v1497
        %v1512 = vmul.f32 %v1501, %v1506
        %v1513 = vadd.f32 %v1511, %v1512
        %v1514 = vtanh.pop %v1513
        %v1515 = vmul.f32 %v1510, %v1514
        %s1516 = sadd.s32 %s896, 1
        %v1517 = vstv %s1516
        %vm1518 = vcmp.lt.s32.totalorder %v1517, %v897
        %v1519 = vsel %vm1518, 1, 0
        %1520 = vset.pattern.permute.xlu0 0
        %1521 = vperm.xlu0 %1520, %v1519
        %v1522 = vpop.permute.xlu0 %1521
        %vm1523 = vcmp.eq.s32.totalorder %v1522, 1
        %v1524 = vsel %vm1523, %v1515, %v1217
        %v1525 = vsel %vm1523, %v1513, %v1497
        %1526 = vst [vmem:[#allocation2] sm:$0xff] %v1524
        %1527 = vst [vmem:[#allocation3] sm:$0xff] %v1525
        %s1528 = scalar_lea.vmem [#allocation4], 64
        %v1529 = vld [vmem:[%s1528] sm:$0xff]
        %v1530 = vld [vmem:[%s1528 + $0x8] sm:$0xff]
        %v1531 = vld [vmem:[%s1528 + $0x10] sm:$0xff]
        %v1532 = vld [vmem:[%s1528 + $0x18] sm:$0xff]
        %v1533 = vld [vmem:[#allocation2] sm:$0xff]
        %v1534 = vpack.c.bf16 %v1533, %v1533
        %v1535 = vld [vmem:[#allocation10] sm:$0xff]
        %v1536 = vld [vmem:[#allocation10 + $0x8] sm:$0xff]
        %v1537 = vld [vmem:[#allocation10 + $0x10] sm:$0xff]
        %v1538 = vld [vmem:[#allocation10 + $0x18] sm:$0xff]
        %v1539 = vld [vmem:[#allocation10 + $0x20] sm:$0xff]
        %v1540 = vld [vmem:[#allocation10 + $0x28] sm:$0xff]
        %v1541 = vld [vmem:[#allocation10 + $0x30] sm:$0xff]
        %v1542 = vld [vmem:[#allocation10 + $0x38] sm:$0xff]
        %v1543 = vld [vmem:[#allocation10 + $0x40] sm:$0xff]
        %v1544 = vld [vmem:[#allocation10 + $0x48] sm:$0xff]
        %v1545 = vld [vmem:[#allocation10 + $0x50] sm:$0xff]
        %v1546 = vld [vmem:[#allocation10 + $0x58] sm:$0xff]
        %v1547 = vld [vmem:[#allocation10 + $0x60] sm:$0xff]
        %v1548 = vld [vmem:[#allocation10 + $0x68] sm:$0xff]
        %v1549 = vld [vmem:[#allocation10 + $0x70] sm:$0xff]
        %v1550 = vld [vmem:[#allocation10 + $0x78] sm:$0xff]
        %v1551 = vld [vmem:[#allocation10 + $0x80] sm:$0xff]
        %v1552 = vld [vmem:[#allocation10 + $0x88] sm:$0xff]
        %v1553 = vld [vmem:[#allocation10 + $0x90] sm:$0xff]
        %v1554 = vld [vmem:[#allocation10 + $0x98] sm:$0xff]
        %v1555 = vld [vmem:[#allocation10 + $0xa0] sm:$0xff]
        %v1556 = vld [vmem:[#allocation10 + $0xa8] sm:$0xff]
        %v1557 = vld [vmem:[#allocation10 + $0xb0] sm:$0xff]
        %v1558 = vld [vmem:[#allocation10 + $0xb8] sm:$0xff]
        %v1559 = vld [vmem:[#allocation10 + $0xc0] sm:$0xff]
        %v1560 = vld [vmem:[#allocation10 + $0xc8] sm:$0xff]
        %v1561 = vld [vmem:[#allocation10 + $0xd0] sm:$0xff]
        %v1562 = vld [vmem:[#allocation10 + $0xd8] sm:$0xff]
        %v1563 = vld [vmem:[#allocation10 + $0xe0] sm:$0xff]
        %v1564 = vld [vmem:[#allocation10 + $0xe8] sm:$0xff]
        %v1565 = vld [vmem:[#allocation10 + $0xf0] sm:$0xff]
        %v1566 = vld [vmem:[#allocation10 + $0xf8] sm:$0xff]
        %v1599 = vunpack.c.l.b16 %v1535
        %v1600 = vunpack.c.h.b16 %v1535
        %v1601 = vunpack.c.l.b16 %v1536
        %v1602 = vunpack.c.h.b16 %v1536
        %v1603 = vunpack.c.l.b16 %v1537
        %v1604 = vunpack.c.h.b16 %v1537
        %v1605 = vunpack.c.l.b16 %v1538
        %v1606 = vunpack.c.h.b16 %v1538
        %v1607 = vunpack.c.l.b16 %v1539
        %v1608 = vunpack.c.h.b16 %v1539
        %v1609 = vunpack.c.l.b16 %v1540
        %v1610 = vunpack.c.h.b16 %v1540
        %v1611 = vunpack.c.l.b16 %v1541
        %v1612 = vunpack.c.h.b16 %v1541
        %v1613 = vunpack.c.l.b16 %v1542
        %v1614 = vunpack.c.h.b16 %v1542
        %v1615 = vunpack.c.l.b16 %v1543
        %v1616 = vunpack.c.h.b16 %v1543
        %v1617 = vunpack.c.l.b16 %v1544
        %v1618 = vunpack.c.h.b16 %v1544
        %v1619 = vunpack.c.l.b16 %v1545
        %v1620 = vunpack.c.h.b16 %v1545
        %v1621 = vunpack.c.l.b16 %v1546
        %v1622 = vunpack.c.h.b16 %v1546
        %v1623 = vunpack.c.l.b16 %v1547
        %v1624 = vunpack.c.h.b16 %v1547
        %v1625 = vunpack.c.l.b16 %v1548
        %v1626 = vunpack.c.h.b16 %v1548
        %v1627 = vunpack.c.l.b16 %v1549
        %v1628 = vunpack.c.h.b16 %v1549
        %v1629 = vunpack.c.l.b16 %v1550
        %v1630 = vunpack.c.h.b16 %v1550
        %v1631 = vunpack.c.l.b16 %v1551
        %v1632 = vunpack.c.h.b16 %v1551
        %v1633 = vunpack.c.l.b16 %v1552
        %v1634 = vunpack.c.h.b16 %v1552
        %v1635 = vunpack.c.l.b16 %v1553
        %v1636 = vunpack.c.h.b16 %v1553
        %v1637 = vunpack.c.l.b16 %v1554
        %v1638 = vunpack.c.h.b16 %v1554
        %v1639 = vunpack.c.l.b16 %v1555
        %v1640 = vunpack.c.h.b16 %v1555
        %v1641 = vunpack.c.l.b16 %v1556
        %v1642 = vunpack.c.h.b16 %v1556
        %v1643 = vunpack.c.l.b16 %v1557
        %v1644 = vunpack.c.h.b16 %v1557
        %v1645 = vunpack.c.l.b16 %v1558
        %v1646 = vunpack.c.h.b16 %v1558
        %v1647 = vunpack.c.l.b16 %v1559
        %v1648 = vunpack.c.h.b16 %v1559
        %v1649 = vunpack.c.l.b16 %v1560
        %v1650 = vunpack.c.h.b16 %v1560
        %v1651 = vunpack.c.l.b16 %v1561
        %v1652 = vunpack.c.h.b16 %v1561
        %v1653 = vunpack.c.l.b16 %v1562
        %v1654 = vunpack.c.h.b16 %v1562
        %v1655 = vunpack.c.l.b16 %v1563
        %v1656 = vunpack.c.h.b16 %v1563
        %v1657 = vunpack.c.l.b16 %v1564
        %v1658 = vunpack.c.h.b16 %v1564
        %v1659 = vunpack.c.l.b16 %v1565
        %v1660 = vunpack.c.h.b16 %v1565
        %v1661 = vunpack.c.l.b16 %v1566
        %v1662 = vunpack.c.h.b16 %v1566
        %v1663 = vpack.c.b16 %v1603, %v1599
        %v1664 = vpack.c.b16 %v1604, %v1600
        %v1665 = vpack.c.b16 %v1605, %v1601
        %v1666 = vpack.c.b16 %v1606, %v1602
        %v1667 = vpack.c.b16 %v1611, %v1607
        %v1668 = vpack.c.b16 %v1612, %v1608
        %v1669 = vpack.c.b16 %v1613, %v1609
        %v1670 = vpack.c.b16 %v1614, %v1610
        %v1671 = vpack.c.b16 %v1619, %v1615
        %v1672 = vpack.c.b16 %v1620, %v1616
        %v1673 = vpack.c.b16 %v1621, %v1617
        %v1674 = vpack.c.b16 %v1622, %v1618
        %v1675 = vpack.c.b16 %v1627, %v1623
        %v1676 = vpack.c.b16 %v1628, %v1624
        %v1677 = vpack.c.b16 %v1629, %v1625
        %v1678 = vpack.c.b16 %v1630, %v1626
        %v1679 = vpack.c.b16 %v1635, %v1631
        %v1680 = vpack.c.b16 %v1636, %v1632
        %v1681 = vpack.c.b16 %v1637, %v1633
        %v1682 = vpack.c.b16 %v1638, %v1634
        %v1683 = vpack.c.b16 %v1643, %v1639
        %v1684 = vpack.c.b16 %v1644, %v1640
        %v1685 = vpack.c.b16 %v1645, %v1641
        %v1686 = vpack.c.b16 %v1646, %v1642
        %v1687 = vpack.c.b16 %v1651, %v1647
        %v1688 = vpack.c.b16 %v1652, %v1648
        %v1689 = vpack.c.b16 %v1653, %v1649
        %v1690 = vpack.c.b16 %v1654, %v1650
        %v1691 = vpack.c.b16 %v1659, %v1655
        %v1692 = vpack.c.b16 %v1660, %v1656
        %v1693 = vpack.c.b16 %v1661, %v1657
        %v1694 = vpack.c.b16 %v1662, %v1658
        %1727 = vmatprep.subr.bf16.mxu0 %v1664
        %1728 = vmatpush1.bf16.msra.mxu0 %v1663
        %1729 = vmatprep.subr.bf16.mxu0 %v1668
        %1730 = vmatpush1.bf16.msra.mxu0 %v1667
        %1731 = vmatprep.subr.bf16.mxu0 %v1672
        %1732 = vmatpush1.bf16.msra.mxu0 %v1671
        %1733 = vmatprep.subr.bf16.mxu0 %v1676
        %1734 = vmatpush1.bf16.msra.mxu0 %v1675
        %1735 = vmatprep.subr.bf16.mxu0 %v1680
        %1736 = vmatpush1.bf16.msra.mxu0 %v1679
        %1737 = vmatprep.subr.bf16.mxu0 %v1684
        %1738 = vmatpush1.bf16.msra.mxu0 %v1683
        %1739 = vmatprep.subr.bf16.mxu0 %v1688
        %1740 = vmatpush1.bf16.msra.mxu0 %v1687
        %1741 = vmatprep.subr.bf16.mxu0 %v1692
        %1742 = vmatpush1.bf16.msra.mxu0 %v1691
        %1743 = vmatprep.subr.bf16.mxu0 0
        %1744 = vmatpush1.bf16.msra.mxu0 0
        %1745 = vmatprep.subr.bf16.mxu0 0
        %1746 = vmatpush1.bf16.msra.mxu0 0
        %1747 = vmatprep.subr.bf16.mxu0 0
        %1748 = vmatpush1.bf16.msra.mxu0 0
        %1749 = vmatprep.subr.bf16.mxu0 0
        %1750 = vmatpush1.bf16.msra.mxu0 0
        %1751 = vmatprep.subr.bf16.mxu0 0
        %1752 = vmatpush1.bf16.msra.mxu0 0
        %1753 = vmatprep.subr.bf16.mxu0 0
        %1754 = vmatpush1.bf16.msra.mxu0 0
        %1755 = vmatprep.subr.bf16.mxu0 0
        %1756 = vmatpush1.bf16.msra.mxu0 0
        %1757 = vmatprep.subr.bf16.mxu0 0
        %1758 = vmatpush1.bf16.msra.mxu0 0
        %1759 = vmatprep.mubr.bf16.mxu0 0
        %1760 = vmatmul.mubr.bf16.gmra.mrb[0].mxu0 %v1534
        %v1761 = vpop.f32.mrb[0].mxu0
        %v1762 = vadd.f32 0.0, %v1761
        %v1763 = vpop.f32.mrb[0].mxu0
        %v1764 = vadd.f32 0.0, %v1763
        %v1765 = vpop.f32.mrb[0].mxu0
        %v1766 = vpop.f32.mrb[0].mxu0
        %1767 = vdwg.mxu0
        %1768 = vmatprep.subr.bf16.mxu0 %v1666
        %1769 = vmatpush1.bf16.msra.mxu0 %v1665
        %1770 = vmatprep.subr.bf16.mxu0 %v1670
        %1771 = vmatpush1.bf16.msra.mxu0 %v1669
        %1772 = vmatprep.subr.bf16.mxu0 %v1674
        %1773 = vmatpush1.bf16.msra.mxu0 %v1673
        %1774 = vmatprep.subr.bf16.mxu0 %v1678
        %1775 = vmatpush1.bf16.msra.mxu0 %v1677
        %1776 = vmatprep.subr.bf16.mxu0 %v1682
        %1777 = vmatpush1.bf16.msra.mxu0 %v1681
        %1778 = vmatprep.subr.bf16.mxu0 %v1686
        %1779 = vmatpush1.bf16.msra.mxu0 %v1685
        %1780 = vmatprep.subr.bf16.mxu0 %v1690
        %1781 = vmatpush1.bf16.msra.mxu0 %v1689
        %1782 = vmatprep.subr.bf16.mxu0 %v1694
        %1783 = vmatpush1.bf16.msra.mxu0 %v1693
        %1784 = vmatprep.subr.bf16.mxu0 0
        %1785 = vmatpush1.bf16.msra.mxu0 0
        %1786 = vmatprep.subr.bf16.mxu0 0
        %1787 = vmatpush1.bf16.msra.mxu0 0
        %1788 = vmatprep.subr.bf16.mxu0 0
        %1789 = vmatpush1.bf16.msra.mxu0 0
        %1790 = vmatprep.subr.bf16.mxu0 0
        %1791 = vmatpush1.bf16.msra.mxu0 0
        %1792 = vmatprep.subr.bf16.mxu0 0
        %1793 = vmatpush1.bf16.msra.mxu0 0
        %1794 = vmatprep.subr.bf16.mxu0 0
        %1795 = vmatpush1.bf16.msra.mxu0 0
        %1796 = vmatprep.subr.bf16.mxu0 0
        %1797 = vmatpush1.bf16.msra.mxu0 0
        %1798 = vmatprep.subr.bf16.mxu0 0
        %1799 = vmatpush1.bf16.msra.mxu0 0
        %1800 = vmatprep.mubr.bf16.mxu0 0
        %1801 = vmatmul.mubr.bf16.gmra.mrb[0].mxu0 %v1534
        %v1802 = vpop.f32.mrb[0].mxu0
        %v1803 = vadd.f32 0.0, %v1802
        %v1804 = vpop.f32.mrb[0].mxu0
        %v1805 = vadd.f32 0.0, %v1804
        %v1806 = vpop.f32.mrb[0].mxu0
        %v1807 = vpop.f32.mrb[0].mxu0
        %1808 = vdwg.mxu0
        %v1809 = vadd.f32 %v1529, %v1762
        %v1810 = vadd.f32 %v1530, %v1764
        %v1811 = vadd.f32 %v1531, %v1803
        %v1812 = vadd.f32 %v1532, %v1805
        %v1813 = vld [vmem:[#allocation3] sm:$0xff]
        %v1814 = vmul.f32 %v1809, 0.5
        %v1815 = vtanh.pop %v1814
        %v1816 = vadd.f32 %v1815, 1.0
        %v1817 = vmul.f32 %v1816, 0.5
        %v1818 = vmul.f32 %v1810, 0.5
        %v1819 = vtanh.pop %v1818
        %v1820 = vadd.f32 %v1819, 1.0
        %v1821 = vmul.f32 %v1820, 0.5
        %v1822 = vtanh.pop %v1811
        %v1823 = vmul.f32 %v1812, 0.5
        %v1824 = vtanh.pop %v1823
        %v1825 = vadd.f32 %v1824, 1.0
        %v1826 = vmul.f32 %v1825, 0.5
        %v1827 = vmul.f32 %v1821, %v1813
        %v1828 = vmul.f32 %v1817, %v1822
        %v1829 = vadd.f32 %v1827, %v1828
        %v1830 = vtanh.pop %v1829
        %v1831 = vmul.f32 %v1826, %v1830
        %s1832 = sadd.s32 %s896, 2
        %v1833 = vstv %s1832
        %vm1834 = vcmp.lt.s32.totalorder %v1833, %v897
        %v1835 = vsel %vm1834, 1, 0
        %1836 = vset.pattern.permute.xlu0 0
        %1837 = vperm.xlu0 %1836, %v1835
        %v1838 = vpop.permute.xlu0 %1837
        %vm1839 = vcmp.eq.s32.totalorder %v1838, 1
        %v1840 = vsel %vm1839, %v1831, %v1533
        %v1841 = vsel %vm1839, %v1829, %v1813
        %1842 = vst [vmem:[#allocation2] sm:$0xff] %v1840
        %1843 = vst [vmem:[#allocation3] sm:$0xff] %v1841
        %s1844 = scalar_lea.vmem [#allocation4], 96
        %v1845 = vld [vmem:[%s1844] sm:$0xff]
        %v1846 = vld [vmem:[%s1844 + $0x8] sm:$0xff]
        %v1847 = vld [vmem:[%s1844 + $0x10] sm:$0xff]
        %v1848 = vld [vmem:[%s1844 + $0x18] sm:$0xff]
        %v1849 = vld [vmem:[#allocation2] sm:$0xff]
        %v1850 = vpack.c.bf16 %v1849, %v1849
        %v1851 = vld [vmem:[#allocation10] sm:$0xff]
        %v1852 = vld [vmem:[#allocation10 + $0x8] sm:$0xff]
        %v1853 = vld [vmem:[#allocation10 + $0x10] sm:$0xff]
        %v1854 = vld [vmem:[#allocation10 + $0x18] sm:$0xff]
        %v1855 = vld [vmem:[#allocation10 + $0x20] sm:$0xff]
        %v1856 = vld [vmem:[#allocation10 + $0x28] sm:$0xff]
        %v1857 = vld [vmem:[#allocation10 + $0x30] sm:$0xff]
        %v1858 = vld [vmem:[#allocation10 + $0x38] sm:$0xff]
        %v1859 = vld [vmem:[#allocation10 + $0x40] sm:$0xff]
        %v1860 = vld [vmem:[#allocation10 + $0x48] sm:$0xff]
        %v1861 = vld [vmem:[#allocation10 + $0x50] sm:$0xff]
        %v1862 = vld [vmem:[#allocation10 + $0x58] sm:$0xff]
        %v1863 = vld [vmem:[#allocation10 + $0x60] sm:$0xff]
        %v1864 = vld [vmem:[#allocation10 + $0x68] sm:$0xff]
        %v1865 = vld [vmem:[#allocation10 + $0x70] sm:$0xff]
        %v1866 = vld [vmem:[#allocation10 + $0x78] sm:$0xff]
        %v1867 = vld [vmem:[#allocation10 + $0x80] sm:$0xff]
        %v1868 = vld [vmem:[#allocation10 + $0x88] sm:$0xff]
        %v1869 = vld [vmem:[#allocation10 + $0x90] sm:$0xff]
        %v1870 = vld [vmem:[#allocation10 + $0x98] sm:$0xff]
        %v1871 = vld [vmem:[#allocation10 + $0xa0] sm:$0xff]
        %v1872 = vld [vmem:[#allocation10 + $0xa8] sm:$0xff]
        %v1873 = vld [vmem:[#allocation10 + $0xb0] sm:$0xff]
        %v1874 = vld [vmem:[#allocation10 + $0xb8] sm:$0xff]
        %v1875 = vld [vmem:[#allocation10 + $0xc0] sm:$0xff]
        %v1876 = vld [vmem:[#allocation10 + $0xc8] sm:$0xff]
        %v1877 = vld [vmem:[#allocation10 + $0xd0] sm:$0xff]
        %v1878 = vld [vmem:[#allocation10 + $0xd8] sm:$0xff]
        %v1879 = vld [vmem:[#allocation10 + $0xe0] sm:$0xff]
        %v1880 = vld [vmem:[#allocation10 + $0xe8] sm:$0xff]
        %v1881 = vld [vmem:[#allocation10 + $0xf0] sm:$0xff]
        %v1882 = vld [vmem:[#allocation10 + $0xf8] sm:$0xff]
        %v1915 = vunpack.c.l.b16 %v1851
        %v1916 = vunpack.c.h.b16 %v1851
        %v1917 = vunpack.c.l.b16 %v1852
        %v1918 = vunpack.c.h.b16 %v1852
        %v1919 = vunpack.c.l.b16 %v1853
        %v1920 = vunpack.c.h.b16 %v1853
        %v1921 = vunpack.c.l.b16 %v1854
        %v1922 = vunpack.c.h.b16 %v1854
        %v1923 = vunpack.c.l.b16 %v1855
        %v1924 = vunpack.c.h.b16 %v1855
        %v1925 = vunpack.c.l.b16 %v1856
        %v1926 = vunpack.c.h.b16 %v1856
        %v1927 = vunpack.c.l.b16 %v1857
        %v1928 = vunpack.c.h.b16 %v1857
        %v1929 = vunpack.c.l.b16 %v1858
        %v1930 = vunpack.c.h.b16 %v1858
        %v1931 = vunpack.c.l.b16 %v1859
        %v1932 = vunpack.c.h.b16 %v1859
        %v1933 = vunpack.c.l.b16 %v1860
        %v1934 = vunpack.c.h.b16 %v1860
        %v1935 = vunpack.c.l.b16 %v1861
        %v1936 = vunpack.c.h.b16 %v1861
        %v1937 = vunpack.c.l.b16 %v1862
        %v1938 = vunpack.c.h.b16 %v1862
        %v1939 = vunpack.c.l.b16 %v1863
        %v1940 = vunpack.c.h.b16 %v1863
        %v1941 = vunpack.c.l.b16 %v1864
        %v1942 = vunpack.c.h.b16 %v1864
        %v1943 = vunpack.c.l.b16 %v1865
        %v1944 = vunpack.c.h.b16 %v1865
        %v1945 = vunpack.c.l.b16 %v1866
        %v1946 = vunpack.c.h.b16 %v1866
        %v1947 = vunpack.c.l.b16 %v1867
        %v1948 = vunpack.c.h.b16 %v1867
        %v1949 = vunpack.c.l.b16 %v1868
        %v1950 = vunpack.c.h.b16 %v1868
        %v1951 = vunpack.c.l.b16 %v1869
        %v1952 = vunpack.c.h.b16 %v1869
        %v1953 = vunpack.c.l.b16 %v1870
        %v1954 = vunpack.c.h.b16 %v1870
        %v1955 = vunpack.c.l.b16 %v1871
        %v1956 = vunpack.c.h.b16 %v1871
        %v1957 = vunpack.c.l.b16 %v1872
        %v1958 = vunpack.c.h.b16 %v1872
        %v1959 = vunpack.c.l.b16 %v1873
        %v1960 = vunpack.c.h.b16 %v1873
        %v1961 = vunpack.c.l.b16 %v1874
        %v1962 = vunpack.c.h.b16 %v1874
        %v1963 = vunpack.c.l.b16 %v1875
        %v1964 = vunpack.c.h.b16 %v1875
        %v1965 = vunpack.c.l.b16 %v1876
        %v1966 = vunpack.c.h.b16 %v1876
        %v1967 = vunpack.c.l.b16 %v1877
        %v1968 = vunpack.c.h.b16 %v1877
        %v1969 = vunpack.c.l.b16 %v1878
        %v1970 = vunpack.c.h.b16 %v1878
        %v1971 = vunpack.c.l.b16 %v1879
        %v1972 = vunpack.c.h.b16 %v1879
        %v1973 = vunpack.c.l.b16 %v1880
        %v1974 = vunpack.c.h.b16 %v1880
        %v1975 = vunpack.c.l.b16 %v1881
        %v1976 = vunpack.c.h.b16 %v1881
        %v1977 = vunpack.c.l.b16 %v1882
        %v1978 = vunpack.c.h.b16 %v1882
        %v1979 = vpack.c.b16 %v1919, %v1915
        %v1980 = vpack.c.b16 %v1920, %v1916
        %v1981 = vpack.c.b16 %v1921, %v1917
        %v1982 = vpack.c.b16 %v1922, %v1918
        %v1983 = vpack.c.b16 %v1927, %v1923
        %v1984 = vpack.c.b16 %v1928, %v1924
        %v1985 = vpack.c.b16 %v1929, %v1925
        %v1986 = vpack.c.b16 %v1930, %v1926
        %v1987 = vpack.c.b16 %v1935, %v1931
        %v1988 = vpack.c.b16 %v1936, %v1932
        %v1989 = vpack.c.b16 %v1937, %v1933
        %v1990 = vpack.c.b16 %v1938, %v1934
        %v1991 = vpack.c.b16 %v1943, %v1939
        %v1992 = vpack.c.b16 %v1944, %v1940
        %v1993 = vpack.c.b16 %v1945, %v1941
        %v1994 = vpack.c.b16 %v1946, %v1942
        %v1995 = vpack.c.b16 %v1951, %v1947
        %v1996 = vpack.c.b16 %v1952, %v1948
        %v1997 = vpack.c.b16 %v1953, %v1949
        %v1998 = vpack.c.b16 %v1954, %v1950
        %v1999 = vpack.c.b16 %v1959, %v1955
        %v2000 = vpack.c.b16 %v1960, %v1956
        %v2001 = vpack.c.b16 %v1961, %v1957
        %v2002 = vpack.c.b16 %v1962, %v1958
        %v2003 = vpack.c.b16 %v1967, %v1963
        %v2004 = vpack.c.b16 %v1968, %v1964
        %v2005 = vpack.c.b16 %v1969, %v1965
        %v2006 = vpack.c.b16 %v1970, %v1966
        %v2007 = vpack.c.b16 %v1975, %v1971
        %v2008 = vpack.c.b16 %v1976, %v1972
        %v2009 = vpack.c.b16 %v1977, %v1973
        %v2010 = vpack.c.b16 %v1978, %v1974
        %2043 = vmatprep.subr.bf16.mxu0 %v1980
        %2044 = vmatpush1.bf16.msra.mxu0 %v1979
        %2045 = vmatprep.subr.bf16.mxu0 %v1984
        %2046 = vmatpush1.bf16.msra.mxu0 %v1983
        %2047 = vmatprep.subr.bf16.mxu0 %v1988
        %2048 = vmatpush1.bf16.msra.mxu0 %v1987
        %2049 = vmatprep.subr.bf16.mxu0 %v1992
        %2050 = vmatpush1.bf16.msra.mxu0 %v1991
        %2051 = vmatprep.subr.bf16.mxu0 %v1996
        %2052 = vmatpush1.bf16.msra.mxu0 %v1995
        %2053 = vmatprep.subr.bf16.mxu0 %v2000
        %2054 = vmatpush1.bf16.msra.mxu0 %v1999
        %2055 = vmatprep.subr.bf16.mxu0 %v2004
        %2056 = vmatpush1.bf16.msra.mxu0 %v2003
        %2057 = vmatprep.subr.bf16.mxu0 %v2008
        %2058 = vmatpush1.bf16.msra.mxu0 %v2007
        %2059 = vmatprep.subr.bf16.mxu0 0
        %2060 = vmatpush1.bf16.msra.mxu0 0
        %2061 = vmatprep.subr.bf16.mxu0 0
        %2062 = vmatpush1.bf16.msra.mxu0 0
        %2063 = vmatprep.subr.bf16.mxu0 0
        %2064 = vmatpush1.bf16.msra.mxu0 0
        %2065 = vmatprep.subr.bf16.mxu0 0
        %2066 = vmatpush1.bf16.msra.mxu0 0
        %2067 = vmatprep.subr.bf16.mxu0 0
        %2068 = vmatpush1.bf16.msra.mxu0 0
        %2069 = vmatprep.subr.bf16.mxu0 0
        %2070 = vmatpush1.bf16.msra.mxu0 0
        %2071 = vmatprep.subr.bf16.mxu0 0
        %2072 = vmatpush1.bf16.msra.mxu0 0
        %2073 = vmatprep.subr.bf16.mxu0 0
        %2074 = vmatpush1.bf16.msra.mxu0 0
        %2075 = vmatprep.mubr.bf16.mxu0 0
        %2076 = vmatmul.mubr.bf16.gmra.mrb[0].mxu0 %v1850
        %v2077 = vpop.f32.mrb[0].mxu0
        %v2078 = vadd.f32 0.0, %v2077
        %v2079 = vpop.f32.mrb[0].mxu0
        %v2080 = vadd.f32 0.0, %v2079
        %v2081 = vpop.f32.mrb[0].mxu0
        %v2082 = vpop.f32.mrb[0].mxu0
        %2083 = vdwg.mxu0
        %2084 = vmatprep.subr.bf16.mxu0 %v1982
        %2085 = vmatpush1.bf16.msra.mxu0 %v1981
        %2086 = vmatprep.subr.bf16.mxu0 %v1986
        %2087 = vmatpush1.bf16.msra.mxu0 %v1985
        %2088 = vmatprep.subr.bf16.mxu0 %v1990
        %2089 = vmatpush1.bf16.msra.mxu0 %v1989
        %2090 = vmatprep.subr.bf16.mxu0 %v1994
        %2091 = vmatpush1.bf16.msra.mxu0 %v1993
        %2092 = vmatprep.subr.bf16.mxu0 %v1998
        %2093 = vmatpush1.bf16.msra.mxu0 %v1997
        %2094 = vmatprep.subr.bf16.mxu0 %v2002
        %2095 = vmatpush1.bf16.msra.mxu0 %v2001
        %2096 = vmatprep.subr.bf16.mxu0 %v2006
        %2097 = vmatpush1.bf16.msra.mxu0 %v2005
        %2098 = vmatprep.subr.bf16.mxu0 %v2010
        %2099 = vmatpush1.bf16.msra.mxu0 %v2009
        %2100 = vmatprep.subr.bf16.mxu0 0
        %2101 = vmatpush1.bf16.msra.mxu0 0
        %2102 = vmatprep.subr.bf16.mxu0 0
        %2103 = vmatpush1.bf16.msra.mxu0 0
        %2104 = vmatprep.subr.bf16.mxu0 0
        %2105 = vmatpush1.bf16.msra.mxu0 0
        %2106 = vmatprep.subr.bf16.mxu0 0
        %2107 = vmatpush1.bf16.msra.mxu0 0
        %2108 = vmatprep.subr.bf16.mxu0 0
        %2109 = vmatpush1.bf16.msra.mxu0 0
        %2110 = vmatprep.subr.bf16.mxu0 0
        %2111 = vmatpush1.bf16.msra.mxu0 0
        %2112 = vmatprep.subr.bf16.mxu0 0
        %2113 = vmatpush1.bf16.msra.mxu0 0
        %2114 = vmatprep.subr.bf16.mxu0 0
        %2115 = vmatpush1.bf16.msra.mxu0 0
        %2116 = vmatprep.mubr.bf16.mxu0 0
        %2117 = vmatmul.mubr.bf16.gmra.mrb[0].mxu0 %v1850
        %v2118 = vpop.f32.mrb[0].mxu0
        %v2119 = vadd.f32 0.0, %v2118
        %v2120 = vpop.f32.mrb[0].mxu0
        %v2121 = vadd.f32 0.0, %v2120
        %v2122 = vpop.f32.mrb[0].mxu0
        %v2123 = vpop.f32.mrb[0].mxu0
        %2124 = vdwg.mxu0
        %v2125 = vadd.f32 %v1845, %v2078
        %v2126 = vadd.f32 %v1846, %v2080
        %v2127 = vadd.f32 %v1847, %v2119
        %v2128 = vadd.f32 %v1848, %v2121
        %v2129 = vld [vmem:[#allocation3] sm:$0xff]
        %v2130 = vmul.f32 %v2125, 0.5
        %v2131 = vtanh.pop %v2130
        %v2132 = vadd.f32 %v2131, 1.0
        %v2133 = vmul.f32 %v2132, 0.5
        %v2134 = vmul.f32 %v2126, 0.5
        %v2135 = vtanh.pop %v2134
        %v2136 = vadd.f32 %v2135, 1.0
        %v2137 = vmul.f32 %v2136, 0.5
        %v2138 = vtanh.pop %v2127
        %v2139 = vmul.f32 %v2128, 0.5
        %v2140 = vtanh.pop %v2139
        %v2141 = vadd.f32 %v2140, 1.0
        %v2142 = vmul.f32 %v2141, 0.5
        %v2143 = vmul.f32 %v2137, %v2129
        %v2144 = vmul.f32 %v2133, %v2138
        %v2145 = vadd.f32 %v2143, %v2144
        %v2146 = vtanh.pop %v2145
        %v2147 = vmul.f32 %v2142, %v2146
        %s2148 = sadd.s32 %s896, 3
        %v2149 = vstv %s2148
        %vm2150 = vcmp.lt.s32.totalorder %v2149, %v897
        %v2151 = vsel %vm2150, 1, 0
        %2152 = vset.pattern.permute.xlu0 0
        %2153 = vperm.xlu0 %2152, %v2151
        %v2154 = vpop.permute.xlu0 %2153
        %vm2155 = vcmp.eq.s32.totalorder %v2154, 1
        %v2156 = vsel %vm2155, %v2147, %v1849
        %v2157 = vsel %vm2155, %v2145, %v2129
        %2158 = vst [vmem:[#allocation2] sm:$0xff] %v2156
        %2159 = vst [vmem:[#allocation3] sm:$0xff] %v2157
        %s2160 = scalar_lea.vmem [#allocation4], 128
        %v2161 = vld [vmem:[%s2160] sm:$0xff]
        %v2162 = vld [vmem:[%s2160 + $0x8] sm:$0xff]
        %v2163 = vld [vmem:[%s2160 + $0x10] sm:$0xff]
        %v2164 = vld [vmem:[%s2160 + $0x18] sm:$0xff]
        %v2165 = vld [vmem:[#allocation2] sm:$0xff]
        %v2166 = vpack.c.bf16 %v2165, %v2165
        %v2167 = vld [vmem:[#allocation10] sm:$0xff]
        %v2168 = vld [vmem:[#allocation10 + $0x8] sm:$0xff]
        %v2169 = vld [vmem:[#allocation10 + $0x10] sm:$0xff]
        %v2170 = vld [vmem:[#allocation10 + $0x18] sm:$0xff]
        %v2171 = vld [vmem:[#allocation10 + $0x20] sm:$0xff]
        %v2172 = vld [vmem:[#allocation10 + $0x28] sm:$0xff]
        %v2173 = vld [vmem:[#allocation10 + $0x30] sm:$0xff]
        %v2174 = vld [vmem:[#allocation10 + $0x38] sm:$0xff]
        %v2175 = vld [vmem:[#allocation10 + $0x40] sm:$0xff]
        %v2176 = vld [vmem:[#allocation10 + $0x48] sm:$0xff]
        %v2177 = vld [vmem:[#allocation10 + $0x50] sm:$0xff]
        %v2178 = vld [vmem:[#allocation10 + $0x58] sm:$0xff]
        %v2179 = vld [vmem:[#allocation10 + $0x60] sm:$0xff]
        %v2180 = vld [vmem:[#allocation10 + $0x68] sm:$0xff]
        %v2181 = vld [vmem:[#allocation10 + $0x70] sm:$0xff]
        %v2182 = vld [vmem:[#allocation10 + $0x78] sm:$0xff]
        %v2183 = vld [vmem:[#allocation10 + $0x80] sm:$0xff]
        %v2184 = vld [vmem:[#allocation10 + $0x88] sm:$0xff]
        %v2185 = vld [vmem:[#allocation10 + $0x90] sm:$0xff]
        %v2186 = vld [vmem:[#allocation10 + $0x98] sm:$0xff]
        %v2187 = vld [vmem:[#allocation10 + $0xa0] sm:$0xff]
        %v2188 = vld [vmem:[#allocation10 + $0xa8] sm:$0xff]
        %v2189 = vld [vmem:[#allocation10 + $0xb0] sm:$0xff]
        %v2190 = vld [vmem:[#allocation10 + $0xb8] sm:$0xff]
        %v2191 = vld [vmem:[#allocation10 + $0xc0] sm:$0xff]
        %v2192 = vld [vmem:[#allocation10 + $0xc8] sm:$0xff]
        %v2193 = vld [vmem:[#allocation10 + $0xd0] sm:$0xff]
        %v2194 = vld [vmem:[#allocation10 + $0xd8] sm:$0xff]
        %v2195 = vld [vmem:[#allocation10 + $0xe0] sm:$0xff]
        %v2196 = vld [vmem:[#allocation10 + $0xe8] sm:$0xff]
        %v2197 = vld [vmem:[#allocation10 + $0xf0] sm:$0xff]
        %v2198 = vld [vmem:[#allocation10 + $0xf8] sm:$0xff]
        %v2231 = vunpack.c.l.b16 %v2167
        %v2232 = vunpack.c.h.b16 %v2167
        %v2233 = vunpack.c.l.b16 %v2168
        %v2234 = vunpack.c.h.b16 %v2168
        %v2235 = vunpack.c.l.b16 %v2169
        %v2236 = vunpack.c.h.b16 %v2169
        %v2237 = vunpack.c.l.b16 %v2170
        %v2238 = vunpack.c.h.b16 %v2170
        %v2239 = vunpack.c.l.b16 %v2171
        %v2240 = vunpack.c.h.b16 %v2171
        %v2241 = vunpack.c.l.b16 %v2172
        %v2242 = vunpack.c.h.b16 %v2172
        %v2243 = vunpack.c.l.b16 %v2173
        %v2244 = vunpack.c.h.b16 %v2173
        %v2245 = vunpack.c.l.b16 %v2174
        %v2246 = vunpack.c.h.b16 %v2174
        %v2247 = vunpack.c.l.b16 %v2175
        %v2248 = vunpack.c.h.b16 %v2175
        %v2249 = vunpack.c.l.b16 %v2176
        %v2250 = vunpack.c.h.b16 %v2176
        %v2251 = vunpack.c.l.b16 %v2177
        %v2252 = vunpack.c.h.b16 %v2177
        %v2253 = vunpack.c.l.b16 %v2178
        %v2254 = vunpack.c.h.b16 %v2178
        %v2255 = vunpack.c.l.b16 %v2179
        %v2256 = vunpack.c.h.b16 %v2179
        %v2257 = vunpack.c.l.b16 %v2180
        %v2258 = vunpack.c.h.b16 %v2180
        %v2259 = vunpack.c.l.b16 %v2181
        %v2260 = vunpack.c.h.b16 %v2181
        %v2261 = vunpack.c.l.b16 %v2182
        %v2262 = vunpack.c.h.b16 %v2182
        %v2263 = vunpack.c.l.b16 %v2183
        %v2264 = vunpack.c.h.b16 %v2183
        %v2265 = vunpack.c.l.b16 %v2184
        %v2266 = vunpack.c.h.b16 %v2184
        %v2267 = vunpack.c.l.b16 %v2185
        %v2268 = vunpack.c.h.b16 %v2185
        %v2269 = vunpack.c.l.b16 %v2186
        %v2270 = vunpack.c.h.b16 %v2186
        %v2271 = vunpack.c.l.b16 %v2187
        %v2272 = vunpack.c.h.b16 %v2187
        %v2273 = vunpack.c.l.b16 %v2188
        %v2274 = vunpack.c.h.b16 %v2188
        %v2275 = vunpack.c.l.b16 %v2189
        %v2276 = vunpack.c.h.b16 %v2189
        %v2277 = vunpack.c.l.b16 %v2190
        %v2278 = vunpack.c.h.b16 %v2190
        %v2279 = vunpack.c.l.b16 %v2191
        %v2280 = vunpack.c.h.b16 %v2191
        %v2281 = vunpack.c.l.b16 %v2192
        %v2282 = vunpack.c.h.b16 %v2192
        %v2283 = vunpack.c.l.b16 %v2193
        %v2284 = vunpack.c.h.b16 %v2193
        %v2285 = vunpack.c.l.b16 %v2194
        %v2286 = vunpack.c.h.b16 %v2194
        %v2287 = vunpack.c.l.b16 %v2195
        %v2288 = vunpack.c.h.b16 %v2195
        %v2289 = vunpack.c.l.b16 %v2196
        %v2290 = vunpack.c.h.b16 %v2196
        %v2291 = vunpack.c.l.b16 %v2197
        %v2292 = vunpack.c.h.b16 %v2197
        %v2293 = vunpack.c.l.b16 %v2198
        %v2294 = vunpack.c.h.b16 %v2198
        %v2295 = vpack.c.b16 %v2235, %v2231
        %v2296 = vpack.c.b16 %v2236, %v2232
        %v2297 = vpack.c.b16 %v2237, %v2233
        %v2298 = vpack.c.b16 %v2238, %v2234
        %v2299 = vpack.c.b16 %v2243, %v2239
        %v2300 = vpack.c.b16 %v2244, %v2240
        %v2301 = vpack.c.b16 %v2245, %v2241
        %v2302 = vpack.c.b16 %v2246, %v2242
        %v2303 = vpack.c.b16 %v2251, %v2247
        %v2304 = vpack.c.b16 %v2252, %v2248
        %v2305 = vpack.c.b16 %v2253, %v2249
        %v2306 = vpack.c.b16 %v2254, %v2250
        %v2307 = vpack.c.b16 %v2259, %v2255
        %v2308 = vpack.c.b16 %v2260, %v2256
        %v2309 = vpack.c.b16 %v2261, %v2257
        %v2310 = vpack.c.b16 %v2262, %v2258
        %v2311 = vpack.c.b16 %v2267, %v2263
        %v2312 = vpack.c.b16 %v2268, %v2264
        %v2313 = vpack.c.b16 %v2269, %v2265
        %v2314 = vpack.c.b16 %v2270, %v2266
        %v2315 = vpack.c.b16 %v2275, %v2271
        %v2316 = vpack.c.b16 %v2276, %v2272
        %v2317 = vpack.c.b16 %v2277, %v2273
        %v2318 = vpack.c.b16 %v2278, %v2274
        %v2319 = vpack.c.b16 %v2283, %v2279
        %v2320 = vpack.c.b16 %v2284, %v2280
        %v2321 = vpack.c.b16 %v2285, %v2281
        %v2322 = vpack.c.b16 %v2286, %v2282
        %v2323 = vpack.c.b16 %v2291, %v2287
        %v2324 = vpack.c.b16 %v2292, %v2288
        %v2325 = vpack.c.b16 %v2293, %v2289
        %v2326 = vpack.c.b16 %v2294, %v2290
        %2359 = vmatprep.subr.bf16.mxu0 %v2296
        %2360 = vmatpush1.bf16.msra.mxu0 %v2295
        %2361 = vmatprep.subr.bf16.mxu0 %v2300
        %2362 = vmatpush1.bf16.msra.mxu0 %v2299
        %2363 = vmatprep.subr.bf16.mxu0 %v2304
        %2364 = vmatpush1.bf16.msra.mxu0 %v2303
        %2365 = vmatprep.subr.bf16.mxu0 %v2308
        %2366 = vmatpush1.bf16.msra.mxu0 %v2307
        %2367 = vmatprep.subr.bf16.mxu0 %v2312
        %2368 = vmatpush1.bf16.msra.mxu0 %v2311
        %2369 = vmatprep.subr.bf16.mxu0 %v2316
        %2370 = vmatpush1.bf16.msra.mxu0 %v2315
        %2371 = vmatprep.subr.bf16.mxu0 %v2320
        %2372 = vmatpush1.bf16.msra.mxu0 %v2319
        %2373 = vmatprep.subr.bf16.mxu0 %v2324
        %2374 = vmatpush1.bf16.msra.mxu0 %v2323
        %2375 = vmatprep.subr.bf16.mxu0 0
        %2376 = vmatpush1.bf16.msra.mxu0 0
        %2377 = vmatprep.subr.bf16.mxu0 0
        %2378 = vmatpush1.bf16.msra.mxu0 0
        %2379 = vmatprep.subr.bf16.mxu0 0
        %2380 = vmatpush1.bf16.msra.mxu0 0
        %2381 = vmatprep.subr.bf16.mxu0 0
        %2382 = vmatpush1.bf16.msra.mxu0 0
        %2383 = vmatprep.subr.bf16.mxu0 0
        %2384 = vmatpush1.bf16.msra.mxu0 0
        %2385 = vmatprep.subr.bf16.mxu0 0
        %2386 = vmatpush1.bf16.msra.mxu0 0
        %2387 = vmatprep.subr.bf16.mxu0 0
        %2388 = vmatpush1.bf16.msra.mxu0 0
        %2389 = vmatprep.subr.bf16.mxu0 0
        %2390 = vmatpush1.bf16.msra.mxu0 0
        %2391 = vmatprep.mubr.bf16.mxu0 0
        %2392 = vmatmul.mubr.bf16.gmra.mrb[0].mxu0 %v2166
        %v2393 = vpop.f32.mrb[0].mxu0
        %v2394 = vadd.f32 0.0, %v2393
        %v2395 = vpop.f32.mrb[0].mxu0
        %v2396 = vadd.f32 0.0, %v2395
        %v2397 = vpop.f32.mrb[0].mxu0
        %v2398 = vpop.f32.mrb[0].mxu0
        %2399 = vdwg.mxu0
        %2400 = vmatprep.subr.bf16.mxu0 %v2298
        %2401 = vmatpush1.bf16.msra.mxu0 %v2297
        %2402 = vmatprep.subr.bf16.mxu0 %v2302
        %2403 = vmatpush1.bf16.msra.mxu0 %v2301
        %2404 = vmatprep.subr.bf16.mxu0 %v2306
        %2405 = vmatpush1.bf16.msra.mxu0 %v2305
        %2406 = vmatprep.subr.bf16.mxu0 %v2310
        %2407 = vmatpush1.bf16.msra.mxu0 %v2309
        %2408 = vmatprep.subr.bf16.mxu0 %v2314
        %2409 = vmatpush1.bf16.msra.mxu0 %v2313
        %2410 = vmatprep.subr.bf16.mxu0 %v2318
        %2411 = vmatpush1.bf16.msra.mxu0 %v2317
        %2412 = vmatprep.subr.bf16.mxu0 %v2322
        %2413 = vmatpush1.bf16.msra.mxu0 %v2321
        %2414 = vmatprep.subr.bf16.mxu0 %v2326
        %2415 = vmatpush1.bf16.msra.mxu0 %v2325
        %2416 = vmatprep.subr.bf16.mxu0 0
        %2417 = vmatpush1.bf16.msra.mxu0 0
        %2418 = vmatprep.subr.bf16.mxu0 0
        %2419 = vmatpush1.bf16.msra.mxu0 0
        %2420 = vmatprep.subr.bf16.mxu0 0
        %2421 = vmatpush1.bf16.msra.mxu0 0
        %2422 = vmatprep.subr.bf16.mxu0 0
        %2423 = vmatpush1.bf16.msra.mxu0 0
        %2424 = vmatprep.subr.bf16.mxu0 0
        %2425 = vmatpush1.bf16.msra.mxu0 0
        %2426 = vmatprep.subr.bf16.mxu0 0
        %2427 = vmatpush1.bf16.msra.mxu0 0
        %2428 = vmatprep.subr.bf16.mxu0 0
        %2429 = vmatpush1.bf16.msra.mxu0 0
        %2430 = vmatprep.subr.bf16.mxu0 0
        %2431 = vmatpush1.bf16.msra.mxu0 0
        %2432 = vmatprep.mubr.bf16.mxu0 0
        %2433 = vmatmul.mubr.bf16.gmra.mrb[0].mxu0 %v2166
        %v2434 = vpop.f32.mrb[0].mxu0
        %v2435 = vadd.f32 0.0, %v2434
        %v2436 = vpop.f32.mrb[0].mxu0
        %v2437 = vadd.f32 0.0, %v2436
        %v2438 = vpop.f32.mrb[0].mxu0
        %v2439 = vpop.f32.mrb[0].mxu0
        %2440 = vdwg.mxu0
        %v2441 = vadd.f32 %v2161, %v2394
        %v2442 = vadd.f32 %v2162, %v2396
        %v2443 = vadd.f32 %v2163, %v2435
        %v2444 = vadd.f32 %v2164, %v2437
        %v2445 = vld [vmem:[#allocation3] sm:$0xff]
        %v2446 = vmul.f32 %v2441, 0.5
        %v2447 = vtanh.pop %v2446
        %v2448 = vadd.f32 %v2447, 1.0
        %v2449 = vmul.f32 %v2448, 0.5
        %v2450 = vmul.f32 %v2442, 0.5
        %v2451 = vtanh.pop %v2450
        %v2452 = vadd.f32 %v2451, 1.0
        %v2453 = vmul.f32 %v2452, 0.5
        %v2454 = vtanh.pop %v2443
        %v2455 = vmul.f32 %v2444, 0.5
        %v2456 = vtanh.pop %v2455
        %v2457 = vadd.f32 %v2456, 1.0
        %v2458 = vmul.f32 %v2457, 0.5
        %v2459 = vmul.f32 %v2453, %v2445
        %v2460 = vmul.f32 %v2449, %v2454
        %v2461 = vadd.f32 %v2459, %v2460
        %v2462 = vtanh.pop %v2461
        %v2463 = vmul.f32 %v2458, %v2462
        %s2464 = sadd.s32 %s896, 4
        %v2465 = vstv %s2464
        %vm2466 = vcmp.lt.s32.totalorder %v2465, %v897
        %v2467 = vsel %vm2466, 1, 0
        %2468 = vset.pattern.permute.xlu0 0
        %2469 = vperm.xlu0 %2468, %v2467
        %v2470 = vpop.permute.xlu0 %2469
        %vm2471 = vcmp.eq.s32.totalorder %v2470, 1
        %v2472 = vsel %vm2471, %v2463, %v2165
        %v2473 = vsel %vm2471, %v2461, %v2445
        %2474 = vst [vmem:[#allocation2] sm:$0xff] %v2472
        %2475 = vst [vmem:[#allocation3] sm:$0xff] %v2473
        %s2476 = scalar_lea.vmem [#allocation4], 160
        %v2477 = vld [vmem:[%s2476] sm:$0xff]
        %v2478 = vld [vmem:[%s2476 + $0x8] sm:$0xff]
        %v2479 = vld [vmem:[%s2476 + $0x10] sm:$0xff]
        %v2480 = vld [vmem:[%s2476 + $0x18] sm:$0xff]
        %v2481 = vld [vmem:[#allocation2] sm:$0xff]
        %v2482 = vpack.c.bf16 %v2481, %v2481
        %v2483 = vld [vmem:[#allocation10] sm:$0xff]
        %v2484 = vld [vmem:[#allocation10 + $0x8] sm:$0xff]
        %v2485 = vld [vmem:[#allocation10 + $0x10] sm:$0xff]
        %v2486 = vld [vmem:[#allocation10 + $0x18] sm:$0xff]
        %v2487 = vld [vmem:[#allocation10 + $0x20] sm:$0xff]
        %v2488 = vld [vmem:[#allocation10 + $0x28] sm:$0xff]
        %v2489 = vld [vmem:[#allocation10 + $0x30] sm:$0xff]
        %v2490 = vld [vmem:[#allocation10 + $0x38] sm:$0xff]
        %v2491 = vld [vmem:[#allocation10 + $0x40] sm:$0xff]
        %v2492 = vld [vmem:[#allocation10 + $0x48] sm:$0xff]
        %v2493 = vld [vmem:[#allocation10 + $0x50] sm:$0xff]
        %v2494 = vld [vmem:[#allocation10 + $0x58] sm:$0xff]
        %v2495 = vld [vmem:[#allocation10 + $0x60] sm:$0xff]
        %v2496 = vld [vmem:[#allocation10 + $0x68] sm:$0xff]
        %v2497 = vld [vmem:[#allocation10 + $0x70] sm:$0xff]
        %v2498 = vld [vmem:[#allocation10 + $0x78] sm:$0xff]
        %v2499 = vld [vmem:[#allocation10 + $0x80] sm:$0xff]
        %v2500 = vld [vmem:[#allocation10 + $0x88] sm:$0xff]
        %v2501 = vld [vmem:[#allocation10 + $0x90] sm:$0xff]
        %v2502 = vld [vmem:[#allocation10 + $0x98] sm:$0xff]
        %v2503 = vld [vmem:[#allocation10 + $0xa0] sm:$0xff]
        %v2504 = vld [vmem:[#allocation10 + $0xa8] sm:$0xff]
        %v2505 = vld [vmem:[#allocation10 + $0xb0] sm:$0xff]
        %v2506 = vld [vmem:[#allocation10 + $0xb8] sm:$0xff]
        %v2507 = vld [vmem:[#allocation10 + $0xc0] sm:$0xff]
        %v2508 = vld [vmem:[#allocation10 + $0xc8] sm:$0xff]
        %v2509 = vld [vmem:[#allocation10 + $0xd0] sm:$0xff]
        %v2510 = vld [vmem:[#allocation10 + $0xd8] sm:$0xff]
        %v2511 = vld [vmem:[#allocation10 + $0xe0] sm:$0xff]
        %v2512 = vld [vmem:[#allocation10 + $0xe8] sm:$0xff]
        %v2513 = vld [vmem:[#allocation10 + $0xf0] sm:$0xff]
        %v2514 = vld [vmem:[#allocation10 + $0xf8] sm:$0xff]
        %v2547 = vunpack.c.l.b16 %v2483
        %v2548 = vunpack.c.h.b16 %v2483
        %v2549 = vunpack.c.l.b16 %v2484
        %v2550 = vunpack.c.h.b16 %v2484
        %v2551 = vunpack.c.l.b16 %v2485
        %v2552 = vunpack.c.h.b16 %v2485
        %v2553 = vunpack.c.l.b16 %v2486
        %v2554 = vunpack.c.h.b16 %v2486
        %v2555 = vunpack.c.l.b16 %v2487
        %v2556 = vunpack.c.h.b16 %v2487
        %v2557 = vunpack.c.l.b16 %v2488
        %v2558 = vunpack.c.h.b16 %v2488
        %v2559 = vunpack.c.l.b16 %v2489
        %v2560 = vunpack.c.h.b16 %v2489
        %v2561 = vunpack.c.l.b16 %v2490
        %v2562 = vunpack.c.h.b16 %v2490
        %v2563 = vunpack.c.l.b16 %v2491
        %v2564 = vunpack.c.h.b16 %v2491
        %v2565 = vunpack.c.l.b16 %v2492
        %v2566 = vunpack.c.h.b16 %v2492
        %v2567 = vunpack.c.l.b16 %v2493
        %v2568 = vunpack.c.h.b16 %v2493
        %v2569 = vunpack.c.l.b16 %v2494
        %v2570 = vunpack.c.h.b16 %v2494
        %v2571 = vunpack.c.l.b16 %v2495
        %v2572 = vunpack.c.h.b16 %v2495
        %v2573 = vunpack.c.l.b16 %v2496
        %v2574 = vunpack.c.h.b16 %v2496
        %v2575 = vunpack.c.l.b16 %v2497
        %v2576 = vunpack.c.h.b16 %v2497
        %v2577 = vunpack.c.l.b16 %v2498
        %v2578 = vunpack.c.h.b16 %v2498
        %v2579 = vunpack.c.l.b16 %v2499
        %v2580 = vunpack.c.h.b16 %v2499
        %v2581 = vunpack.c.l.b16 %v2500
        %v2582 = vunpack.c.h.b16 %v2500
        %v2583 = vunpack.c.l.b16 %v2501
        %v2584 = vunpack.c.h.b16 %v2501
        %v2585 = vunpack.c.l.b16 %v2502
        %v2586 = vunpack.c.h.b16 %v2502
        %v2587 = vunpack.c.l.b16 %v2503
        %v2588 = vunpack.c.h.b16 %v2503
        %v2589 = vunpack.c.l.b16 %v2504
        %v2590 = vunpack.c.h.b16 %v2504
        %v2591 = vunpack.c.l.b16 %v2505
        %v2592 = vunpack.c.h.b16 %v2505
        %v2593 = vunpack.c.l.b16 %v2506
        %v2594 = vunpack.c.h.b16 %v2506
        %v2595 = vunpack.c.l.b16 %v2507
        %v2596 = vunpack.c.h.b16 %v2507
        %v2597 = vunpack.c.l.b16 %v2508
        %v2598 = vunpack.c.h.b16 %v2508
        %v2599 = vunpack.c.l.b16 %v2509
        %v2600 = vunpack.c.h.b16 %v2509
        %v2601 = vunpack.c.l.b16 %v2510
        %v2602 = vunpack.c.h.b16 %v2510
        %v2603 = vunpack.c.l.b16 %v2511
        %v2604 = vunpack.c.h.b16 %v2511
        %v2605 = vunpack.c.l.b16 %v2512
        %v2606 = vunpack.c.h.b16 %v2512
        %v2607 = vunpack.c.l.b16 %v2513
        %v2608 = vunpack.c.h.b16 %v2513
        %v2609 = vunpack.c.l.b16 %v2514
        %v2610 = vunpack.c.h.b16 %v2514
        %v2611 = vpack.c.b16 %v2551, %v2547
        %v2612 = vpack.c.b16 %v2552, %v2548
        %v2613 = vpack.c.b16 %v2553, %v2549
        %v2614 = vpack.c.b16 %v2554, %v2550
        %v2615 = vpack.c.b16 %v2559, %v2555
        %v2616 = vpack.c.b16 %v2560, %v2556
        %v2617 = vpack.c.b16 %v2561, %v2557
        %v2618 = vpack.c.b16 %v2562, %v2558
        %v2619 = vpack.c.b16 %v2567, %v2563
        %v2620 = vpack.c.b16 %v2568, %v2564
        %v2621 = vpack.c.b16 %v2569, %v2565
        %v2622 = vpack.c.b16 %v2570, %v2566
        %v2623 = vpack.c.b16 %v2575, %v2571
        %v2624 = vpack.c.b16 %v2576, %v2572
        %v2625 = vpack.c.b16 %v2577, %v2573
        %v2626 = vpack.c.b16 %v2578, %v2574
        %v2627 = vpack.c.b16 %v2583, %v2579
        %v2628 = vpack.c.b16 %v2584, %v2580
        %v2629 = vpack.c.b16 %v2585, %v2581
        %v2630 = vpack.c.b16 %v2586, %v2582
        %v2631 = vpack.c.b16 %v2591, %v2587
        %v2632 = vpack.c.b16 %v2592, %v2588
        %v2633 = vpack.c.b16 %v2593, %v2589
        %v2634 = vpack.c.b16 %v2594, %v2590
        %v2635 = vpack.c.b16 %v2599, %v2595
        %v2636 = vpack.c.b16 %v2600, %v2596
        %v2637 = vpack.c.b16 %v2601, %v2597
        %v2638 = vpack.c.b16 %v2602, %v2598
        %v2639 = vpack.c.b16 %v2607, %v2603
        %v2640 = vpack.c.b16 %v2608, %v2604
        %v2641 = vpack.c.b16 %v2609, %v2605
        %v2642 = vpack.c.b16 %v2610, %v2606
        %2675 = vmatprep.subr.bf16.mxu0 %v2612
        %2676 = vmatpush1.bf16.msra.mxu0 %v2611
        %2677 = vmatprep.subr.bf16.mxu0 %v2616
        %2678 = vmatpush1.bf16.msra.mxu0 %v2615
        %2679 = vmatprep.subr.bf16.mxu0 %v2620
        %2680 = vmatpush1.bf16.msra.mxu0 %v2619
        %2681 = vmatprep.subr.bf16.mxu0 %v2624
        %2682 = vmatpush1.bf16.msra.mxu0 %v2623
        %2683 = vmatprep.subr.bf16.mxu0 %v2628
        %2684 = vmatpush1.bf16.msra.mxu0 %v2627
        %2685 = vmatprep.subr.bf16.mxu0 %v2632
        %2686 = vmatpush1.bf16.msra.mxu0 %v2631
        %2687 = vmatprep.subr.bf16.mxu0 %v2636
        %2688 = vmatpush1.bf16.msra.mxu0 %v2635
        %2689 = vmatprep.subr.bf16.mxu0 %v2640
        %2690 = vmatpush1.bf16.msra.mxu0 %v2639
        %2691 = vmatprep.subr.bf16.mxu0 0
        %2692 = vmatpush1.bf16.msra.mxu0 0
        %2693 = vmatprep.subr.bf16.mxu0 0
        %2694 = vmatpush1.bf16.msra.mxu0 0
        %2695 = vmatprep.subr.bf16.mxu0 0
        %2696 = vmatpush1.bf16.msra.mxu0 0
        %2697 = vmatprep.subr.bf16.mxu0 0
        %2698 = vmatpush1.bf16.msra.mxu0 0
        %2699 = vmatprep.subr.bf16.mxu0 0
        %2700 = vmatpush1.bf16.msra.mxu0 0
        %2701 = vmatprep.subr.bf16.mxu0 0
        %2702 = vmatpush1.bf16.msra.mxu0 0
        %2703 = vmatprep.subr.bf16.mxu0 0
        %2704 = vmatpush1.bf16.msra.mxu0 0
        %2705 = vmatprep.subr.bf16.mxu0 0
        %2706 = vmatpush1.bf16.msra.mxu0 0
        %2707 = vmatprep.mubr.bf16.mxu0 0
        %2708 = vmatmul.mubr.bf16.gmra.mrb[0].mxu0 %v2482
        %v2709 = vpop.f32.mrb[0].mxu0
        %v2710 = vadd.f32 0.0, %v2709
        %v2711 = vpop.f32.mrb[0].mxu0
        %v2712 = vadd.f32 0.0, %v2711
        %v2713 = vpop.f32.mrb[0].mxu0
        %v2714 = vpop.f32.mrb[0].mxu0
        %2715 = vdwg.mxu0
        %2716 = vmatprep.subr.bf16.mxu0 %v2614
        %2717 = vmatpush1.bf16.msra.mxu0 %v2613
        %2718 = vmatprep.subr.bf16.mxu0 %v2618
        %2719 = vmatpush1.bf16.msra.mxu0 %v2617
        %2720 = vmatprep.subr.bf16.mxu0 %v2622
        %2721 = vmatpush1.bf16.msra.mxu0 %v2621
        %2722 = vmatprep.subr.bf16.mxu0 %v2626
        %2723 = vmatpush1.bf16.msra.mxu0 %v2625
        %2724 = vmatprep.subr.bf16.mxu0 %v2630
        %2725 = vmatpush1.bf16.msra.mxu0 %v2629
        %2726 = vmatprep.subr.bf16.mxu0 %v2634
        %2727 = vmatpush1.bf16.msra.mxu0 %v2633
        %2728 = vmatprep.subr.bf16.mxu0 %v2638
        %2729 = vmatpush1.bf16.msra.mxu0 %v2637
        %2730 = vmatprep.subr.bf16.mxu0 %v2642
        %2731 = vmatpush1.bf16.msra.mxu0 %v2641
        %2732 = vmatprep.subr.bf16.mxu0 0
        %2733 = vmatpush1.bf16.msra.mxu0 0
        %2734 = vmatprep.subr.bf16.mxu0 0
        %2735 = vmatpush1.bf16.msra.mxu0 0
        %2736 = vmatprep.subr.bf16.mxu0 0
        %2737 = vmatpush1.bf16.msra.mxu0 0
        %2738 = vmatprep.subr.bf16.mxu0 0
        %2739 = vmatpush1.bf16.msra.mxu0 0
        %2740 = vmatprep.subr.bf16.mxu0 0
        %2741 = vmatpush1.bf16.msra.mxu0 0
        %2742 = vmatprep.subr.bf16.mxu0 0
        %2743 = vmatpush1.bf16.msra.mxu0 0
        %2744 = vmatprep.subr.bf16.mxu0 0
        %2745 = vmatpush1.bf16.msra.mxu0 0
        %2746 = vmatprep.subr.bf16.mxu0 0
        %2747 = vmatpush1.bf16.msra.mxu0 0
        %2748 = vmatprep.mubr.bf16.mxu0 0
        %2749 = vmatmul.mubr.bf16.gmra.mrb[0].mxu0 %v2482
        %v2750 = vpop.f32.mrb[0].mxu0
        %v2751 = vadd.f32 0.0, %v2750
        %v2752 = vpop.f32.mrb[0].mxu0
        %v2753 = vadd.f32 0.0, %v2752
        %v2754 = vpop.f32.mrb[0].mxu0
        %v2755 = vpop.f32.mrb[0].mxu0
        %2756 = vdwg.mxu0
        %v2757 = vadd.f32 %v2477, %v2710
        %v2758 = vadd.f32 %v2478, %v2712
        %v2759 = vadd.f32 %v2479, %v2751
        %v2760 = vadd.f32 %v2480, %v2753
        %v2761 = vld [vmem:[#allocation3] sm:$0xff]
        %v2762 = vmul.f32 %v2757, 0.5
        %v2763 = vtanh.pop %v2762
        %v2764 = vadd.f32 %v2763, 1.0
        %v2765 = vmul.f32 %v2764, 0.5
        %v2766 = vmul.f32 %v2758, 0.5
        %v2767 = vtanh.pop %v2766
        %v2768 = vadd.f32 %v2767, 1.0
        %v2769 = vmul.f32 %v2768, 0.5
        %v2770 = vtanh.pop %v2759
        %v2771 = vmul.f32 %v2760, 0.5
        %v2772 = vtanh.pop %v2771
        %v2773 = vadd.f32 %v2772, 1.0
        %v2774 = vmul.f32 %v2773, 0.5
        %v2775 = vmul.f32 %v2769, %v2761
        %v2776 = vmul.f32 %v2765, %v2770
        %v2777 = vadd.f32 %v2775, %v2776
        %v2778 = vtanh.pop %v2777
        %v2779 = vmul.f32 %v2774, %v2778
        %s2780 = sadd.s32 %s896, 5
        %v2781 = vstv %s2780
        %vm2782 = vcmp.lt.s32.totalorder %v2781, %v897
        %v2783 = vsel %vm2782, 1, 0
        %2784 = vset.pattern.permute.xlu0 0
        %2785 = vperm.xlu0 %2784, %v2783
        %v2786 = vpop.permute.xlu0 %2785
        %vm2787 = vcmp.eq.s32.totalorder %v2786, 1
        %v2788 = vsel %vm2787, %v2779, %v2481
        %v2789 = vsel %vm2787, %v2777, %v2761
        %2790 = vst [vmem:[#allocation2] sm:$0xff] %v2788
        %2791 = vst [vmem:[#allocation3] sm:$0xff] %v2789
        %s2792 = scalar_lea.vmem [#allocation4], 192
        %v2793 = vld [vmem:[%s2792] sm:$0xff]
        %v2794 = vld [vmem:[%s2792 + $0x8] sm:$0xff]
        %v2795 = vld [vmem:[%s2792 + $0x10] sm:$0xff]
        %v2796 = vld [vmem:[%s2792 + $0x18] sm:$0xff]
        %v2797 = vld [vmem:[#allocation2] sm:$0xff]
        %v2798 = vpack.c.bf16 %v2797, %v2797
        %v2799 = vld [vmem:[#allocation10] sm:$0xff]
        %v2800 = vld [vmem:[#allocation10 + $0x8] sm:$0xff]
        %v2801 = vld [vmem:[#allocation10 + $0x10] sm:$0xff]
        %v2802 = vld [vmem:[#allocation10 + $0x18] sm:$0xff]
        %v2803 = vld [vmem:[#allocation10 + $0x20] sm:$0xff]
        %v2804 = vld [vmem:[#allocation10 + $0x28] sm:$0xff]
        %v2805 = vld [vmem:[#allocation10 + $0x30] sm:$0xff]
        %v2806 = vld [vmem:[#allocation10 + $0x38] sm:$0xff]
        %v2807 = vld [vmem:[#allocation10 + $0x40] sm:$0xff]
        %v2808 = vld [vmem:[#allocation10 + $0x48] sm:$0xff]
        %v2809 = vld [vmem:[#allocation10 + $0x50] sm:$0xff]
        %v2810 = vld [vmem:[#allocation10 + $0x58] sm:$0xff]
        %v2811 = vld [vmem:[#allocation10 + $0x60] sm:$0xff]
        %v2812 = vld [vmem:[#allocation10 + $0x68] sm:$0xff]
        %v2813 = vld [vmem:[#allocation10 + $0x70] sm:$0xff]
        %v2814 = vld [vmem:[#allocation10 + $0x78] sm:$0xff]
        %v2815 = vld [vmem:[#allocation10 + $0x80] sm:$0xff]
        %v2816 = vld [vmem:[#allocation10 + $0x88] sm:$0xff]
        %v2817 = vld [vmem:[#allocation10 + $0x90] sm:$0xff]
        %v2818 = vld [vmem:[#allocation10 + $0x98] sm:$0xff]
        %v2819 = vld [vmem:[#allocation10 + $0xa0] sm:$0xff]
        %v2820 = vld [vmem:[#allocation10 + $0xa8] sm:$0xff]
        %v2821 = vld [vmem:[#allocation10 + $0xb0] sm:$0xff]
        %v2822 = vld [vmem:[#allocation10 + $0xb8] sm:$0xff]
        %v2823 = vld [vmem:[#allocation10 + $0xc0] sm:$0xff]
        %v2824 = vld [vmem:[#allocation10 + $0xc8] sm:$0xff]
        %v2825 = vld [vmem:[#allocation10 + $0xd0] sm:$0xff]
        %v2826 = vld [vmem:[#allocation10 + $0xd8] sm:$0xff]
        %v2827 = vld [vmem:[#allocation10 + $0xe0] sm:$0xff]
        %v2828 = vld [vmem:[#allocation10 + $0xe8] sm:$0xff]
        %v2829 = vld [vmem:[#allocation10 + $0xf0] sm:$0xff]
        %v2830 = vld [vmem:[#allocation10 + $0xf8] sm:$0xff]
        %v2863 = vunpack.c.l.b16 %v2799
        %v2864 = vunpack.c.h.b16 %v2799
        %v2865 = vunpack.c.l.b16 %v2800
        %v2866 = vunpack.c.h.b16 %v2800
        %v2867 = vunpack.c.l.b16 %v2801
        %v2868 = vunpack.c.h.b16 %v2801
        %v2869 = vunpack.c.l.b16 %v2802
        %v2870 = vunpack.c.h.b16 %v2802
        %v2871 = vunpack.c.l.b16 %v2803
        %v2872 = vunpack.c.h.b16 %v2803
        %v2873 = vunpack.c.l.b16 %v2804
        %v2874 = vunpack.c.h.b16 %v2804
        %v2875 = vunpack.c.l.b16 %v2805
        %v2876 = vunpack.c.h.b16 %v2805
        %v2877 = vunpack.c.l.b16 %v2806
        %v2878 = vunpack.c.h.b16 %v2806
        %v2879 = vunpack.c.l.b16 %v2807
        %v2880 = vunpack.c.h.b16 %v2807
        %v2881 = vunpack.c.l.b16 %v2808
        %v2882 = vunpack.c.h.b16 %v2808
        %v2883 = vunpack.c.l.b16 %v2809
        %v2884 = vunpack.c.h.b16 %v2809
        %v2885 = vunpack.c.l.b16 %v2810
        %v2886 = vunpack.c.h.b16 %v2810
        %v2887 = vunpack.c.l.b16 %v2811
        %v2888 = vunpack.c.h.b16 %v2811
        %v2889 = vunpack.c.l.b16 %v2812
        %v2890 = vunpack.c.h.b16 %v2812
        %v2891 = vunpack.c.l.b16 %v2813
        %v2892 = vunpack.c.h.b16 %v2813
        %v2893 = vunpack.c.l.b16 %v2814
        %v2894 = vunpack.c.h.b16 %v2814
        %v2895 = vunpack.c.l.b16 %v2815
        %v2896 = vunpack.c.h.b16 %v2815
        %v2897 = vunpack.c.l.b16 %v2816
        %v2898 = vunpack.c.h.b16 %v2816
        %v2899 = vunpack.c.l.b16 %v2817
        %v2900 = vunpack.c.h.b16 %v2817
        %v2901 = vunpack.c.l.b16 %v2818
        %v2902 = vunpack.c.h.b16 %v2818
        %v2903 = vunpack.c.l.b16 %v2819
        %v2904 = vunpack.c.h.b16 %v2819
        %v2905 = vunpack.c.l.b16 %v2820
        %v2906 = vunpack.c.h.b16 %v2820
        %v2907 = vunpack.c.l.b16 %v2821
        %v2908 = vunpack.c.h.b16 %v2821
        %v2909 = vunpack.c.l.b16 %v2822
        %v2910 = vunpack.c.h.b16 %v2822
        %v2911 = vunpack.c.l.b16 %v2823
        %v2912 = vunpack.c.h.b16 %v2823
        %v2913 = vunpack.c.l.b16 %v2824
        %v2914 = vunpack.c.h.b16 %v2824
        %v2915 = vunpack.c.l.b16 %v2825
        %v2916 = vunpack.c.h.b16 %v2825
        %v2917 = vunpack.c.l.b16 %v2826
        %v2918 = vunpack.c.h.b16 %v2826
        %v2919 = vunpack.c.l.b16 %v2827
        %v2920 = vunpack.c.h.b16 %v2827
        %v2921 = vunpack.c.l.b16 %v2828
        %v2922 = vunpack.c.h.b16 %v2828
        %v2923 = vunpack.c.l.b16 %v2829
        %v2924 = vunpack.c.h.b16 %v2829
        %v2925 = vunpack.c.l.b16 %v2830
        %v2926 = vunpack.c.h.b16 %v2830
        %v2927 = vpack.c.b16 %v2867, %v2863
        %v2928 = vpack.c.b16 %v2868, %v2864
        %v2929 = vpack.c.b16 %v2869, %v2865
        %v2930 = vpack.c.b16 %v2870, %v2866
        %v2931 = vpack.c.b16 %v2875, %v2871
        %v2932 = vpack.c.b16 %v2876, %v2872
        %v2933 = vpack.c.b16 %v2877, %v2873
        %v2934 = vpack.c.b16 %v2878, %v2874
        %v2935 = vpack.c.b16 %v2883, %v2879
        %v2936 = vpack.c.b16 %v2884, %v2880
        %v2937 = vpack.c.b16 %v2885, %v2881
        %v2938 = vpack.c.b16 %v2886, %v2882
        %v2939 = vpack.c.b16 %v2891, %v2887
        %v2940 = vpack.c.b16 %v2892, %v2888
        %v2941 = vpack.c.b16 %v2893, %v2889
        %v2942 = vpack.c.b16 %v2894, %v2890
        %v2943 = vpack.c.b16 %v2899, %v2895
        %v2944 = vpack.c.b16 %v2900, %v2896
        %v2945 = vpack.c.b16 %v2901, %v2897
        %v2946 = vpack.c.b16 %v2902, %v2898
        %v2947 = vpack.c.b16 %v2907, %v2903
        %v2948 = vpack.c.b16 %v2908, %v2904
        %v2949 = vpack.c.b16 %v2909, %v2905
        %v2950 = vpack.c.b16 %v2910, %v2906
        %v2951 = vpack.c.b16 %v2915, %v2911
        %v2952 = vpack.c.b16 %v2916, %v2912
        %v2953 = vpack.c.b16 %v2917, %v2913
        %v2954 = vpack.c.b16 %v2918, %v2914
        %v2955 = vpack.c.b16 %v2923, %v2919
        %v2956 = vpack.c.b16 %v2924, %v2920
        %v2957 = vpack.c.b16 %v2925, %v2921
        %v2958 = vpack.c.b16 %v2926, %v2922
        %2991 = vmatprep.subr.bf16.mxu0 %v2928
        %2992 = vmatpush1.bf16.msra.mxu0 %v2927
        %2993 = vmatprep.subr.bf16.mxu0 %v2932
        %2994 = vmatpush1.bf16.msra.mxu0 %v2931
        %2995 = vmatprep.subr.bf16.mxu0 %v2936
        %2996 = vmatpush1.bf16.msra.mxu0 %v2935
        %2997 = vmatprep.subr.bf16.mxu0 %v2940
        %2998 = vmatpush1.bf16.msra.mxu0 %v2939
        %2999 = vmatprep.subr.bf16.mxu0 %v2944
        %3000 = vmatpush1.bf16.msra.mxu0 %v2943
        %3001 = vmatprep.subr.bf16.mxu0 %v2948
        %3002 = vmatpush1.bf16.msra.mxu0 %v2947
        %3003 = vmatprep.subr.bf16.mxu0 %v2952
        %3004 = vmatpush1.bf16.msra.mxu0 %v2951
        %3005 = vmatprep.subr.bf16.mxu0 %v2956
        %3006 = vmatpush1.bf16.msra.mxu0 %v2955
        %3007 = vmatprep.subr.bf16.mxu0 0
        %3008 = vmatpush1.bf16.msra.mxu0 0
        %3009 = vmatprep.subr.bf16.mxu0 0
        %3010 = vmatpush1.bf16.msra.mxu0 0
        %3011 = vmatprep.subr.bf16.mxu0 0
        %3012 = vmatpush1.bf16.msra.mxu0 0
        %3013 = vmatprep.subr.bf16.mxu0 0
        %3014 = vmatpush1.bf16.msra.mxu0 0
        %3015 = vmatprep.subr.bf16.mxu0 0
        %3016 = vmatpush1.bf16.msra.mxu0 0
        %3017 = vmatprep.subr.bf16.mxu0 0
        %3018 = vmatpush1.bf16.msra.mxu0 0
        %3019 = vmatprep.subr.bf16.mxu0 0
        %3020 = vmatpush1.bf16.msra.mxu0 0
        %3021 = vmatprep.subr.bf16.mxu0 0
        %3022 = vmatpush1.bf16.msra.mxu0 0
        %3023 = vmatprep.mubr.bf16.mxu0 0
        %3024 = vmatmul.mubr.bf16.gmra.mrb[0].mxu0 %v2798
        %v3025 = vpop.f32.mrb[0].mxu0
        %v3026 = vadd.f32 0.0, %v3025
        %v3027 = vpop.f32.mrb[0].mxu0
        %v3028 = vadd.f32 0.0, %v3027
        %v3029 = vpop.f32.mrb[0].mxu0
        %v3030 = vpop.f32.mrb[0].mxu0
        %3031 = vdwg.mxu0
        %3032 = vmatprep.subr.bf16.mxu0 %v2930
        %3033 = vmatpush1.bf16.msra.mxu0 %v2929
        %3034 = vmatprep.subr.bf16.mxu0 %v2934
        %3035 = vmatpush1.bf16.msra.mxu0 %v2933
        %3036 = vmatprep.subr.bf16.mxu0 %v2938
        %3037 = vmatpush1.bf16.msra.mxu0 %v2937
        %3038 = vmatprep.subr.bf16.mxu0 %v2942
        %3039 = vmatpush1.bf16.msra.mxu0 %v2941
        %3040 = vmatprep.subr.bf16.mxu0 %v2946
        %3041 = vmatpush1.bf16.msra.mxu0 %v2945
        %3042 = vmatprep.subr.bf16.mxu0 %v2950
        %3043 = vmatpush1.bf16.msra.mxu0 %v2949
        %3044 = vmatprep.subr.bf16.mxu0 %v2954
        %3045 = vmatpush1.bf16.msra.mxu0 %v2953
        %3046 = vmatprep.subr.bf16.mxu0 %v2958
        %3047 = vmatpush1.bf16.msra.mxu0 %v2957
        %3048 = vmatprep.subr.bf16.mxu0 0
        %3049 = vmatpush1.bf16.msra.mxu0 0
        %3050 = vmatprep.subr.bf16.mxu0 0
        %3051 = vmatpush1.bf16.msra.mxu0 0
        %3052 = vmatprep.subr.bf16.mxu0 0
        %3053 = vmatpush1.bf16.msra.mxu0 0
        %3054 = vmatprep.subr.bf16.mxu0 0
        %3055 = vmatpush1.bf16.msra.mxu0 0
        %3056 = vmatprep.subr.bf16.mxu0 0
        %3057 = vmatpush1.bf16.msra.mxu0 0
        %3058 = vmatprep.subr.bf16.mxu0 0
        %3059 = vmatpush1.bf16.msra.mxu0 0
        %3060 = vmatprep.subr.bf16.mxu0 0
        %3061 = vmatpush1.bf16.msra.mxu0 0
        %3062 = vmatprep.subr.bf16.mxu0 0
        %3063 = vmatpush1.bf16.msra.mxu0 0
        %3064 = vmatprep.mubr.bf16.mxu0 0
        %3065 = vmatmul.mubr.bf16.gmra.mrb[0].mxu0 %v2798
        %v3066 = vpop.f32.mrb[0].mxu0
        %v3067 = vadd.f32 0.0, %v3066
        %v3068 = vpop.f32.mrb[0].mxu0
        %v3069 = vadd.f32 0.0, %v3068
        %v3070 = vpop.f32.mrb[0].mxu0
        %v3071 = vpop.f32.mrb[0].mxu0
        %3072 = vdwg.mxu0
        %v3073 = vadd.f32 %v2793, %v3026
        %v3074 = vadd.f32 %v2794, %v3028
        %v3075 = vadd.f32 %v2795, %v3067
        %v3076 = vadd.f32 %v2796, %v3069
        %v3077 = vld [vmem:[#allocation3] sm:$0xff]
        %v3078 = vmul.f32 %v3073, 0.5
        %v3079 = vtanh.pop %v3078
        %v3080 = vadd.f32 %v3079, 1.0
        %v3081 = vmul.f32 %v3080, 0.5
        %v3082 = vmul.f32 %v3074, 0.5
        %v3083 = vtanh.pop %v3082
        %v3084 = vadd.f32 %v3083, 1.0
        %v3085 = vmul.f32 %v3084, 0.5
        %v3086 = vtanh.pop %v3075
        %v3087 = vmul.f32 %v3076, 0.5
        %v3088 = vtanh.pop %v3087
        %v3089 = vadd.f32 %v3088, 1.0
        %v3090 = vmul.f32 %v3089, 0.5
        %v3091 = vmul.f32 %v3085, %v3077
        %v3092 = vmul.f32 %v3081, %v3086
        %v3093 = vadd.f32 %v3091, %v3092
        %v3094 = vtanh.pop %v3093
        %v3095 = vmul.f32 %v3090, %v3094
        %s3096 = sadd.s32 %s896, 6
        %v3097 = vstv %s3096
        %vm3098 = vcmp.lt.s32.totalorder %v3097, %v897
        %v3099 = vsel %vm3098, 1, 0
        %3100 = vset.pattern.permute.xlu0 0
        %3101 = vperm.xlu0 %3100, %v3099
        %v3102 = vpop.permute.xlu0 %3101
        %vm3103 = vcmp.eq.s32.totalorder %v3102, 1
        %v3104 = vsel %vm3103, %v3095, %v2797
        %v3105 = vsel %vm3103, %v3093, %v3077
        %3106 = vst [vmem:[#allocation2] sm:$0xff] %v3104
        %3107 = vst [vmem:[#allocation3] sm:$0xff] %v3105
        %s3108 = scalar_lea.vmem [#allocation4], 224
        %v3109 = vld [vmem:[%s3108] sm:$0xff]
        %v3110 = vld [vmem:[%s3108 + $0x8] sm:$0xff]
        %v3111 = vld [vmem:[%s3108 + $0x10] sm:$0xff]
        %v3112 = vld [vmem:[%s3108 + $0x18] sm:$0xff]
        %v3113 = vld [vmem:[#allocation2] sm:$0xff]
        %v3114 = vpack.c.bf16 %v3113, %v3113
        %v3115 = vld [vmem:[#allocation10] sm:$0xff]
        %v3116 = vld [vmem:[#allocation10 + $0x8] sm:$0xff]
        %v3117 = vld [vmem:[#allocation10 + $0x10] sm:$0xff]
        %v3118 = vld [vmem:[#allocation10 + $0x18] sm:$0xff]
        %v3119 = vld [vmem:[#allocation10 + $0x20] sm:$0xff]
        %v3120 = vld [vmem:[#allocation10 + $0x28] sm:$0xff]
        %v3121 = vld [vmem:[#allocation10 + $0x30] sm:$0xff]
        %v3122 = vld [vmem:[#allocation10 + $0x38] sm:$0xff]
        %v3123 = vld [vmem:[#allocation10 + $0x40] sm:$0xff]
        %v3124 = vld [vmem:[#allocation10 + $0x48] sm:$0xff]
        %v3125 = vld [vmem:[#allocation10 + $0x50] sm:$0xff]
        %v3126 = vld [vmem:[#allocation10 + $0x58] sm:$0xff]
        %v3127 = vld [vmem:[#allocation10 + $0x60] sm:$0xff]
        %v3128 = vld [vmem:[#allocation10 + $0x68] sm:$0xff]
        %v3129 = vld [vmem:[#allocation10 + $0x70] sm:$0xff]
        %v3130 = vld [vmem:[#allocation10 + $0x78] sm:$0xff]
        %v3131 = vld [vmem:[#allocation10 + $0x80] sm:$0xff]
        %v3132 = vld [vmem:[#allocation10 + $0x88] sm:$0xff]
        %v3133 = vld [vmem:[#allocation10 + $0x90] sm:$0xff]
        %v3134 = vld [vmem:[#allocation10 + $0x98] sm:$0xff]
        %v3135 = vld [vmem:[#allocation10 + $0xa0] sm:$0xff]
        %v3136 = vld [vmem:[#allocation10 + $0xa8] sm:$0xff]
        %v3137 = vld [vmem:[#allocation10 + $0xb0] sm:$0xff]
        %v3138 = vld [vmem:[#allocation10 + $0xb8] sm:$0xff]
        %v3139 = vld [vmem:[#allocation10 + $0xc0] sm:$0xff]
        %v3140 = vld [vmem:[#allocation10 + $0xc8] sm:$0xff]
        %v3141 = vld [vmem:[#allocation10 + $0xd0] sm:$0xff]
        %v3142 = vld [vmem:[#allocation10 + $0xd8] sm:$0xff]
        %v3143 = vld [vmem:[#allocation10 + $0xe0] sm:$0xff]
        %v3144 = vld [vmem:[#allocation10 + $0xe8] sm:$0xff]
        %v3145 = vld [vmem:[#allocation10 + $0xf0] sm:$0xff]
        %v3146 = vld [vmem:[#allocation10 + $0xf8] sm:$0xff]
        %v3179 = vunpack.c.l.b16 %v3115
        %v3180 = vunpack.c.h.b16 %v3115
        %v3181 = vunpack.c.l.b16 %v3116
        %v3182 = vunpack.c.h.b16 %v3116
        %v3183 = vunpack.c.l.b16 %v3117
        %v3184 = vunpack.c.h.b16 %v3117
        %v3185 = vunpack.c.l.b16 %v3118
        %v3186 = vunpack.c.h.b16 %v3118
        %v3187 = vunpack.c.l.b16 %v3119
        %v3188 = vunpack.c.h.b16 %v3119
        %v3189 = vunpack.c.l.b16 %v3120
        %v3190 = vunpack.c.h.b16 %v3120
        %v3191 = vunpack.c.l.b16 %v3121
        %v3192 = vunpack.c.h.b16 %v3121
        %v3193 = vunpack.c.l.b16 %v3122
        %v3194 = vunpack.c.h.b16 %v3122
        %v3195 = vunpack.c.l.b16 %v3123
        %v3196 = vunpack.c.h.b16 %v3123
        %v3197 = vunpack.c.l.b16 %v3124
        %v3198 = vunpack.c.h.b16 %v3124
        %v3199 = vunpack.c.l.b16 %v3125
        %v3200 = vunpack.c.h.b16 %v3125
        %v3201 = vunpack.c.l.b16 %v3126
        %v3202 = vunpack.c.h.b16 %v3126
        %v3203 = vunpack.c.l.b16 %v3127
        %v3204 = vunpack.c.h.b16 %v3127
        %v3205 = vunpack.c.l.b16 %v3128
        %v3206 = vunpack.c.h.b16 %v3128
        %v3207 = vunpack.c.l.b16 %v3129
        %v3208 = vunpack.c.h.b16 %v3129
        %v3209 = vunpack.c.l.b16 %v3130
        %v3210 = vunpack.c.h.b16 %v3130
        %v3211 = vunpack.c.l.b16 %v3131
        %v3212 = vunpack.c.h.b16 %v3131
        %v3213 = vunpack.c.l.b16 %v3132
        %v3214 = vunpack.c.h.b16 %v3132
        %v3215 = vunpack.c.l.b16 %v3133
        %v3216 = vunpack.c.h.b16 %v3133
        %v3217 = vunpack.c.l.b16 %v3134
        %v3218 = vunpack.c.h.b16 %v3134
        %v3219 = vunpack.c.l.b16 %v3135
        %v3220 = vunpack.c.h.b16 %v3135
        %v3221 = vunpack.c.l.b16 %v3136
        %v3222 = vunpack.c.h.b16 %v3136
        %v3223 = vunpack.c.l.b16 %v3137
        %v3224 = vunpack.c.h.b16 %v3137
        %v3225 = vunpack.c.l.b16 %v3138
        %v3226 = vunpack.c.h.b16 %v3138
        %v3227 = vunpack.c.l.b16 %v3139
        %v3228 = vunpack.c.h.b16 %v3139
        %v3229 = vunpack.c.l.b16 %v3140
        %v3230 = vunpack.c.h.b16 %v3140
        %v3231 = vunpack.c.l.b16 %v3141
        %v3232 = vunpack.c.h.b16 %v3141
        %v3233 = vunpack.c.l.b16 %v3142
        %v3234 = vunpack.c.h.b16 %v3142
        %v3235 = vunpack.c.l.b16 %v3143
        %v3236 = vunpack.c.h.b16 %v3143
        %v3237 = vunpack.c.l.b16 %v3144
        %v3238 = vunpack.c.h.b16 %v3144
        %v3239 = vunpack.c.l.b16 %v3145
        %v3240 = vunpack.c.h.b16 %v3145
        %v3241 = vunpack.c.l.b16 %v3146
        %v3242 = vunpack.c.h.b16 %v3146
        %v3243 = vpack.c.b16 %v3183, %v3179
        %v3244 = vpack.c.b16 %v3184, %v3180
        %v3245 = vpack.c.b16 %v3185, %v3181
        %v3246 = vpack.c.b16 %v3186, %v3182
        %v3247 = vpack.c.b16 %v3191, %v3187
        %v3248 = vpack.c.b16 %v3192, %v3188
        %v3249 = vpack.c.b16 %v3193, %v3189
        %v3250 = vpack.c.b16 %v3194, %v3190
        %v3251 = vpack.c.b16 %v3199, %v3195
        %v3252 = vpack.c.b16 %v3200, %v3196
        %v3253 = vpack.c.b16 %v3201, %v3197
        %v3254 = vpack.c.b16 %v3202, %v3198
        %v3255 = vpack.c.b16 %v3207, %v3203
        %v3256 = vpack.c.b16 %v3208, %v3204
        %v3257 = vpack.c.b16 %v3209, %v3205
        %v3258 = vpack.c.b16 %v3210, %v3206
        %v3259 = vpack.c.b16 %v3215, %v3211
        %v3260 = vpack.c.b16 %v3216, %v3212
        %v3261 = vpack.c.b16 %v3217, %v3213
        %v3262 = vpack.c.b16 %v3218, %v3214
        %v3263 = vpack.c.b16 %v3223, %v3219
        %v3264 = vpack.c.b16 %v3224, %v3220
        %v3265 = vpack.c.b16 %v3225, %v3221
        %v3266 = vpack.c.b16 %v3226, %v3222
        %v3267 = vpack.c.b16 %v3231, %v3227
        %v3268 = vpack.c.b16 %v3232, %v3228
        %v3269 = vpack.c.b16 %v3233, %v3229
        %v3270 = vpack.c.b16 %v3234, %v3230
        %v3271 = vpack.c.b16 %v3239, %v3235
        %v3272 = vpack.c.b16 %v3240, %v3236
        %v3273 = vpack.c.b16 %v3241, %v3237
        %v3274 = vpack.c.b16 %v3242, %v3238
        %3307 = vmatprep.subr.bf16.mxu0 %v3244
        %3308 = vmatpush1.bf16.msra.mxu0 %v3243
        %3309 = vmatprep.subr.bf16.mxu0 %v3248
        %3310 = vmatpush1.bf16.msra.mxu0 %v3247
        %3311 = vmatprep.subr.bf16.mxu0 %v3252
        %3312 = vmatpush1.bf16.msra.mxu0 %v3251
        %3313 = vmatprep.subr.bf16.mxu0 %v3256
        %3314 = vmatpush1.bf16.msra.mxu0 %v3255
        %3315 = vmatprep.subr.bf16.mxu0 %v3260
        %3316 = vmatpush1.bf16.msra.mxu0 %v3259
        %3317 = vmatprep.subr.bf16.mxu0 %v3264
        %3318 = vmatpush1.bf16.msra.mxu0 %v3263
        %3319 = vmatprep.subr.bf16.mxu0 %v3268
        %3320 = vmatpush1.bf16.msra.mxu0 %v3267
        %3321 = vmatprep.subr.bf16.mxu0 %v3272
        %3322 = vmatpush1.bf16.msra.mxu0 %v3271
        %3323 = vmatprep.subr.bf16.mxu0 0
        %3324 = vmatpush1.bf16.msra.mxu0 0
        %3325 = vmatprep.subr.bf16.mxu0 0
        %3326 = vmatpush1.bf16.msra.mxu0 0
        %3327 = vmatprep.subr.bf16.mxu0 0
        %3328 = vmatpush1.bf16.msra.mxu0 0
        %3329 = vmatprep.subr.bf16.mxu0 0
        %3330 = vmatpush1.bf16.msra.mxu0 0
        %3331 = vmatprep.subr.bf16.mxu0 0
        %3332 = vmatpush1.bf16.msra.mxu0 0
        %3333 = vmatprep.subr.bf16.mxu0 0
        %3334 = vmatpush1.bf16.msra.mxu0 0
        %3335 = vmatprep.subr.bf16.mxu0 0
        %3336 = vmatpush1.bf16.msra.mxu0 0
        %3337 = vmatprep.subr.bf16.mxu0 0
        %3338 = vmatpush1.bf16.msra.mxu0 0
        %3339 = vmatprep.mubr.bf16.mxu0 0
        %3340 = vmatmul.mubr.bf16.gmra.mrb[0].mxu0 %v3114
        %v3341 = vpop.f32.mrb[0].mxu0
        %v3342 = vadd.f32 0.0, %v3341
        %v3343 = vpop.f32.mrb[0].mxu0
        %v3344 = vadd.f32 0.0, %v3343
        %v3345 = vpop.f32.mrb[0].mxu0
        %v3346 = vpop.f32.mrb[0].mxu0
        %3347 = vdwg.mxu0
        %3348 = vmatprep.subr.bf16.mxu0 %v3246
        %3349 = vmatpush1.bf16.msra.mxu0 %v3245
        %3350 = vmatprep.subr.bf16.mxu0 %v3250
        %3351 = vmatpush1.bf16.msra.mxu0 %v3249
        %3352 = vmatprep.subr.bf16.mxu0 %v3254
        %3353 = vmatpush1.bf16.msra.mxu0 %v3253
        %3354 = vmatprep.subr.bf16.mxu0 %v3258
        %3355 = vmatpush1.bf16.msra.mxu0 %v3257
        %3356 = vmatprep.subr.bf16.mxu0 %v3262
        %3357 = vmatpush1.bf16.msra.mxu0 %v3261
        %3358 = vmatprep.subr.bf16.mxu0 %v3266
        %3359 = vmatpush1.bf16.msra.mxu0 %v3265
        %3360 = vmatprep.subr.bf16.mxu0 %v3270
        %3361 = vmatpush1.bf16.msra.mxu0 %v3269
        %3362 = vmatprep.subr.bf16.mxu0 %v3274
        %3363 = vmatpush1.bf16.msra.mxu0 %v3273
        %3364 = vmatprep.subr.bf16.mxu0 0
        %3365 = vmatpush1.bf16.msra.mxu0 0
        %3366 = vmatprep.subr.bf16.mxu0 0
        %3367 = vmatpush1.bf16.msra.mxu0 0
        %3368 = vmatprep.subr.bf16.mxu0 0
        %3369 = vmatpush1.bf16.msra.mxu0 0
        %3370 = vmatprep.subr.bf16.mxu0 0
        %3371 = vmatpush1.bf16.msra.mxu0 0
        %3372 = vmatprep.subr.bf16.mxu0 0
        %3373 = vmatpush1.bf16.msra.mxu0 0
        %3374 = vmatprep.subr.bf16.mxu0 0
        %3375 = vmatpush1.bf16.msra.mxu0 0
        %3376 = vmatprep.subr.bf16.mxu0 0
        %3377 = vmatpush1.bf16.msra.mxu0 0
        %3378 = vmatprep.subr.bf16.mxu0 0
        %3379 = vmatpush1.bf16.msra.mxu0 0
        %3380 = vmatprep.mubr.bf16.mxu0 0
        %3381 = vmatmul.mubr.bf16.gmra.mrb[0].mxu0 %v3114
        %v3382 = vpop.f32.mrb[0].mxu0
        %v3383 = vadd.f32 0.0, %v3382
        %v3384 = vpop.f32.mrb[0].mxu0
        %v3385 = vadd.f32 0.0, %v3384
        %v3386 = vpop.f32.mrb[0].mxu0
        %v3387 = vpop.f32.mrb[0].mxu0
        %3388 = vdwg.mxu0
        %v3389 = vadd.f32 %v3109, %v3342
        %v3390 = vadd.f32 %v3110, %v3344
        %v3391 = vadd.f32 %v3111, %v3383
        %v3392 = vadd.f32 %v3112, %v3385
        %v3393 = vld [vmem:[#allocation3] sm:$0xff]
        %v3394 = vmul.f32 %v3389, 0.5
        %v3395 = vtanh.pop %v3394
        %v3396 = vadd.f32 %v3395, 1.0
        %v3397 = vmul.f32 %v3396, 0.5
        %v3398 = vmul.f32 %v3390, 0.5
        %v3399 = vtanh.pop %v3398
        %v3400 = vadd.f32 %v3399, 1.0
        %v3401 = vmul.f32 %v3400, 0.5
        %v3402 = vtanh.pop %v3391
        %v3403 = vmul.f32 %v3392, 0.5
        %v3404 = vtanh.pop %v3403
        %v3405 = vadd.f32 %v3404, 1.0
        %v3406 = vmul.f32 %v3405, 0.5
        %v3407 = vmul.f32 %v3401, %v3393
        %v3408 = vmul.f32 %v3397, %v3402
        %v3409 = vadd.f32 %v3407, %v3408
        %v3410 = vtanh.pop %v3409
        %v3411 = vmul.f32 %v3406, %v3410
        %s3412 = sadd.s32 %s896, 7
        %v3413 = vstv %s3412
        %vm3414 = vcmp.lt.s32.totalorder %v3413, %v897
        %v3415 = vsel %vm3414, 1, 0
        %3416 = vset.pattern.permute.xlu0 0
        %3417 = vperm.xlu0 %3416, %v3415
        %v3418 = vpop.permute.xlu0 %3417
        %vm3419 = vcmp.eq.s32.totalorder %v3418, 1
        %v3420 = vsel %vm3419, %v3411, %v3113
        %v3421 = vsel %vm3419, %v3409, %v3393
        %3422 = vst [vmem:[#allocation2] sm:$0xff] %v3420
        %3423 = vst [vmem:[#allocation3] sm:$0xff] %v3421
        %s3424 = scalar_lea.vmem [#allocation4], 256
        %v3425 = vld [vmem:[%s3424] sm:$0xff]
        %v3426 = vld [vmem:[%s3424 + $0x8] sm:$0xff]
        %v3427 = vld [vmem:[%s3424 + $0x10] sm:$0xff]
        %v3428 = vld [vmem:[%s3424 + $0x18] sm:$0xff]
        %v3429 = vld [vmem:[#allocation2] sm:$0xff]
        %v3430 = vpack.c.bf16 %v3429, %v3429
        %v3431 = vld [vmem:[#allocation10] sm:$0xff]
        %v3432 = vld [vmem:[#allocation10 + $0x8] sm:$0xff]
        %v3433 = vld [vmem:[#allocation10 + $0x10] sm:$0xff]
        %v3434 = vld [vmem:[#allocation10 + $0x18] sm:$0xff]
        %v3435 = vld [vmem:[#allocation10 + $0x20] sm:$0xff]
        %v3436 = vld [vmem:[#allocation10 + $0x28] sm:$0xff]
        %v3437 = vld [vmem:[#allocation10 + $0x30] sm:$0xff]
        %v3438 = vld [vmem:[#allocation10 + $0x38] sm:$0xff]
        %v3439 = vld [vmem:[#allocation10 + $0x40] sm:$0xff]
        %v3440 = vld [vmem:[#allocation10 + $0x48] sm:$0xff]
        %v3441 = vld [vmem:[#allocation10 + $0x50] sm:$0xff]
        %v3442 = vld [vmem:[#allocation10 + $0x58] sm:$0xff]
        %v3443 = vld [vmem:[#allocation10 + $0x60] sm:$0xff]
        %v3444 = vld [vmem:[#allocation10 + $0x68] sm:$0xff]
        %v3445 = vld [vmem:[#allocation10 + $0x70] sm:$0xff]
        %v3446 = vld [vmem:[#allocation10 + $0x78] sm:$0xff]
        %v3447 = vld [vmem:[#allocation10 + $0x80] sm:$0xff]
        %v3448 = vld [vmem:[#allocation10 + $0x88] sm:$0xff]
        %v3449 = vld [vmem:[#allocation10 + $0x90] sm:$0xff]
        %v3450 = vld [vmem:[#allocation10 + $0x98] sm:$0xff]
        %v3451 = vld [vmem:[#allocation10 + $0xa0] sm:$0xff]
        %v3452 = vld [vmem:[#allocation10 + $0xa8] sm:$0xff]
        %v3453 = vld [vmem:[#allocation10 + $0xb0] sm:$0xff]
        %v3454 = vld [vmem:[#allocation10 + $0xb8] sm:$0xff]
        %v3455 = vld [vmem:[#allocation10 + $0xc0] sm:$0xff]
        %v3456 = vld [vmem:[#allocation10 + $0xc8] sm:$0xff]
        %v3457 = vld [vmem:[#allocation10 + $0xd0] sm:$0xff]
        %v3458 = vld [vmem:[#allocation10 + $0xd8] sm:$0xff]
        %v3459 = vld [vmem:[#allocation10 + $0xe0] sm:$0xff]
        %v3460 = vld [vmem:[#allocation10 + $0xe8] sm:$0xff]
        %v3461 = vld [vmem:[#allocation10 + $0xf0] sm:$0xff]
        %v3462 = vld [vmem:[#allocation10 + $0xf8] sm:$0xff]
        %v3495 = vunpack.c.l.b16 %v3431
        %v3496 = vunpack.c.h.b16 %v3431
        %v3497 = vunpack.c.l.b16 %v3432
        %v3498 = vunpack.c.h.b16 %v3432
        %v3499 = vunpack.c.l.b16 %v3433
        %v3500 = vunpack.c.h.b16 %v3433
        %v3501 = vunpack.c.l.b16 %v3434
        %v3502 = vunpack.c.h.b16 %v3434
        %v3503 = vunpack.c.l.b16 %v3435
        %v3504 = vunpack.c.h.b16 %v3435
        %v3505 = vunpack.c.l.b16 %v3436
        %v3506 = vunpack.c.h.b16 %v3436
        %v3507 = vunpack.c.l.b16 %v3437
        %v3508 = vunpack.c.h.b16 %v3437
        %v3509 = vunpack.c.l.b16 %v3438
        %v3510 = vunpack.c.h.b16 %v3438
        %v3511 = vunpack.c.l.b16 %v3439
        %v3512 = vunpack.c.h.b16 %v3439
        %v3513 = vunpack.c.l.b16 %v3440
        %v3514 = vunpack.c.h.b16 %v3440
        %v3515 = vunpack.c.l.b16 %v3441
        %v3516 = vunpack.c.h.b16 %v3441
        %v3517 = vunpack.c.l.b16 %v3442
        %v3518 = vunpack.c.h.b16 %v3442
        %v3519 = vunpack.c.l.b16 %v3443
        %v3520 = vunpack.c.h.b16 %v3443
        %v3521 = vunpack.c.l.b16 %v3444
        %v3522 = vunpack.c.h.b16 %v3444
        %v3523 = vunpack.c.l.b16 %v3445
        %v3524 = vunpack.c.h.b16 %v3445
        %v3525 = vunpack.c.l.b16 %v3446
        %v3526 = vunpack.c.h.b16 %v3446
        %v3527 = vunpack.c.l.b16 %v3447
        %v3528 = vunpack.c.h.b16 %v3447
        %v3529 = vunpack.c.l.b16 %v3448
        %v3530 = vunpack.c.h.b16 %v3448
        %v3531 = vunpack.c.l.b16 %v3449
        %v3532 = vunpack.c.h.b16 %v3449
        %v3533 = vunpack.c.l.b16 %v3450
        %v3534 = vunpack.c.h.b16 %v3450
        %v3535 = vunpack.c.l.b16 %v3451
        %v3536 = vunpack.c.h.b16 %v3451
        %v3537 = vunpack.c.l.b16 %v3452
        %v3538 = vunpack.c.h.b16 %v3452
        %v3539 = vunpack.c.l.b16 %v3453
        %v3540 = vunpack.c.h.b16 %v3453
        %v3541 = vunpack.c.l.b16 %v3454
        %v3542 = vunpack.c.h.b16 %v3454
        %v3543 = vunpack.c.l.b16 %v3455
        %v3544 = vunpack.c.h.b16 %v3455
        %v3545 = vunpack.c.l.b16 %v3456
        %v3546 = vunpack.c.h.b16 %v3456
        %v3547 = vunpack.c.l.b16 %v3457
        %v3548 = vunpack.c.h.b16 %v3457
        %v3549 = vunpack.c.l.b16 %v3458
        %v3550 = vunpack.c.h.b16 %v3458
        %v3551 = vunpack.c.l.b16 %v3459
        %v3552 = vunpack.c.h.b16 %v3459
        %v3553 = vunpack.c.l.b16 %v3460
        %v3554 = vunpack.c.h.b16 %v3460
        %v3555 = vunpack.c.l.b16 %v3461
        %v3556 = vunpack.c.h.b16 %v3461
        %v3557 = vunpack.c.l.b16 %v3462
        %v3558 = vunpack.c.h.b16 %v3462
        %v3559 = vpack.c.b16 %v3499, %v3495
        %v3560 = vpack.c.b16 %v3500, %v3496
        %v3561 = vpack.c.b16 %v3501, %v3497
        %v3562 = vpack.c.b16 %v3502, %v3498
        %v3563 = vpack.c.b16 %v3507, %v3503
        %v3564 = vpack.c.b16 %v3508, %v3504
        %v3565 = vpack.c.b16 %v3509, %v3505
        %v3566 = vpack.c.b16 %v3510, %v3506
        %v3567 = vpack.c.b16 %v3515, %v3511
        %v3568 = vpack.c.b16 %v3516, %v3512
        %v3569 = vpack.c.b16 %v3517, %v3513
        %v3570 = vpack.c.b16 %v3518, %v3514
        %v3571 = vpack.c.b16 %v3523, %v3519
        %v3572 = vpack.c.b16 %v3524, %v3520
        %v3573 = vpack.c.b16 %v3525, %v3521
        %v3574 = vpack.c.b16 %v3526, %v3522
        %v3575 = vpack.c.b16 %v3531, %v3527
        %v3576 = vpack.c.b16 %v3532, %v3528
        %v3577 = vpack.c.b16 %v3533, %v3529
        %v3578 = vpack.c.b16 %v3534, %v3530
        %v3579 = vpack.c.b16 %v3539, %v3535
        %v3580 = vpack.c.b16 %v3540, %v3536
        %v3581 = vpack.c.b16 %v3541, %v3537
        %v3582 = vpack.c.b16 %v3542, %v3538
        %v3583 = vpack.c.b16 %v3547, %v3543
        %v3584 = vpack.c.b16 %v3548, %v3544
        %v3585 = vpack.c.b16 %v3549, %v3545
        %v3586 = vpack.c.b16 %v3550, %v3546
        %v3587 = vpack.c.b16 %v3555, %v3551
        %v3588 = vpack.c.b16 %v3556, %v3552
        %v3589 = vpack.c.b16 %v3557, %v3553
        %v3590 = vpack.c.b16 %v3558, %v3554
        %3623 = vmatprep.subr.bf16.mxu0 %v3560
        %3624 = vmatpush1.bf16.msra.mxu0 %v3559
        %3625 = vmatprep.subr.bf16.mxu0 %v3564
        %3626 = vmatpush1.bf16.msra.mxu0 %v3563
        %3627 = vmatprep.subr.bf16.mxu0 %v3568
        %3628 = vmatpush1.bf16.msra.mxu0 %v3567
        %3629 = vmatprep.subr.bf16.mxu0 %v3572
        %3630 = vmatpush1.bf16.msra.mxu0 %v3571
        %3631 = vmatprep.subr.bf16.mxu0 %v3576
        %3632 = vmatpush1.bf16.msra.mxu0 %v3575
        %3633 = vmatprep.subr.bf16.mxu0 %v3580
        %3634 = vmatpush1.bf16.msra.mxu0 %v3579
        %3635 = vmatprep.subr.bf16.mxu0 %v3584
        %3636 = vmatpush1.bf16.msra.mxu0 %v3583
        %3637 = vmatprep.subr.bf16.mxu0 %v3588
        %3638 = vmatpush1.bf16.msra.mxu0 %v3587
        %3639 = vmatprep.subr.bf16.mxu0 0
        %3640 = vmatpush1.bf16.msra.mxu0 0
        %3641 = vmatprep.subr.bf16.mxu0 0
        %3642 = vmatpush1.bf16.msra.mxu0 0
        %3643 = vmatprep.subr.bf16.mxu0 0
        %3644 = vmatpush1.bf16.msra.mxu0 0
        %3645 = vmatprep.subr.bf16.mxu0 0
        %3646 = vmatpush1.bf16.msra.mxu0 0
        %3647 = vmatprep.subr.bf16.mxu0 0
        %3648 = vmatpush1.bf16.msra.mxu0 0
        %3649 = vmatprep.subr.bf16.mxu0 0
        %3650 = vmatpush1.bf16.msra.mxu0 0
        %3651 = vmatprep.subr.bf16.mxu0 0
        %3652 = vmatpush1.bf16.msra.mxu0 0
        %3653 = vmatprep.subr.bf16.mxu0 0
        %3654 = vmatpush1.bf16.msra.mxu0 0
        %3655 = vmatprep.mubr.bf16.mxu0 0
        %3656 = vmatmul.mubr.bf16.gmra.mrb[0].mxu0 %v3430
        %v3657 = vpop.f32.mrb[0].mxu0
        %v3658 = vadd.f32 0.0, %v3657
        %v3659 = vpop.f32.mrb[0].mxu0
        %v3660 = vadd.f32 0.0, %v3659
        %v3661 = vpop.f32.mrb[0].mxu0
        %v3662 = vpop.f32.mrb[0].mxu0
        %3663 = vdwg.mxu0
        %3664 = vmatprep.subr.bf16.mxu0 %v3562
        %3665 = vmatpush1.bf16.msra.mxu0 %v3561
        %3666 = vmatprep.subr.bf16.mxu0 %v3566
        %3667 = vmatpush1.bf16.msra.mxu0 %v3565
        %3668 = vmatprep.subr.bf16.mxu0 %v3570
        %3669 = vmatpush1.bf16.msra.mxu0 %v3569
        %3670 = vmatprep.subr.bf16.mxu0 %v3574
        %3671 = vmatpush1.bf16.msra.mxu0 %v3573
        %3672 = vmatprep.subr.bf16.mxu0 %v3578
        %3673 = vmatpush1.bf16.msra.mxu0 %v3577
        %3674 = vmatprep.subr.bf16.mxu0 %v3582
        %3675 = vmatpush1.bf16.msra.mxu0 %v3581
        %3676 = vmatprep.subr.bf16.mxu0 %v3586
        %3677 = vmatpush1.bf16.msra.mxu0 %v3585
        %3678 = vmatprep.subr.bf16.mxu0 %v3590
        %3679 = vmatpush1.bf16.msra.mxu0 %v3589
        %3680 = vmatprep.subr.bf16.mxu0 0
        %3681 = vmatpush1.bf16.msra.mxu0 0
        %3682 = vmatprep.subr.bf16.mxu0 0
        %3683 = vmatpush1.bf16.msra.mxu0 0
        %3684 = vmatprep.subr.bf16.mxu0 0
        %3685 = vmatpush1.bf16.msra.mxu0 0
        %3686 = vmatprep.subr.bf16.mxu0 0
        %3687 = vmatpush1.bf16.msra.mxu0 0
        %3688 = vmatprep.subr.bf16.mxu0 0
        %3689 = vmatpush1.bf16.msra.mxu0 0
        %3690 = vmatprep.subr.bf16.mxu0 0
        %3691 = vmatpush1.bf16.msra.mxu0 0
        %3692 = vmatprep.subr.bf16.mxu0 0
        %3693 = vmatpush1.bf16.msra.mxu0 0
        %3694 = vmatprep.subr.bf16.mxu0 0
        %3695 = vmatpush1.bf16.msra.mxu0 0
        %3696 = vmatprep.mubr.bf16.mxu0 0
        %3697 = vmatmul.mubr.bf16.gmra.mrb[0].mxu0 %v3430
        %v3698 = vpop.f32.mrb[0].mxu0
        %v3699 = vadd.f32 0.0, %v3698
        %v3700 = vpop.f32.mrb[0].mxu0
        %v3701 = vadd.f32 0.0, %v3700
        %v3702 = vpop.f32.mrb[0].mxu0
        %v3703 = vpop.f32.mrb[0].mxu0
        %3704 = vdwg.mxu0
        %v3705 = vadd.f32 %v3425, %v3658
        %v3706 = vadd.f32 %v3426, %v3660
        %v3707 = vadd.f32 %v3427, %v3699
        %v3708 = vadd.f32 %v3428, %v3701
        %v3709 = vld [vmem:[#allocation3] sm:$0xff]
        %v3710 = vmul.f32 %v3705, 0.5
        %v3711 = vtanh.pop %v3710
        %v3712 = vadd.f32 %v3711, 1.0
        %v3713 = vmul.f32 %v3712, 0.5
        %v3714 = vmul.f32 %v3706, 0.5
        %v3715 = vtanh.pop %v3714
        %v3716 = vadd.f32 %v3715, 1.0
        %v3717 = vmul.f32 %v3716, 0.5
        %v3718 = vtanh.pop %v3707
        %v3719 = vmul.f32 %v3708, 0.5
        %v3720 = vtanh.pop %v3719
        %v3721 = vadd.f32 %v3720, 1.0
        %v3722 = vmul.f32 %v3721, 0.5
        %v3723 = vmul.f32 %v3717, %v3709
        %v3724 = vmul.f32 %v3713, %v3718
        %v3725 = vadd.f32 %v3723, %v3724
        %v3726 = vtanh.pop %v3725
        %v3727 = vmul.f32 %v3722, %v3726
        %s3728 = sadd.s32 %s896, 8
        %v3729 = vstv %s3728
        %vm3730 = vcmp.lt.s32.totalorder %v3729, %v897
        %v3731 = vsel %vm3730, 1, 0
        %3732 = vset.pattern.permute.xlu0 0
        %3733 = vperm.xlu0 %3732, %v3731
        %v3734 = vpop.permute.xlu0 %3733
        %vm3735 = vcmp.eq.s32.totalorder %v3734, 1
        %v3736 = vsel %vm3735, %v3727, %v3429
        %v3737 = vsel %vm3735, %v3725, %v3709
        %3738 = vst [vmem:[#allocation2] sm:$0xff] %v3736
        %3739 = vst [vmem:[#allocation3] sm:$0xff] %v3737
        // Predicated region
        $region69: #{tpu_custom_call.1} parent=47 // pred_check
          %p3740 = pneg %p453
        $region70: #{tpu_custom_call.1} parent=47 // pred_check_branch
          %3742 = sbr.rel (%p3740) target = $region72
        $region71: #{tpu_custom_call.1} parent=47 // pred_region
          %v3743 = vld [vmem:[#allocation2] sm:$0xff]
          %3744 = vst [vmem:[%s435] sm:$0xff] %v3743
          %v3745 = vld [vmem:[#allocation3] sm:$0xff]
          %3746 = vst [vmem:[%s442] sm:$0xff] %v3745
        $region72: #{tpu_custom_call.1} parent=47 // pred_fallthru
          _
        %s3747 = sand.u32 %s222, 1
        %s3748 = scalar_lea.sflag [#allocation7], %s3747
        %s3749 = sand.u32 %s222, 1
        %s3750 = smul.addr %s3749, 8
        %s3751 = scalar_lea.vmem [#allocation13], %s3750
        %s3752 = sand.u32 %s248, 1
        %s3753 = scalar_lea.sflag [#allocation15], %s3752
        %s3754 = sand.u32 %s248, 1
        %s3755 = smul.addr %s3754, 8
        %s3756 = scalar_lea.vmem [#allocation14], %s3755
        // Predicated region
        $region73: #{tpu_custom_call.1} parent=47 // pred_check
          %p3757 = pneg %p232
        $region74: #{tpu_custom_call.1} parent=47 // pred_check_branch
          %3759 = sbr.rel (%p3757) target = $region76
        $region75: #{tpu_custom_call.1} parent=47 // pred_region
          %s3761 = ssub.s32 128, 128
          %3762 = vsyncadd %s3748, %s3761
          %s3763 = smul.addr %s37, 128
          %s3764 = scalar_lea.hbm %s7, %s3763
          %s3766 = sshll.u32 %s3751, 4
          %s3767 = int_to_ptr.vmem [resolvable:$true] %s3766
          %3769 = dma.vmem_to_hbm [thread:$0]  %s3767, 128, %s3764, %s3748
        $region76: #{tpu_custom_call.1} parent=47 // pred_fallthru
          _
        // Predicated region
        $region77: #{tpu_custom_call.1} parent=47 // pred_check
          %p3770 = pneg %p258
        $region78: #{tpu_custom_call.1} parent=47 // pred_check_branch
          %3772 = sbr.rel (%p3770) target = $region80
        $region79: #{tpu_custom_call.1} parent=47 // pred_region
          %s3774 = ssub.s32 128, 128
          %3775 = vsyncadd %s3753, %s3774
          %s3776 = smul.addr %s37, 128
          %s3777 = scalar_lea.hbm %s8, %s3776
          %s3779 = sshll.u32 %s3756, 4
          %s3780 = int_to_ptr.vmem [resolvable:$true] %s3779
          %3782 = dma.vmem_to_hbm [thread:$0]  %s3780, 128, %s3777, %s3753
        $region80: #{tpu_custom_call.1} parent=47 // pred_fallthru
          _
      $region48: #{tpu_custom_call.1} parent=5 // pred_fallthru
        _
      %p3783 = scmp.le.s32.totalorder 2, %s28
      // Predicated region
      $region81: #{tpu_custom_call.1} parent=5 // pred_check
        %p3784 = pneg %p3783
      $region82: #{tpu_custom_call.1} parent=5 // pred_check_branch
        %3786 = sbr.rel (%p3784) target = $region84
      $region83: #{tpu_custom_call.1} parent=5 // pred_region
        %s3787 = ssub.s32 %s28, 2
        // Predicated region
        $region85: #{tpu_custom_call.1} parent=83 // pred_check
          %p3788 = pneg %p238
        $region86: #{tpu_custom_call.1} parent=83 // pred_check_branch
          %3790 = sbr.rel (%p3788) target = $region88
        $region87: #{tpu_custom_call.1} parent=83 // pred_region
          %s3791 = sand.u32 %s223, 1
          %s3792 = scalar_lea.sflag [#allocation7], %s3791
          %s3793 = sand.u32 %s223, 1
          %s3794 = smul.addr %s3793, 8
          %s3795 = scalar_lea.vmem [#allocation13], %s3794
          %3796 = dma.done %s3792, 128
        $region88: #{tpu_custom_call.1} parent=83 // pred_fallthru
          _
        // Predicated region
        $region89: #{tpu_custom_call.1} parent=83 // pred_check
          %p3797 = pneg %p264
        $region90: #{tpu_custom_call.1} parent=83 // pred_check_branch
          %3799 = sbr.rel (%p3797) target = $region92
        $region91: #{tpu_custom_call.1} parent=83 // pred_region
          %s3800 = sand.u32 %s249, 1
          %s3801 = scalar_lea.sflag [#allocation15], %s3800
          %s3802 = sand.u32 %s249, 1
          %s3803 = smul.addr %s3802, 8
          %s3804 = scalar_lea.vmem [#allocation14], %s3803
          %3805 = dma.done %s3801, 128
        $region92: #{tpu_custom_call.1} parent=83 // pred_fallthru
          _
      $region84: #{tpu_custom_call.1} parent=5 // pred_fallthru
        _
    $region6: #{tpu_custom_call.1} parent=1 // loop_footer
      %s32 = sadd.s32 1, %s28
    $region7: #{tpu_custom_call.1} parent=1 // loop_footer_branch
      %27 = sbr.rel target = $region3
    $region8: #{tpu_custom_call.1} parent=1 // loop_exit
      _
    %3806 = vsyncpa [#allocation6], 1
    %s3807 = scalar_lea.sflag [#allocation6], 1
    %3808 = vsyncpa %s3807, 1
    %3809 = vsyncpa [#allocation9], 1
    %3810 = vsyncpa [#allocation12], 1
    %s3811 = scalar_lea.sflag [#allocation12], 1
    %3812 = vsyncpa %s3811, 1
    %3813 = vsyncpa [#allocation7], 1
    %s3814 = scalar_lea.sflag [#allocation7], 1
    %3815 = vsyncpa %s3814, 1
    %3816 = vsyncpa [#allocation15], 1
    %s3817 = scalar_lea.sflag [#allocation15], 1
    %3818 = vsyncpa %s3817, 1

</llo_original>
